<compile_context>
chip_gen: v7x
topology: tpu7x:2x2x1
jax: 0.10.0
libtpu: 0.0.40
codegen_flags: <defaults>
</compile_context>

<pallas_src>
import math

import jax
import jax.numpy as jnp
from jax.experimental import pallas as pl
from jax.experimental.pallas import tpu as pltpu


def _cross_attn_cos_kernel(emb_a_ref, emb_b_ref,
                           bias_a_ref, bias_b_ref,
                           poolw_a_ref, poolw_b_ref,
                           invlen_a_ref, invlen_b_ref,
                           wqkv_ref, wo_ref,
                           cos_ref):
    Bb, S, H = emb_a_ref.shape
    scale = 1.0 / math.sqrt(H)

    wqkv = wqkv_ref[...]            # (H, 3H) fused [Wq | Wk | Wv]
    wo = wo_ref[...]                # (H, H)

    def project(emb_ref):
        # One fused QKV projection per sentence (single MXU push/drain,
        # N = 3H lanes); no in-kernel concatenation of the embedding blocks.
        x = emb_ref[...].reshape(Bb * S, H)
        qkv = jnp.dot(x, wqkv, preferred_element_type=jnp.float32)
        qkv = qkv.reshape(Bb, S, 3 * H)
        return qkv[..., :H], qkv[..., H:2 * H], qkv[..., 2 * H:]

    qa, ka, va = project(emb_a_ref)
    qb, kb, vb = project(emb_b_ref)

    def attend_pool(q, k, v, bias_kv, pool_col, inv_len):
        # q attends over the partner sentence's tokens (cross attention).
        s = jnp.einsum('bqh,bkh->bqk', q, k,
                       preferred_element_type=jnp.float32)       # (Bb, S, S)
        s = s * scale + bias_kv                                   # precomputed bias
        m = jnp.max(s, axis=-1, keepdims=True)
        e = jnp.exp(s - m)
        rowsum = jnp.sum(e, axis=-1, keepdims=True)               # (Bb, S, 1)
        ctx = jnp.einsum('bqk,bkh->bqh', e, v,
                         preferred_element_type=jnp.float32)      # unnormalized
        # Deferred softmax normalization folded into the (masked) pooling
        # weights; pooling is linear, so Wo is applied after pooling.
        # approx=True would move the divide to the idle EUP slot, but needs a
        # looser numerical tolerance — kept exact here.
        w = pool_col * pl.reciprocal(rowsum, approx=False)        # (Bb, S, 1)
        return jnp.sum(ctx * w, axis=1) * inv_len                 # (Bb, H)

    pa_sum = attend_pool(qa, kb, vb, bias_b_ref[...], poolw_a_ref[...],
                         invlen_a_ref[...].reshape(Bb, 1))
    pb_sum = attend_pool(qb, ka, va, bias_a_ref[...], poolw_b_ref[...],
                         invlen_b_ref[...].reshape(Bb, 1))

    # Tiny (2Bb, H) stack so Wo is a single matmul; the large (2Bb, S, H)
    # concatenations of the previous version are gone.
    pooled = jnp.dot(jnp.concatenate([pa_sum, pb_sum], axis=0), wo,
                     preferred_element_type=jnp.float32)          # (2Bb, H)
    pa = pooled[:Bb, :]
    pb = pooled[Bb:, :]

    # Cosine similarity: VPU multiplies + lane reductions.  Norms clamped
    # separately, matching torch.nn.functional.cosine_similarity.
    num = jnp.sum(pa * pb, axis=-1, keepdims=True)                # (Bb, 1)
    na = jnp.sqrt(jnp.sum(pa * pa, axis=-1, keepdims=True))
    nb = jnp.sqrt(jnp.sum(pb * pb, axis=-1, keepdims=True))
    cos = num / (jnp.maximum(na, 1e-8) * jnp.maximum(nb, 1e-8))   # (Bb, 1)

    cos_ref[...] = cos.reshape(1, 1, Bb)                          # lane-dense


def _vmem_limit_bytes(Bb, S, H, emb_bytes):
    """Explicit scoped-VMEM budget for the chosen tile sizes."""
    dbuf = 2                                                   # pipeline depth
    emb_blocks = dbuf * 2 * Bb * S * H * emb_bytes             # emb_a + emb_b
    small_blocks = dbuf * 2 * (2 * Bb * S * 4 + Bb * 4)        # biases/masks/lens
    weights = 3 * H * H * emb_bytes + H * H * 4                # single-buffered
    inter = (2 * Bb * S * 3 * H + 2 * Bb * S * S               # qkv + scores
             + 2 * Bb * S * H + 4 * Bb * H) * 4                # ctx + pooled (f32)
    est = int(2.0 * (emb_blocks + small_blocks + weights + inter)) + (4 << 20)
    # Floor at the v6e/v7x scoped default; cap so it always fits v7x's 64 MiB
    # physical VMEM (re-derive Bb if the estimate gets clipped at large S/H).
    return max(32 << 20, min(est, 48 << 20))


def cosine_similarity_cross_attention_loss(emb_a, emb_b, mask_a, mask_b, labels,
                                           wq, wk, wv, wo, *,
                                           block_b=32, use_bf16_matmul=False):
    B, S, H = emb_a.shape

    # Batch block: big enough to amortize the ~0.35us per-step overhead and
    # fill the MXU (projection M = Bb*S per sentence), while keeping >= 2 grid
    # steps when B > 1 so the "parallel" axis shards across v7x's two TCs.
    Bb = max(1, min(block_b, B))
    if B > 1 and -(-B // Bb) < 2:
        Bb = -(-B // 2)
    n_blocks = -(-B // Bb)

    mm_dtype = jnp.bfloat16 if use_bf16_matmul else jnp.float32
    emb_a = emb_a.astype(mm_dtype)
    emb_b = emb_b.astype(mm_dtype)
    w_qkv = jnp.concatenate([wq, wk, wv], axis=1).astype(mm_dtype)   # (H, 3H)
    wo = wo.astype(jnp.float32)

    mask_a = mask_a.astype(jnp.float32).reshape(B, S)
    mask_b = mask_b.astype(jnp.float32).reshape(B, S)

    # Tiny per-example tensors precomputed once (no per-step re-derivation,
    # and each is passed in the layout it is consumed in).
    bias_a = ((1.0 - mask_a) * -10000.0).reshape(B, 1, S)   # A tokens as keys
    bias_b = ((1.0 - mask_b) * -10000.0).reshape(B, 1, S)   # B tokens as keys
    poolw_a = mask_a.reshape(B, S, 1)                       # A pooling weights
    poolw_b = mask_b.reshape(B, S, 1)
    invlen_a = (1.0 / jnp.maximum(mask_a.sum(-1), 1e-9)).reshape(B, 1, 1)
    invlen_b = (1.0 / jnp.maximum(mask_b.sum(-1), 1e-9)).reshape(B, 1, 1)

    vmem_limit = _vmem_limit_bytes(Bb, S, H, jnp.dtype(mm_dtype).itemsize)

    def _const_spec(shape, single_buffer):
        index_map = lambda g: tuple(0 for _ in shape)
        if single_buffer:
            try:
                # Constant index_map: double-buffering only wastes VMEM.
                return pl.BlockSpec(shape, index_map,
                                    pipeline_mode=pl.Buffered(1))
            except TypeError:
                pass
        return pl.BlockSpec(shape, index_map)

    def _call(single_buffer_weights):
        grid_spec = pltpu.PrefetchScalarGridSpec(
            num_scalar_prefetch=0,
            grid=(n_blocks,),
            in_specs=[
                pl.BlockSpec((Bb, S, H), lambda g: (g, 0, 0)),   # emb_a
                pl.BlockSpec((Bb, S, H), lambda g: (g, 0, 0)),   # emb_b
                pl.BlockSpec((Bb, 1, S), lambda g: (g, 0, 0)),   # bias_a (keys)
                pl.BlockSpec((Bb, 1, S), lambda g: (g, 0, 0)),   # bias_b (keys)
                pl.BlockSpec((Bb, S, 1), lambda g: (g, 0, 0)),   # poolw_a
                pl.BlockSpec((Bb, S, 1), lambda g: (g, 0, 0)),   # poolw_b
                pl.BlockSpec((Bb, 1, 1), lambda g: (g, 0, 0)),   # invlen_a
                pl.BlockSpec((Bb, 1, 1), lambda g: (g, 0, 0)),   # invlen_b
                _const_spec((H, 3 * H), single_buffer_weights),  # fused Wqkv
                _const_spec((H, H), single_buffer_weights),      # Wo
            ],
            out_specs=pl.BlockSpec((1, 1, Bb), lambda g: (g, 0, 0)),
        )
        return pl.pallas_call(
            _cross_attn_cos_kernel,
            out_shape=jax.ShapeDtypeStruct((n_blocks, 1, Bb), jnp.float32),
            grid_spec=grid_spec,
            compiler_params=pltpu.CompilerParams(
                dimension_semantics=("parallel",),   # per-example outputs, no accumulator
                vmem_limit_bytes=vmem_limit),
        )(emb_a, emb_b, bias_a, bias_b, poolw_a, poolw_b,
          invlen_a, invlen_b, w_qkv, wo)

    try:
        cos = _call(True)
    except Exception:
        # Fallback for jax versions where Buffered(1) is rejected at lowering.
        cos = _call(False)

    # Ragged-edge garbage rows (if B % Bb != 0) never reach the loss.
    cos = cos.reshape(n_blocks * Bb)[:B]
    labels = labels.reshape(-1).astype(jnp.float32)
    return jnp.mean((cos - labels) ** 2)            # MSELoss(reduction='mean')


def _reference_loss(emb_a, emb_b, mask_a, mask_b, labels, wq, wk, wv, wo):
    """Pure-JAX reference mirroring the PyTorch module semantics."""
    H = emb_a.shape[-1]
    scale = 1.0 / math.sqrt(H)

    def cross(hq, hkv, mkv):
        q = hq @ wq
        k = hkv @ wk
        v = hkv @ wv
        scores = jnp.einsum("bqh,bkh->bqk", q, k) * scale
        scores = scores + ((1.0 - mkv) * -10000.0)[:, None, :]
        p = jax.nn.softmax(scores, axis=-1)
        return jnp.einsum("bqk,bkh->bqh", p, v) @ wo

    cross_a = cross(emb_a, emb_b, mask_b)   # sentence A tokens attend over B
    cross_b = cross(emb_b, emb_a, mask_a)

    def pool(tokens, mask):
        denom = jnp.maximum(mask.sum(-1, keepdims=True), 1e-9)
        return (tokens * mask[:, :, None]).sum(1) / denom

    pa = pool(cross_a, mask_a)
    pb = pool(cross_b, mask_b)
    num = (pa * pb).sum(-1)
    na = jnp.sqrt((pa * pa).sum(-1))
    nb = jnp.sqrt((pb * pb).sum(-1))
    cos = num / (jnp.maximum(na, 1e-8) * jnp.maximum(nb, 1e-8))
    return jnp.mean((cos - labels) ** 2)


if __name__ == "__main__":
    B, S, H = 8, 8, 32
    key = jax.random.PRNGKey(0)
    k_ea, k_eb, k_wq, k_wk, k_wv, k_wo, k_lab = jax.random.split(key, 7)

    emb_a = jax.random.normal(k_ea, (B, S, H), dtype=jnp.float32) * 0.5
    emb_b = jax.random.normal(k_eb, (B, S, H), dtype=jnp.float32) * 0.5

    # attention masks: 1 = valid token, 0 = padding
    len_a = jnp.array([6, 8, 3, 8, 5, 7, 8, 4], dtype=jnp.int32)
    len_b = jnp.array([8, 5, 8, 2, 8, 6, 3, 8], dtype=jnp.int32)
    pos = jnp.arange(S, dtype=jnp.int32)[None, :]
    mask_a = (pos < len_a[:, None]).astype(jnp.float32)
    mask_b = (pos < len_b[:, None]).astype(jnp.float32)

    labels = jax.random.uniform(k_lab, (B,), dtype=jnp.float32)

    w_scale = 1.0 / math.sqrt(H)
    wq = jax.random.normal(k_wq, (H, H), dtype=jnp.float32) * w_scale
    wk = jax.random.normal(k_wk, (H, H), dtype=jnp.float32) * w_scale
    wv = jax.random.normal(k_wv, (H, H), dtype=jnp.float32) * w_scale
    wo = jax.random.normal(k_wo, (H, H), dtype=jnp.float32) * w_scale

    loss = cosine_similarity_cross_attention_loss(
        emb_a, emb_b, mask_a, mask_b, labels, wq, wk, wv, wo)
    loss = jax.block_until_ready(loss)

    ref = _reference_loss(emb_a, emb_b, mask_a, mask_b, labels, wq, wk, wv, wo)
    ref = jax.block_until_ready(ref)

    assert jnp.allclose(loss, ref, atol=1e-4, rtol=1e-3), (loss, ref)
    print("KERNEL_OK")
</pallas_src>

<mosaic_0001>
module attributes {stable_mosaic.version = 11 : i64} {
  func.func @_cross_attn_cos_kernel(%arg0: i32, %arg1: memref<4x8x32xf32, #tpu.memory_space<vmem>>, %arg2: memref<4x8x32xf32, #tpu.memory_space<vmem>>, %arg3: memref<4x1x8xf32, #tpu.memory_space<vmem>>, %arg4: memref<4x1x8xf32, #tpu.memory_space<vmem>>, %arg5: memref<4x8x1xf32, #tpu.memory_space<vmem>>, %arg6: memref<4x8x1xf32, #tpu.memory_space<vmem>>, %arg7: memref<4x1x1xf32, #tpu.memory_space<vmem>>, %arg8: memref<4x1x1xf32, #tpu.memory_space<vmem>>, %arg9: memref<32x96xf32, #tpu.memory_space<vmem>>, %arg10: memref<32x32xf32, #tpu.memory_space<vmem>>, %arg11: memref<1x1x4xf32, #tpu.memory_space<vmem>>) attributes {dimension_semantics = [#tpu.dimension_semantics<parallel>], iteration_bounds = array<i64: 2>, scalar_prefetch = 0 : i64, scratch_operands = 0 : i64, tpu.core_type = #tpu.core_type<tc>, window_params = [{transform_indices = @transform_0, window_bounds = array<i64: 4, 8, 32>}, {transform_indices = @transform_1, window_bounds = array<i64: 4, 8, 32>}, {transform_indices = @transform_2, window_bounds = array<i64: 4, 1, 8>}, {transform_indices = @transform_3, window_bounds = array<i64: 4, 1, 8>}, {transform_indices = @transform_4, window_bounds = array<i64: 4, 8, 1>}, {transform_indices = @transform_5, window_bounds = array<i64: 4, 8, 1>}, {transform_indices = @transform_6, window_bounds = array<i64: 4, 1, 1>}, {transform_indices = @transform_7, window_bounds = array<i64: 4, 1, 1>}, {pipeline_mode = #tpu.pipeline_mode<synchronous>, transform_indices = @transform_8, window_bounds = array<i64: 32, 96>}, {pipeline_mode = #tpu.pipeline_mode<synchronous>, transform_indices = @transform_9, window_bounds = array<i64: 32, 32>}, {transform_indices = @transform_10, window_bounds = array<i64: 1, 1, 4>}]} {
    %c0 = arith.constant 0 : index
    %c0_0 = arith.constant 0 : index
    %0 = vector.load %arg9[%c0, %c0_0] : memref<32x96xf32, #tpu.memory_space<vmem>>, vector<32x96xf32>
    %c0_1 = arith.constant 0 : index
    %c0_2 = arith.constant 0 : index
    %1 = vector.load %arg10[%c0_1, %c0_2] : memref<32x32xf32, #tpu.memory_space<vmem>>, vector<32x32xf32>
    %c0_3 = arith.constant 0 : index
    %c0_4 = arith.constant 0 : index
    %c0_5 = arith.constant 0 : index
    %2 = vector.load %arg1[%c0_3, %c0_4, %c0_5] : memref<4x8x32xf32, #tpu.memory_space<vmem>>, vector<4x8x32xf32>
    %3 = vector.shape_cast %2 : vector<4x8x32xf32> to vector<32x32xf32>
    %cst = arith.constant dense<0.000000e+00> : vector<32x96xf32>
    %4 = tpu.matmul %3, %0, %cst {dimension_numbers = #tpu.dot_dimension_numbers<[1], [0], [0], [1], [0, 0, 1, 1], [], []>} : vector<32x32xf32>, vector<32x96xf32>, vector<32x96xf32> -> vector<32x96xf32>
    %5 = vector.shape_cast %4 : vector<32x96xf32> to vector<4x8x96xf32>
    %6 = vector.extract_strided_slice %5 {offsets = [0, 0, 0], sizes = [4, 8, 32], strides = [1, 1, 1]} : vector<4x8x96xf32> to vector<4x8x32xf32>
    %7 = vector.extract_strided_slice %5 {offsets = [0, 0, 32], sizes = [4, 8, 32], strides = [1, 1, 1]} : vector<4x8x96xf32> to vector<4x8x32xf32>
    %8 = vector.extract_strided_slice %5 {offsets = [0, 0, 64], sizes = [4, 8, 32], strides = [1, 1, 1]} : vector<4x8x96xf32> to vector<4x8x32xf32>
    %c0_6 = arith.constant 0 : index
    %c0_7 = arith.constant 0 : index
    %c0_8 = arith.constant 0 : index
    %9 = vector.load %arg2[%c0_6, %c0_7, %c0_8] : memref<4x8x32xf32, #tpu.memory_space<vmem>>, vector<4x8x32xf32>
    %10 = vector.shape_cast %9 : vector<4x8x32xf32> to vector<32x32xf32>
    %cst_9 = arith.constant dense<0.000000e+00> : vector<32x96xf32>
    %11 = tpu.matmul %10, %0, %cst_9 {dimension_numbers = #tpu.dot_dimension_numbers<[1], [0], [0], [1], [0, 0, 1, 1], [], []>} : vector<32x32xf32>, vector<32x96xf32>, vector<32x96xf32> -> vector<32x96xf32>
    %12 = vector.shape_cast %11 : vector<32x96xf32> to vector<4x8x96xf32>
    %13 = vector.extract_strided_slice %12 {offsets = [0, 0, 0], sizes = [4, 8, 32], strides = [1, 1, 1]} : vector<4x8x96xf32> to vector<4x8x32xf32>
    %14 = vector.extract_strided_slice %12 {offsets = [0, 0, 32], sizes = [4, 8, 32], strides = [1, 1, 1]} : vector<4x8x96xf32> to vector<4x8x32xf32>
    %15 = vector.extract_strided_slice %12 {offsets = [0, 0, 64], sizes = [4, 8, 32], strides = [1, 1, 1]} : vector<4x8x96xf32> to vector<4x8x32xf32>
    %c0_10 = arith.constant 0 : index
    %c0_11 = arith.constant 0 : index
    %c0_12 = arith.constant 0 : index
    %16 = vector.load %arg4[%c0_10, %c0_11, %c0_12] : memref<4x1x8xf32, #tpu.memory_space<vmem>>, vector<4x1x8xf32>
    %c0_13 = arith.constant 0 : index
    %c0_14 = arith.constant 0 : index
    %c0_15 = arith.constant 0 : index
    %17 = vector.load %arg5[%c0_13, %c0_14, %c0_15] : memref<4x8x1xf32, #tpu.memory_space<vmem>>, vector<4x8x1xf32>
    %c0_16 = arith.constant 0 : index
    %c0_17 = arith.constant 0 : index
    %c0_18 = arith.constant 0 : index
    %18 = vector.load %arg7[%c0_16, %c0_17, %c0_18] : memref<4x1x1xf32, #tpu.memory_space<vmem>>, vector<4x1x1xf32>
    %19 = vector.shape_cast %18 : vector<4x1x1xf32> to vector<4x1xf32>
    "tpu.trace_start"() <{level = 10 : i32, message = "bqh,bkh->bqk"}> : () -> ()
    %cst_19 = arith.constant dense<0.000000e+00> : vector<4x8x8xf32>
    %20 = tpu.matmul %6, %14, %cst_19 {dimension_numbers = #tpu.dot_dimension_numbers<[2], [2], [1], [1], [0, 0, 0, 1, 1, 1], [0], [0]>} : vector<4x8x32xf32>, vector<4x8x32xf32>, vector<4x8x8xf32> -> vector<4x8x8xf32>
    "tpu.trace_stop"() : () -> ()
    %cst_20 = arith.constant 0.176776692 : f32
    %21 = vector.broadcast %cst_20 : f32 to vector<4x8x8xf32>
    %22 = arith.mulf %20, %21 : vector<4x8x8xf32>
    %23 = vector.broadcast %16 : vector<4x1x8xf32> to vector<4x8x8xf32>
    %24 = arith.addf %22, %23 : vector<4x8x8xf32>
    %cst_21 = arith.constant dense<0xFF800000> : vector<4x8xf32>
    %25 = vector.multi_reduction <maximumf>, %24, %cst_21 [2] : vector<4x8x8xf32> to vector<4x8xf32>
    %26 = vector.shape_cast %25 : vector<4x8xf32> to vector<4x8x1xf32>
    %27 = vector.broadcast %26 : vector<4x8x1xf32> to vector<4x8x8xf32>
    %28 = arith.subf %24, %27 : vector<4x8x8xf32>
    %29 = math.exp %28 : vector<4x8x8xf32>
    %cst_22 = arith.constant dense<0.000000e+00> : vector<4x8xf32>
    %30 = vector.multi_reduction <add>, %29, %cst_22 [2] : vector<4x8x8xf32> to vector<4x8xf32>
    %31 = vector.shape_cast %30 : vector<4x8xf32> to vector<4x8x1xf32>
    "tpu.trace_start"() <{level = 10 : i32, message = "bqk,bkh->bqh"}> : () -> ()
    %cst_23 = arith.constant dense<0.000000e+00> : vector<4x8x32xf32>
    %32 = tpu.matmul %29, %15, %cst_23 {dimension_numbers = #tpu.dot_dimension_numbers<[2], [1], [1], [2], [0, 0, 0, 1, 1, 2], [0], [0]>} : vector<4x8x8xf32>, vector<4x8x32xf32>, vector<4x8x32xf32> -> vector<4x8x32xf32>
    "tpu.trace_stop"() : () -> ()
    %33 = tpu.reciprocal %31 : vector<4x8x1xf32> -> vector<4x8x1xf32>
    %34 = arith.mulf %17, %33 : vector<4x8x1xf32>
    %35 = vector.broadcast %34 : vector<4x8x1xf32> to vector<4x8x32xf32>
    %36 = arith.mulf %32, %35 : vector<4x8x32xf32>
    %cst_24 = arith.constant dense<0.000000e+00> : vector<4x32xf32>
    %37 = vector.multi_reduction <add>, %36, %cst_24 [1] : vector<4x8x32xf32> to vector<4x32xf32>
    %38 = vector.broadcast %19 : vector<4x1xf32> to vector<4x32xf32>
    %39 = arith.mulf %37, %38 : vector<4x32xf32>
    %c0_25 = arith.constant 0 : index
    %c0_26 = arith.constant 0 : index
    %c0_27 = arith.constant 0 : index
    %40 = vector.load %arg3[%c0_25, %c0_26, %c0_27] : memref<4x1x8xf32, #tpu.memory_space<vmem>>, vector<4x1x8xf32>
    %c0_28 = arith.constant 0 : index
    %c0_29 = arith.constant 0 : index
    %c0_30 = arith.constant 0 : index
    %41 = vector.load %arg6[%c0_28, %c0_29, %c0_30] : memref<4x8x1xf32, #tpu.memory_space<vmem>>, vector<4x8x1xf32>
    %c0_31 = arith.constant 0 : index
    %c0_32 = arith.constant 0 : index
    %c0_33 = arith.constant 0 : index
    %42 = vector.load %arg8[%c0_31, %c0_32, %c0_33] : memref<4x1x1xf32, #tpu.memory_space<vmem>>, vector<4x1x1xf32>
    %43 = vector.shape_cast %42 : vector<4x1x1xf32> to vector<4x1xf32>
    "tpu.trace_start"() <{level = 10 : i32, message = "bqh,bkh->bqk"}> : () -> ()
    %cst_34 = arith.constant dense<0.000000e+00> : vector<4x8x8xf32>
    %44 = tpu.matmul %13, %7, %cst_34 {dimension_numbers = #tpu.dot_dimension_numbers<[2], [2], [1], [1], [0, 0, 0, 1, 1, 1], [0], [0]>} : vector<4x8x32xf32>, vector<4x8x32xf32>, vector<4x8x8xf32> -> vector<4x8x8xf32>
    "tpu.trace_stop"() : () -> ()
    %cst_35 = arith.constant 0.176776692 : f32
    %45 = vector.broadcast %cst_35 : f32 to vector<4x8x8xf32>
    %46 = arith.mulf %44, %45 : vector<4x8x8xf32>
    %47 = vector.broadcast %40 : vector<4x1x8xf32> to vector<4x8x8xf32>
    %48 = arith.addf %46, %47 : vector<4x8x8xf32>
    %cst_36 = arith.constant dense<0xFF800000> : vector<4x8xf32>
    %49 = vector.multi_reduction <maximumf>, %48, %cst_36 [2] : vector<4x8x8xf32> to vector<4x8xf32>
    %50 = vector.shape_cast %49 : vector<4x8xf32> to vector<4x8x1xf32>
    %51 = vector.broadcast %50 : vector<4x8x1xf32> to vector<4x8x8xf32>
    %52 = arith.subf %48, %51 : vector<4x8x8xf32>
    %53 = math.exp %52 : vector<4x8x8xf32>
    %cst_37 = arith.constant dense<0.000000e+00> : vector<4x8xf32>
    %54 = vector.multi_reduction <add>, %53, %cst_37 [2] : vector<4x8x8xf32> to vector<4x8xf32>
    %55 = vector.shape_cast %54 : vector<4x8xf32> to vector<4x8x1xf32>
    "tpu.trace_start"() <{level = 10 : i32, message = "bqk,bkh->bqh"}> : () -> ()
    %cst_38 = arith.constant dense<0.000000e+00> : vector<4x8x32xf32>
    %56 = tpu.matmul %53, %8, %cst_38 {dimension_numbers = #tpu.dot_dimension_numbers<[2], [1], [1], [2], [0, 0, 0, 1, 1, 2], [0], [0]>} : vector<4x8x8xf32>, vector<4x8x32xf32>, vector<4x8x32xf32> -> vector<4x8x32xf32>
    "tpu.trace_stop"() : () -> ()
    %57 = tpu.reciprocal %55 : vector<4x8x1xf32> -> vector<4x8x1xf32>
    %58 = arith.mulf %41, %57 : vector<4x8x1xf32>
    %59 = vector.broadcast %58 : vector<4x8x1xf32> to vector<4x8x32xf32>
    %60 = arith.mulf %56, %59 : vector<4x8x32xf32>
    %cst_39 = arith.constant dense<0.000000e+00> : vector<4x32xf32>
    %61 = vector.multi_reduction <add>, %60, %cst_39 [1] : vector<4x8x32xf32> to vector<4x32xf32>
    %62 = vector.broadcast %43 : vector<4x1xf32> to vector<4x32xf32>
    %63 = arith.mulf %61, %62 : vector<4x32xf32>
    %64 = tpu.concatenate %39, %63 in 0 : vector<4x32xf32>, vector<4x32xf32> -> vector<8x32xf32>
    %cst_40 = arith.constant dense<0.000000e+00> : vector<8x32xf32>
    %65 = tpu.matmul %64, %1, %cst_40 {dimension_numbers = #tpu.dot_dimension_numbers<[1], [0], [0], [1], [0, 0, 1, 1], [], []>} : vector<8x32xf32>, vector<32x32xf32>, vector<8x32xf32> -> vector<8x32xf32>
    %66 = vector.extract_strided_slice %65 {offsets = [0, 0], sizes = [4, 32], strides = [1, 1]} : vector<8x32xf32> to vector<4x32xf32>
    %67 = vector.extract_strided_slice %65 {offsets = [4, 0], sizes = [4, 32], strides = [1, 1]} : vector<8x32xf32> to vector<4x32xf32>
    %68 = arith.mulf %66, %67 : vector<4x32xf32>
    %cst_41 = arith.constant dense<0.000000e+00> : vector<4xf32>
    %69 = vector.multi_reduction <add>, %68, %cst_41 [1] : vector<4x32xf32> to vector<4xf32>
    %70 = vector.shape_cast %69 : vector<4xf32> to vector<4x1xf32>
    %71 = arith.mulf %66, %66 : vector<4x32xf32>
    %cst_42 = arith.constant dense<0.000000e+00> : vector<4xf32>
    %72 = vector.multi_reduction <add>, %71, %cst_42 [1] : vector<4x32xf32> to vector<4xf32>
    %73 = vector.shape_cast %72 : vector<4xf32> to vector<4x1xf32>
    %74 = math.sqrt %73 : vector<4x1xf32>
    %75 = arith.mulf %67, %67 : vector<4x32xf32>
    %cst_43 = arith.constant dense<0.000000e+00> : vector<4xf32>
    %76 = vector.multi_reduction <add>, %75, %cst_43 [1] : vector<4x32xf32> to vector<4xf32>
    %77 = vector.shape_cast %76 : vector<4xf32> to vector<4x1xf32>
    %78 = math.sqrt %77 : vector<4x1xf32>
    %cst_44 = arith.constant 9.99999993E-9 : f32
    %79 = vector.broadcast %cst_44 : f32 to vector<4x1xf32>
    %80 = arith.maximumf %74, %79 : vector<4x1xf32>
    %cst_45 = arith.constant 9.99999993E-9 : f32
    %81 = vector.broadcast %cst_45 : f32 to vector<4x1xf32>
    %82 = arith.maximumf %78, %81 : vector<4x1xf32>
    %83 = arith.mulf %80, %82 : vector<4x1xf32>
    %84 = arith.divf %70, %83 : vector<4x1xf32>
    %85 = vector.shape_cast %84 : vector<4x1xf32> to vector<1x1x4xf32>
    %c0_46 = arith.constant 0 : index
    %c0_47 = arith.constant 0 : index
    %c0_48 = arith.constant 0 : index
    %86 = vector.load %arg11[%c0_46, %c0_47, %c0_48] : memref<1x1x4xf32, #tpu.memory_space<vmem>>, vector<1x1x4xf32>
    tpu.vector_store %arg11[%c0_46, %c0_47, %c0_48], %85 {strides = array<i32>} : memref<1x1x4xf32, #tpu.memory_space<vmem>>, vector<1x1x4xf32>,
    return
  }
  func.func @transform_0(%arg0: i32) -> (i32, i32, i32) {
    %c0_i32 = arith.constant 0 : i32
    %c0_i32_0 = arith.constant 0 : i32
    %c0_i32_1 = arith.constant 0 : i32
    return %arg0, %c0_i32, %c0_i32_0 : i32, i32, i32
  }
  func.func @transform_1(%arg0: i32) -> (i32, i32, i32) {
    %c0_i32 = arith.constant 0 : i32
    %c0_i32_0 = arith.constant 0 : i32
    %c0_i32_1 = arith.constant 0 : i32
    return %arg0, %c0_i32, %c0_i32_0 : i32, i32, i32
  }
  func.func @transform_2(%arg0: i32) -> (i32, i32, i32) {
    %c0_i32 = arith.constant 0 : i32
    %c0_i32_0 = arith.constant 0 : i32
    %c0_i32_1 = arith.constant 0 : i32
    return %arg0, %c0_i32, %c0_i32_0 : i32, i32, i32
  }
  func.func @transform_3(%arg0: i32) -> (i32, i32, i32) {
    %c0_i32 = arith.constant 0 : i32
    %c0_i32_0 = arith.constant 0 : i32
    %c0_i32_1 = arith.constant 0 : i32
    return %arg0, %c0_i32, %c0_i32_0 : i32, i32, i32
  }
  func.func @transform_4(%arg0: i32) -> (i32, i32, i32) {
    %c0_i32 = arith.constant 0 : i32
    %c0_i32_0 = arith.constant 0 : i32
    %c0_i32_1 = arith.constant 0 : i32
    return %arg0, %c0_i32, %c0_i32_0 : i32, i32, i32
  }
  func.func @transform_5(%arg0: i32) -> (i32, i32, i32) {
    %c0_i32 = arith.constant 0 : i32
    %c0_i32_0 = arith.constant 0 : i32
    %c0_i32_1 = arith.constant 0 : i32
    return %arg0, %c0_i32, %c0_i32_0 : i32, i32, i32
  }
  func.func @transform_6(%arg0: i32) -> (i32, i32, i32) {
    %c0_i32 = arith.constant 0 : i32
    %c0_i32_0 = arith.constant 0 : i32
    %c0_i32_1 = arith.constant 0 : i32
    return %arg0, %c0_i32, %c0_i32_0 : i32, i32, i32
  }
  func.func @transform_7(%arg0: i32) -> (i32, i32, i32) {
    %c0_i32 = arith.constant 0 : i32
    %c0_i32_0 = arith.constant 0 : i32
    %c0_i32_1 = arith.constant 0 : i32
    return %arg0, %c0_i32, %c0_i32_0 : i32, i32, i32
  }
  func.func @transform_8(%arg0: i32) -> (i32, i32) {
    %c0_i32 = arith.constant 0 : i32
    %c0_i32_0 = arith.constant 0 : i32
    %c0_i32_1 = arith.constant 0 : i32
    return %c0_i32, %c0_i32_0 : i32, i32
  }
  func.func @transform_9(%arg0: i32) -> (i32, i32) {
    %c0_i32 = arith.constant 0 : i32
    %c0_i32_0 = arith.constant 0 : i32
    %c0_i32_1 = arith.constant 0 : i32
    return %c0_i32, %c0_i32_0 : i32, i32
  }
  func.func @transform_10(%arg0: i32) -> (i32, i32, i32) {
    %c0_i32 = arith.constant 0 : i32
    %c0_i32_0 = arith.constant 0 : i32
    %c0_i32_1 = arith.constant 0 : i32
    return %arg0, %c0_i32, %c0_i32_0 : i32, i32, i32
  }
}

module attributes {stable_mosaic.version = 11 : i64} {
  func.func @_cross_attn_cos_kernel(%arg0: i32, %arg1: memref<4x8x32xf32, #tpu.memory_space<vmem>>, %arg2: memref<4x8x32xf32, #tpu.memory_space<vmem>>, %arg3: memref<4x1x8xf32, #tpu.memory_space<vmem>>, %arg4: memref<4x1x8xf32, #tpu.memory_space<vmem>>, %arg5: memref<4x8x1xf32, #tpu.memory_space<vmem>>, %arg6: memref<4x8x1xf32, #tpu.memory_space<vmem>>, %arg7: memref<4x1x1xf32, #tpu.memory_space<vmem>>, %arg8: memref<4x1x1xf32, #tpu.memory_space<vmem>>, %arg9: memref<32x96xf32, #tpu.memory_space<vmem>>, %arg10: memref<32x32xf32, #tpu.memory_space<vmem>>, %arg11: memref<1x1x4xf32, #tpu.memory_space<vmem>>) attributes {dimension_semantics = [#tpu.dimension_semantics<parallel>], iteration_bounds = array<i64: 2>, scalar_prefetch = 0 : i64, scratch_operands = 0 : i64, tpu.core_type = #tpu.core_type<tc>, window_params = [{transform_indices = @transform_0, window_bounds = array<i64: 4, 8, 32>}, {transform_indices = @transform_1, window_bounds = array<i64: 4, 8, 32>}, {transform_indices = @transform_2, window_bounds = array<i64: 4, 1, 8>}, {transform_indices = @transform_3, window_bounds = array<i64: 4, 1, 8>}, {transform_indices = @transform_4, window_bounds = array<i64: 4, 8, 1>}, {transform_indices = @transform_5, window_bounds = array<i64: 4, 8, 1>}, {transform_indices = @transform_6, window_bounds = array<i64: 4, 1, 1>}, {transform_indices = @transform_7, window_bounds = array<i64: 4, 1, 1>}, {pipeline_mode = #tpu.pipeline_mode<synchronous>, transform_indices = @transform_8, window_bounds = array<i64: 32, 96>}, {pipeline_mode = #tpu.pipeline_mode<synchronous>, transform_indices = @transform_9, window_bounds = array<i64: 32, 32>}, {transform_indices = @transform_10, window_bounds = array<i64: 1, 1, 4>}]} {
    %c0 = arith.constant 0 : index
    %c0_0 = arith.constant 0 : index
    %0 = vector.load %arg9[%c0, %c0_0] : memref<32x96xf32, #tpu.memory_space<vmem>>, vector<32x96xf32>
    %c0_1 = arith.constant 0 : index
    %c0_2 = arith.constant 0 : index
    %1 = vector.load %arg10[%c0_1, %c0_2] : memref<32x32xf32, #tpu.memory_space<vmem>>, vector<32x32xf32>
    %c0_3 = arith.constant 0 : index
    %c0_4 = arith.constant 0 : index
    %c0_5 = arith.constant 0 : index
    %2 = vector.load %arg1[%c0_3, %c0_4, %c0_5] : memref<4x8x32xf32, #tpu.memory_space<vmem>>, vector<4x8x32xf32>
    %3 = vector.shape_cast %2 : vector<4x8x32xf32> to vector<32x32xf32>
    %cst = arith.constant dense<0.000000e+00> : vector<32x96xf32>
    %4 = tpu.matmul %3, %0, %cst {dimension_numbers = #tpu.dot_dimension_numbers<[1], [0], [0], [1], [0, 0, 1, 1], [], []>} : vector<32x32xf32>, vector<32x96xf32>, vector<32x96xf32> -> vector<32x96xf32>
    %5 = vector.shape_cast %4 : vector<32x96xf32> to vector<4x8x96xf32>
    %6 = vector.extract_strided_slice %5 {offsets = [0, 0, 0], sizes = [4, 8, 32], strides = [1, 1, 1]} : vector<4x8x96xf32> to vector<4x8x32xf32>
    %7 = vector.extract_strided_slice %5 {offsets = [0, 0, 32], sizes = [4, 8, 32], strides = [1, 1, 1]} : vector<4x8x96xf32> to vector<4x8x32xf32>
    %8 = vector.extract_strided_slice %5 {offsets = [0, 0, 64], sizes = [4, 8, 32], strides = [1, 1, 1]} : vector<4x8x96xf32> to vector<4x8x32xf32>
    %c0_6 = arith.constant 0 : index
    %c0_7 = arith.constant 0 : index
    %c0_8 = arith.constant 0 : index
    %9 = vector.load %arg2[%c0_6, %c0_7, %c0_8] : memref<4x8x32xf32, #tpu.memory_space<vmem>>, vector<4x8x32xf32>
    %10 = vector.shape_cast %9 : vector<4x8x32xf32> to vector<32x32xf32>
    %cst_9 = arith.constant dense<0.000000e+00> : vector<32x96xf32>
    %11 = tpu.matmul %10, %0, %cst_9 {dimension_numbers = #tpu.dot_dimension_numbers<[1], [0], [0], [1], [0, 0, 1, 1], [], []>} : vector<32x32xf32>, vector<32x96xf32>, vector<32x96xf32> -> vector<32x96xf32>
    %12 = vector.shape_cast %11 : vector<32x96xf32> to vector<4x8x96xf32>
    %13 = vector.extract_strided_slice %12 {offsets = [0, 0, 0], sizes = [4, 8, 32], strides = [1, 1, 1]} : vector<4x8x96xf32> to vector<4x8x32xf32>
    %14 = vector.extract_strided_slice %12 {offsets = [0, 0, 32], sizes = [4, 8, 32], strides = [1, 1, 1]} : vector<4x8x96xf32> to vector<4x8x32xf32>
    %15 = vector.extract_strided_slice %12 {offsets = [0, 0, 64], sizes = [4, 8, 32], strides = [1, 1, 1]} : vector<4x8x96xf32> to vector<4x8x32xf32>
    %c0_10 = arith.constant 0 : index
    %c0_11 = arith.constant 0 : index
    %c0_12 = arith.constant 0 : index
    %16 = vector.load %arg4[%c0_10, %c0_11, %c0_12] : memref<4x1x8xf32, #tpu.memory_space<vmem>>, vector<4x1x8xf32>
    %c0_13 = arith.constant 0 : index
    %c0_14 = arith.constant 0 : index
    %c0_15 = arith.constant 0 : index
    %17 = vector.load %arg5[%c0_13, %c0_14, %c0_15] : memref<4x8x1xf32, #tpu.memory_space<vmem>>, vector<4x8x1xf32>
    %c0_16 = arith.constant 0 : index
    %c0_17 = arith.constant 0 : index
    %c0_18 = arith.constant 0 : index
    %18 = vector.load %arg7[%c0_16, %c0_17, %c0_18] : memref<4x1x1xf32, #tpu.memory_space<vmem>>, vector<4x1x1xf32>
    %19 = vector.shape_cast %18 : vector<4x1x1xf32> to vector<4x1xf32>
    "tpu.trace_start"() <{level = 10 : i32, message = "bqh,bkh->bqk"}> : () -> ()
    %cst_19 = arith.constant dense<0.000000e+00> : vector<4x8x8xf32>
    %20 = tpu.matmul %6, %14, %cst_19 {dimension_numbers = #tpu.dot_dimension_numbers<[2], [2], [1], [1], [0, 0, 0, 1, 1, 1], [0], [0]>} : vector<4x8x32xf32>, vector<4x8x32xf32>, vector<4x8x8xf32> -> vector<4x8x8xf32>
    "tpu.trace_stop"() : () -> ()
    %cst_20 = arith.constant 0.176776692 : f32
    %21 = vector.broadcast %cst_20 : f32 to vector<4x8x8xf32>
    %22 = arith.mulf %20, %21 : vector<4x8x8xf32>
    %23 = vector.broadcast %16 : vector<4x1x8xf32> to vector<4x8x8xf32>
    %24 = arith.addf %22, %23 : vector<4x8x8xf32>
    %cst_21 = arith.constant dense<0xFF800000> : vector<4x8xf32>
    %25 = vector.multi_reduction <maximumf>, %24, %cst_21 [2] : vector<4x8x8xf32> to vector<4x8xf32>
    %26 = vector.shape_cast %25 : vector<4x8xf32> to vector<4x8x1xf32>
    %27 = vector.broadcast %26 : vector<4x8x1xf32> to vector<4x8x8xf32>
    %28 = arith.subf %24, %27 : vector<4x8x8xf32>
    %29 = math.exp %28 : vector<4x8x8xf32>
    %cst_22 = arith.constant dense<0.000000e+00> : vector<4x8xf32>
    %30 = vector.multi_reduction <add>, %29, %cst_22 [2] : vector<4x8x8xf32> to vector<4x8xf32>
    %31 = vector.shape_cast %30 : vector<4x8xf32> to vector<4x8x1xf32>
    "tpu.trace_start"() <{level = 10 : i32, message = "bqk,bkh->bqh"}> : () -> ()
    %cst_23 = arith.constant dense<0.000000e+00> : vector<4x8x32xf32>
    %32 = tpu.matmul %29, %15, %cst_23 {dimension_numbers = #tpu.dot_dimension_numbers<[2], [1], [1], [2], [0, 0, 0, 1, 1, 2], [0], [0]>} : vector<4x8x8xf32>, vector<4x8x32xf32>, vector<4x8x32xf32> -> vector<4x8x32xf32>
    "tpu.trace_stop"() : () -> ()
    %33 = tpu.reciprocal %31 : vector<4x8x1xf32> -> vector<4x8x1xf32>
    %34 = arith.mulf %17, %33 : vector<4x8x1xf32>
    %35 = vector.broadcast %34 : vector<4x8x1xf32> to vector<4x8x32xf32>
    %36 = arith.mulf %32, %35 : vector<4x8x32xf32>
    %cst_24 = arith.constant dense<0.000000e+00> : vector<4x32xf32>
    %37 = vector.multi_reduction <add>, %36, %cst_24 [1] : vector<4x8x32xf32> to vector<4x32xf32>
    %38 = vector.broadcast %19 : vector<4x1xf32> to vector<4x32xf32>
    %39 = arith.mulf %37, %38 : vector<4x32xf32>
    %c0_25 = arith.constant 0 : index
    %c0_26 = arith.constant 0 : index
    %c0_27 = arith.constant 0 : index
    %40 = vector.load %arg3[%c0_25, %c0_26, %c0_27] : memref<4x1x8xf32, #tpu.memory_space<vmem>>, vector<4x1x8xf32>
    %c0_28 = arith.constant 0 : index
    %c0_29 = arith.constant 0 : index
    %c0_30 = arith.constant 0 : index
    %41 = vector.load %arg6[%c0_28, %c0_29, %c0_30] : memref<4x8x1xf32, #tpu.memory_space<vmem>>, vector<4x8x1xf32>
    %c0_31 = arith.constant 0 : index
    %c0_32 = arith.constant 0 : index
    %c0_33 = arith.constant 0 : index
    %42 = vector.load %arg8[%c0_31, %c0_32, %c0_33] : memref<4x1x1xf32, #tpu.memory_space<vmem>>, vector<4x1x1xf32>
    %43 = vector.shape_cast %42 : vector<4x1x1xf32> to vector<4x1xf32>
    "tpu.trace_start"() <{level = 10 : i32, message = "bqh,bkh->bqk"}> : () -> ()
    %cst_34 = arith.constant dense<0.000000e+00> : vector<4x8x8xf32>
    %44 = tpu.matmul %13, %7, %cst_34 {dimension_numbers = #tpu.dot_dimension_numbers<[2], [2], [1], [1], [0, 0, 0, 1, 1, 1], [0], [0]>} : vector<4x8x32xf32>, vector<4x8x32xf32>, vector<4x8x8xf32> -> vector<4x8x8xf32>
    "tpu.trace_stop"() : () -> ()
    %cst_35 = arith.constant 0.176776692 : f32
    %45 = vector.broadcast %cst_35 : f32 to vector<4x8x8xf32>
    %46 = arith.mulf %44, %45 : vector<4x8x8xf32>
    %47 = vector.broadcast %40 : vector<4x1x8xf32> to vector<4x8x8xf32>
    %48 = arith.addf %46, %47 : vector<4x8x8xf32>
    %cst_36 = arith.constant dense<0xFF800000> : vector<4x8xf32>
    %49 = vector.multi_reduction <maximumf>, %48, %cst_36 [2] : vector<4x8x8xf32> to vector<4x8xf32>
    %50 = vector.shape_cast %49 : vector<4x8xf32> to vector<4x8x1xf32>
    %51 = vector.broadcast %50 : vector<4x8x1xf32> to vector<4x8x8xf32>
    %52 = arith.subf %48, %51 : vector<4x8x8xf32>
    %53 = math.exp %52 : vector<4x8x8xf32>
    %cst_37 = arith.constant dense<0.000000e+00> : vector<4x8xf32>
    %54 = vector.multi_reduction <add>, %53, %cst_37 [2] : vector<4x8x8xf32> to vector<4x8xf32>
    %55 = vector.shape_cast %54 : vector<4x8xf32> to vector<4x8x1xf32>
    "tpu.trace_start"() <{level = 10 : i32, message = "bqk,bkh->bqh"}> : () -> ()
    %cst_38 = arith.constant dense<0.000000e+00> : vector<4x8x32xf32>
    %56 = tpu.matmul %53, %8, %cst_38 {dimension_numbers = #tpu.dot_dimension_numbers<[2], [1], [1], [2], [0, 0, 0, 1, 1, 2], [0], [0]>} : vector<4x8x8xf32>, vector<4x8x32xf32>, vector<4x8x32xf32> -> vector<4x8x32xf32>
    "tpu.trace_stop"() : () -> ()
    %57 = tpu.reciprocal %55 : vector<4x8x1xf32> -> vector<4x8x1xf32>
    %58 = arith.mulf %41, %57 : vector<4x8x1xf32>
    %59 = vector.broadcast %58 : vector<4x8x1xf32> to vector<4x8x32xf32>
    %60 = arith.mulf %56, %59 : vector<4x8x32xf32>
    %cst_39 = arith.constant dense<0.000000e+00> : vector<4x32xf32>
    %61 = vector.multi_reduction <add>, %60, %cst_39 [1] : vector<4x8x32xf32> to vector<4x32xf32>
    %62 = vector.broadcast %43 : vector<4x1xf32> to vector<4x32xf32>
    %63 = arith.mulf %61, %62 : vector<4x32xf32>
    %64 = tpu.concatenate %39, %63 in 0 : vector<4x32xf32>, vector<4x32xf32> -> vector<8x32xf32>
    %cst_40 = arith.constant dense<0.000000e+00> : vector<8x32xf32>
    %65 = tpu.matmul %64, %1, %cst_40 {dimension_numbers = #tpu.dot_dimension_numbers<[1], [0], [0], [1], [0, 0, 1, 1], [], []>} : vector<8x32xf32>, vector<32x32xf32>, vector<8x32xf32> -> vector<8x32xf32>
    %66 = vector.extract_strided_slice %65 {offsets = [0, 0], sizes = [4, 32], strides = [1, 1]} : vector<8x32xf32> to vector<4x32xf32>
    %67 = vector.extract_strided_slice %65 {offsets = [4, 0], sizes = [4, 32], strides = [1, 1]} : vector<8x32xf32> to vector<4x32xf32>
    %68 = arith.mulf %66, %67 : vector<4x32xf32>
    %cst_41 = arith.constant dense<0.000000e+00> : vector<4xf32>
    %69 = vector.multi_reduction <add>, %68, %cst_41 [1] : vector<4x32xf32> to vector<4xf32>
    %70 = vector.shape_cast %69 : vector<4xf32> to vector<4x1xf32>
    %71 = arith.mulf %66, %66 : vector<4x32xf32>
    %cst_42 = arith.constant dense<0.000000e+00> : vector<4xf32>
    %72 = vector.multi_reduction <add>, %71, %cst_42 [1] : vector<4x32xf32> to vector<4xf32>
    %73 = vector.shape_cast %72 : vector<4xf32> to vector<4x1xf32>
    %74 = math.sqrt %73 : vector<4x1xf32>
    %75 = arith.mulf %67, %67 : vector<4x32xf32>
    %cst_43 = arith.constant dense<0.000000e+00> : vector<4xf32>
    %76 = vector.multi_reduction <add>, %75, %cst_43 [1] : vector<4x32xf32> to vector<4xf32>
    %77 = vector.shape_cast %76 : vector<4xf32> to vector<4x1xf32>
    %78 = math.sqrt %77 : vector<4x1xf32>
    %cst_44 = arith.constant 9.99999993E-9 : f32
    %79 = vector.broadcast %cst_44 : f32 to vector<4x1xf32>
    %80 = arith.maximumf %74, %79 : vector<4x1xf32>
    %cst_45 = arith.constant 9.99999993E-9 : f32
    %81 = vector.broadcast %cst_45 : f32 to vector<4x1xf32>
    %82 = arith.maximumf %78, %81 : vector<4x1xf32>
    %83 = arith.mulf %80, %82 : vector<4x1xf32>
    %84 = arith.divf %70, %83 : vector<4x1xf32>
    %85 = vector.shape_cast %84 : vector<4x1xf32> to vector<1x1x4xf32>
    %c0_46 = arith.constant 0 : index
    %c0_47 = arith.constant 0 : index
    %c0_48 = arith.constant 0 : index
    %86 = vector.load %arg11[%c0_46, %c0_47, %c0_48] : memref<1x1x4xf32, #tpu.memory_space<vmem>>, vector<1x1x4xf32>
    tpu.vector_store %arg11[%c0_46, %c0_47, %c0_48], %85 {strides = array<i32>} : memref<1x1x4xf32, #tpu.memory_space<vmem>>, vector<1x1x4xf32>,
    return
  }
  func.func @transform_0(%arg0: i32) -> (i32, i32, i32) {
    %c0_i32 = arith.constant 0 : i32
    %c0_i32_0 = arith.constant 0 : i32
    %c0_i32_1 = arith.constant 0 : i32
    return %arg0, %c0_i32, %c0_i32_0 : i32, i32, i32
  }
  func.func @transform_1(%arg0: i32) -> (i32, i32, i32) {
    %c0_i32 = arith.constant 0 : i32
    %c0_i32_0 = arith.constant 0 : i32
    %c0_i32_1 = arith.constant 0 : i32
    return %arg0, %c0_i32, %c0_i32_0 : i32, i32, i32
  }
  func.func @transform_2(%arg0: i32) -> (i32, i32, i32) {
    %c0_i32 = arith.constant 0 : i32
    %c0_i32_0 = arith.constant 0 : i32
    %c0_i32_1 = arith.constant 0 : i32
    return %arg0, %c0_i32, %c0_i32_0 : i32, i32, i32
  }
  func.func @transform_3(%arg0: i32) -> (i32, i32, i32) {
    %c0_i32 = arith.constant 0 : i32
    %c0_i32_0 = arith.constant 0 : i32
    %c0_i32_1 = arith.constant 0 : i32
    return %arg0, %c0_i32, %c0_i32_0 : i32, i32, i32
  }
  func.func @transform_4(%arg0: i32) -> (i32, i32, i32) {
    %c0_i32 = arith.constant 0 : i32
    %c0_i32_0 = arith.constant 0 : i32
    %c0_i32_1 = arith.constant 0 : i32
    return %arg0, %c0_i32, %c0_i32_0 : i32, i32, i32
  }
  func.func @transform_5(%arg0: i32) -> (i32, i32, i32) {
    %c0_i32 = arith.constant 0 : i32
    %c0_i32_0 = arith.constant 0 : i32
    %c0_i32_1 = arith.constant 0 : i32
    return %arg0, %c0_i32, %c0_i32_0 : i32, i32, i32
  }
  func.func @transform_6(%arg0: i32) -> (i32, i32, i32) {
    %c0_i32 = arith.constant 0 : i32
    %c0_i32_0 = arith.constant 0 : i32
    %c0_i32_1 = arith.constant 0 : i32
    return %arg0, %c0_i32, %c0_i32_0 : i32, i32, i32
  }
  func.func @transform_7(%arg0: i32) -> (i32, i32, i32) {
    %c0_i32 = arith.constant 0 : i32
    %c0_i32_0 = arith.constant 0 : i32
    %c0_i32_1 = arith.constant 0 : i32
    return %arg0, %c0_i32, %c0_i32_0 : i32, i32, i32
  }
  func.func @transform_8(%arg0: i32) -> (i32, i32) {
    %c0_i32 = arith.constant 0 : i32
    %c0_i32_0 = arith.constant 0 : i32
    %c0_i32_1 = arith.constant 0 : i32
    return %c0_i32, %c0_i32_0 : i32, i32
  }
  func.func @transform_9(%arg0: i32) -> (i32, i32) {
    %c0_i32 = arith.constant 0 : i32
    %c0_i32_0 = arith.constant 0 : i32
    %c0_i32_1 = arith.constant 0 : i32
    return %c0_i32, %c0_i32_0 : i32, i32
  }
  func.func @transform_10(%arg0: i32) -> (i32, i32, i32) {
    %c0_i32 = arith.constant 0 : i32
    %c0_i32_0 = arith.constant 0 : i32
    %c0_i32_1 = arith.constant 0 : i32
    return %arg0, %c0_i32, %c0_i32_0 : i32, i32, i32
  }
}

</mosaic_0001>

<llo_original>
// kernel: tpu_custom_call.1
$region0: #{tpu_custom_call.1}
  #allocation0 [shape = 'u32[]', space=smem, size = 0x4, offset = 0x4, fixed_abs, tag = 'smem constant byte address 0x4 - core index']
  #allocation1 [shape = 'u32[144,128]{1,0:T(1,128)}', space=vmem, size = 0x12000, scoped, tag = 'internal scratch']
  %s0 = inlined_call_operand.vmem [shape: f32[8,8,32], index: 0, kind: input, shape index: {}]
  %s1 = inlined_call_operand.vmem [shape: f32[8,8,32], index: 1, kind: input, shape index: {}]
  %s2 = inlined_call_operand.hbm [shape: f32[8,1,8], index: 2, kind: input, shape index: {}]
  %s3 = inlined_call_operand.hbm [shape: f32[8,1,8], index: 3, kind: input, shape index: {}]
  %s4 = inlined_call_operand.vmem [shape: f32[8,8,1], index: 4, kind: input, shape index: {}]
  %s5 = inlined_call_operand.vmem [shape: f32[8,8,1], index: 5, kind: input, shape index: {}]
  %s6 = inlined_call_operand.vmem [shape: f32[8,1,1], index: 6, kind: input, shape index: {}]
  %s7 = inlined_call_operand.vmem [shape: f32[8,1,1], index: 7, kind: input, shape index: {}]
  %s8 = inlined_call_operand.vmem [shape: f32[32,96], index: 8, kind: input, shape index: {}]
  %s9 = inlined_call_operand.vmem [shape: f32[32,32], index: 9, kind: input, shape index: {}]
  %s10 = inlined_call_operand.hbm [shape: f32[2,1,4], index: 10, kind: output, shape index: {}]
  %s11 = sld [smem:[#allocation0]]
  $region81: #{tpu_custom_call.1} parent=0
    _
  %s13 = ssub.s32 1, %s11
  %s14 = scalar_select 0, %s13, %s11
  $region1: #{tpu_custom_call.1} parent=0
    #allocation2 [shape = 'u8[4096]{0}', space=vmem, size = 0x1000, scoped, tag = 'input window, operand 2']
    #allocation3 [shape = 's32[2]{0}', space=sflag, size = 0x8, scoped, tag = 'scoped memory for tpu_custom_call.1']
    #allocation4 [shape = 's32[2]{0}', space=sflag, size = 0x8, scoped, tag = 'scoped memory for tpu_custom_call.1']
    #allocation5 [shape = 'u8[4096]{0}', space=vmem, size = 0x1000, scoped, tag = 'input window, operand 3']
    #allocation6 [shape = 's32[2]{0}', space=sflag, size = 0x8, scoped, tag = 'scoped memory for tpu_custom_call.1']
    #allocation7 [shape = 'u8[1024]{0}', space=vmem, size = 0x400, scoped, tag = 'output window, operand 0']
    %15 = vsyncpa [#allocation3], 0
    %s16 = scalar_lea.sflag [#allocation3], 1
    %17 = vsyncpa %s16, 0
    %18 = vsyncpa [#allocation6], 0
    %s19 = scalar_lea.sflag [#allocation6], 1
    %20 = vsyncpa %s19, 0
    %21 = vsyncpa [#allocation4], 0
    %s22 = scalar_lea.sflag [#allocation4], 1
    %23 = vsyncpa %s22, 0
    loop: start=0, step=1, limit=4
    $region2: #{tpu_custom_call.1} parent=1 // loop_pre_header
      _
    $region3: #{tpu_custom_call.1} parent=1 // loop_header
      %s25 = sphi 0, %s29
      %p26 = scmp.ge.s32.totalorder %s25, 4
      %s35 = sphi 0, %s37
      %s38 = sphi 0, %s35
      %s39 = sphi 0, %s38
      %s55 = sphi 0, %s39
      %s61 = sphi 0, %s63
      %s64 = sphi 0, %s61
      %s65 = sphi 0, %s64
      %s81 = sphi 0, %s65
      %s87 = sphi 0, %s89
      %s90 = sphi 0, %s87
      %s91 = sphi 0, %s90
      %s107 = sphi 0, %s91
      %s113 = sphi 0, %s115
      %s116 = sphi 0, %s113
      %s117 = sphi 0, %s116
      %s133 = sphi 0, %s117
      %s139 = sphi 0, %s141
      %s142 = sphi 0, %s139
      %s143 = sphi 0, %s142
      %s159 = sphi 0, %s143
      %s165 = sphi 0, %s167
      %s168 = sphi 0, %s165
      %s169 = sphi 0, %s168
      %s185 = sphi 0, %s169
      %s191 = sphi 0, %s193
      %s194 = sphi 0, %s191
      %s195 = sphi 0, %s194
      %s211 = sphi 0, %s195
      %s217 = sphi 0, %s219
      %s220 = sphi 0, %s217
      %s221 = sphi 0, %s220
      %s237 = sphi 0, %s221
      %s241 = sphi 0, %s241
      %s243 = sphi 0, %s241
      %s244 = sphi 0, %s243
      %s258 = sphi 0, %s244
      %s262 = sphi 0, %s262
      %s264 = sphi 0, %s262
      %s265 = sphi 0, %s264
      %s279 = sphi 0, %s265
      %s285 = sphi 0, %s287
      %s288 = sphi 0, %s285
      %s289 = sphi 0, %s288
      %s305 = sphi 0, %s289
    $region4: #{tpu_custom_call.1} parent=1 // loop_header_branch
      %28 = sbr.rel (%p26) target = $region8
    $region5: #{tpu_custom_call.1} parent=1 // loop_body
      %s30 = ssub.s32 %s25, 1
      %s31 = ssub.s32 %s25, 2
      %s32 = sadd.s32 %s25, 1
      %s33 = ssub.s32 %s25, %s32
      %p34 = scmp.eq.s32.totalorder %s33, 0
      %s36 = sadd.s32 %s35, 1
      %s37 = scalar_select %p34, %s35, %s36
      %p40 = pneg %p34
      %p41 = scmp.eq.s32.totalorder %s25, 1
      %p42 = por %p40, %p41
      %p43 = scmp.ne.s32.totalorder %s35, %s38
      %p44 = scmp.eq.s32.totalorder %s25, 0
      %p45 = por %p43, %p44
      %p46 = scmp.ne.s32.totalorder %s35, %s38
      %p47 = scmp.eq.s32.totalorder %s30, 1
      %p48 = por %p46, %p47
      %p49 = scmp.ne.s32.totalorder %s38, %s39
      %p50 = scmp.eq.s32.totalorder %s30, 0
      %p51 = por %p49, %p50
      %p52 = scmp.ne.s32.totalorder %s38, %s39
      %p53 = scmp.eq.s32.totalorder %s31, 1
      %p54 = por %p52, %p53
      %p56 = scmp.ne.s32.totalorder %s39, %s55
      %p57 = scmp.eq.s32.totalorder %s31, 0
      %p58 = por %p56, %p57
      %s59 = ssub.s32 %s25, %s32
      %p60 = scmp.eq.s32.totalorder %s59, 0
      %s62 = sadd.s32 %s61, 1
      %s63 = scalar_select %p60, %s61, %s62
      %p66 = pneg %p60
      %p67 = scmp.eq.s32.totalorder %s25, 1
      %p68 = por %p66, %p67
      %p69 = scmp.ne.s32.totalorder %s61, %s64
      %p70 = scmp.eq.s32.totalorder %s25, 0
      %p71 = por %p69, %p70
      %p72 = scmp.ne.s32.totalorder %s61, %s64
      %p73 = scmp.eq.s32.totalorder %s30, 1
      %p74 = por %p72, %p73
      %p75 = scmp.ne.s32.totalorder %s64, %s65
      %p76 = scmp.eq.s32.totalorder %s30, 0
      %p77 = por %p75, %p76
      %p78 = scmp.ne.s32.totalorder %s64, %s65
      %p79 = scmp.eq.s32.totalorder %s31, 1
      %p80 = por %p78, %p79
      %p82 = scmp.ne.s32.totalorder %s65, %s81
      %p83 = scmp.eq.s32.totalorder %s31, 0
      %p84 = por %p82, %p83
      %s85 = ssub.s32 %s25, %s32
      %p86 = scmp.eq.s32.totalorder %s85, 0
      %s88 = sadd.s32 %s87, 1
      %s89 = scalar_select %p86, %s87, %s88
      %p92 = pneg %p86
      %p93 = scmp.eq.s32.totalorder %s25, 1
      %p94 = por %p92, %p93
      %p95 = scmp.ne.s32.totalorder %s87, %s90
      %p96 = scmp.eq.s32.totalorder %s25, 0
      %p97 = por %p95, %p96
      %p98 = scmp.ne.s32.totalorder %s87, %s90
      %p99 = scmp.eq.s32.totalorder %s30, 1
      %p100 = por %p98, %p99
      %p101 = scmp.ne.s32.totalorder %s90, %s91
      %p102 = scmp.eq.s32.totalorder %s30, 0
      %p103 = por %p101, %p102
      %p104 = scmp.ne.s32.totalorder %s90, %s91
      %p105 = scmp.eq.s32.totalorder %s31, 1
      %p106 = por %p104, %p105
      %p108 = scmp.ne.s32.totalorder %s91, %s107
      %p109 = scmp.eq.s32.totalorder %s31, 0
      %p110 = por %p108, %p109
      %s111 = ssub.s32 %s25, %s32
      %p112 = scmp.eq.s32.totalorder %s111, 0
      %s114 = sadd.s32 %s113, 1
      %s115 = scalar_select %p112, %s113, %s114
      %p118 = pneg %p112
      %p119 = scmp.eq.s32.totalorder %s25, 1
      %p120 = por %p118, %p119
      %p121 = scmp.ne.s32.totalorder %s113, %s116
      %p122 = scmp.eq.s32.totalorder %s25, 0
      %p123 = por %p121, %p122
      %p124 = scmp.ne.s32.totalorder %s113, %s116
      %p125 = scmp.eq.s32.totalorder %s30, 1
      %p126 = por %p124, %p125
      %p127 = scmp.ne.s32.totalorder %s116, %s117
      %p128 = scmp.eq.s32.totalorder %s30, 0
      %p129 = por %p127, %p128
      %p130 = scmp.ne.s32.totalorder %s116, %s117
      %p131 = scmp.eq.s32.totalorder %s31, 1
      %p132 = por %p130, %p131
      %p134 = scmp.ne.s32.totalorder %s117, %s133
      %p135 = scmp.eq.s32.totalorder %s31, 0
      %p136 = por %p134, %p135
      %s137 = ssub.s32 %s25, %s32
      %p138 = scmp.eq.s32.totalorder %s137, 0
      %s140 = sadd.s32 %s139, 1
      %s141 = scalar_select %p138, %s139, %s140
      %p144 = pneg %p138
      %p145 = scmp.eq.s32.totalorder %s25, 1
      %p146 = por %p144, %p145
      %p147 = scmp.ne.s32.totalorder %s139, %s142
      %p148 = scmp.eq.s32.totalorder %s25, 0
      %p149 = por %p147, %p148
      %p150 = scmp.ne.s32.totalorder %s139, %s142
      %p151 = scmp.eq.s32.totalorder %s30, 1
      %p152 = por %p150, %p151
      %p153 = scmp.ne.s32.totalorder %s142, %s143
      %p154 = scmp.eq.s32.totalorder %s30, 0
      %p155 = por %p153, %p154
      %p156 = scmp.ne.s32.totalorder %s142, %s143
      %p157 = scmp.eq.s32.totalorder %s31, 1
      %p158 = por %p156, %p157
      %p160 = scmp.ne.s32.totalorder %s143, %s159
      %p161 = scmp.eq.s32.totalorder %s31, 0
      %p162 = por %p160, %p161
      %s163 = ssub.s32 %s25, %s32
      %p164 = scmp.eq.s32.totalorder %s163, 0
      %s166 = sadd.s32 %s165, 1
      %s167 = scalar_select %p164, %s165, %s166
      %p170 = pneg %p164
      %p171 = scmp.eq.s32.totalorder %s25, 1
      %p172 = por %p170, %p171
      %p173 = scmp.ne.s32.totalorder %s165, %s168
      %p174 = scmp.eq.s32.totalorder %s25, 0
      %p175 = por %p173, %p174
      %p176 = scmp.ne.s32.totalorder %s165, %s168
      %p177 = scmp.eq.s32.totalorder %s30, 1
      %p178 = por %p176, %p177
      %p179 = scmp.ne.s32.totalorder %s168, %s169
      %p180 = scmp.eq.s32.totalorder %s30, 0
      %p181 = por %p179, %p180
      %p182 = scmp.ne.s32.totalorder %s168, %s169
      %p183 = scmp.eq.s32.totalorder %s31, 1
      %p184 = por %p182, %p183
      %p186 = scmp.ne.s32.totalorder %s169, %s185
      %p187 = scmp.eq.s32.totalorder %s31, 0
      %p188 = por %p186, %p187
      %s189 = ssub.s32 %s25, %s32
      %p190 = scmp.eq.s32.totalorder %s189, 0
      %s192 = sadd.s32 %s191, 1
      %s193 = scalar_select %p190, %s191, %s192
      %p196 = pneg %p190
      %p197 = scmp.eq.s32.totalorder %s25, 1
      %p198 = por %p196, %p197
      %p199 = scmp.ne.s32.totalorder %s191, %s194
      %p200 = scmp.eq.s32.totalorder %s25, 0
      %p201 = por %p199, %p200
      %p202 = scmp.ne.s32.totalorder %s191, %s194
      %p203 = scmp.eq.s32.totalorder %s30, 1
      %p204 = por %p202, %p203
      %p205 = scmp.ne.s32.totalorder %s194, %s195
      %p206 = scmp.eq.s32.totalorder %s30, 0
      %p207 = por %p205, %p206
      %p208 = scmp.ne.s32.totalorder %s194, %s195
      %p209 = scmp.eq.s32.totalorder %s31, 1
      %p210 = por %p208, %p209
      %p212 = scmp.ne.s32.totalorder %s195, %s211
      %p213 = scmp.eq.s32.totalorder %s31, 0
      %p214 = por %p212, %p213
      %s215 = ssub.s32 %s25, %s32
      %p216 = scmp.eq.s32.totalorder %s215, 0
      %s218 = sadd.s32 %s217, 1
      %s219 = scalar_select %p216, %s217, %s218
      %p222 = pneg %p216
      %p223 = scmp.eq.s32.totalorder %s25, 1
      %p224 = por %p222, %p223
      %p225 = scmp.ne.s32.totalorder %s217, %s220
      %p226 = scmp.eq.s32.totalorder %s25, 0
      %p227 = por %p225, %p226
      %p228 = scmp.ne.s32.totalorder %s217, %s220
      %p229 = scmp.eq.s32.totalorder %s30, 1
      %p230 = por %p228, %p229
      %p231 = scmp.ne.s32.totalorder %s220, %s221
      %p232 = scmp.eq.s32.totalorder %s30, 0
      %p233 = por %p231, %p232
      %p234 = scmp.ne.s32.totalorder %s220, %s221
      %p235 = scmp.eq.s32.totalorder %s31, 1
      %p236 = por %p234, %p235
      %p238 = scmp.ne.s32.totalorder %s221, %s237
      %p239 = scmp.eq.s32.totalorder %s31, 0
      %p240 = por %p238, %p239
      %s242 = sadd.s32 %s241, 1
      %p245 = scmp.eq.s32.totalorder %s25, 1
      %p246 = scmp.ne.s32.totalorder %s241, %s243
      %p247 = scmp.eq.s32.totalorder %s25, 0
      %p248 = por %p246, %p247
      %p249 = scmp.ne.s32.totalorder %s241, %s243
      %p250 = scmp.eq.s32.totalorder %s30, 1
      %p251 = por %p249, %p250
      %p252 = scmp.ne.s32.totalorder %s243, %s244
      %p253 = scmp.eq.s32.totalorder %s30, 0
      %p254 = por %p252, %p253
      %p255 = scmp.ne.s32.totalorder %s243, %s244
      %p256 = scmp.eq.s32.totalorder %s31, 1
      %p257 = por %p255, %p256
      %p259 = scmp.ne.s32.totalorder %s244, %s258
      %p260 = scmp.eq.s32.totalorder %s31, 0
      %p261 = por %p259, %p260
      %s263 = sadd.s32 %s262, 1
      %p266 = scmp.eq.s32.totalorder %s25, 1
      %p267 = scmp.ne.s32.totalorder %s262, %s264
      %p268 = scmp.eq.s32.totalorder %s25, 0
      %p269 = por %p267, %p268
      %p270 = scmp.ne.s32.totalorder %s262, %s264
      %p271 = scmp.eq.s32.totalorder %s30, 1
      %p272 = por %p270, %p271
      %p273 = scmp.ne.s32.totalorder %s264, %s265
      %p274 = scmp.eq.s32.totalorder %s30, 0
      %p275 = por %p273, %p274
      %p276 = scmp.ne.s32.totalorder %s264, %s265
      %p277 = scmp.eq.s32.totalorder %s31, 1
      %p278 = por %p276, %p277
      %p280 = scmp.ne.s32.totalorder %s265, %s279
      %p281 = scmp.eq.s32.totalorder %s31, 0
      %p282 = por %p280, %p281
      %s283 = ssub.s32 %s25, %s32
      %p284 = scmp.eq.s32.totalorder %s283, 0
      %s286 = sadd.s32 %s285, 1
      %s287 = scalar_select %p284, %s285, %s286
      %p290 = pneg %p284
      %p291 = scmp.eq.s32.totalorder %s25, 1
      %p292 = por %p290, %p291
      %p293 = scmp.ne.s32.totalorder %s285, %s288
      %p294 = scmp.eq.s32.totalorder %s25, 0
      %p295 = por %p293, %p294
      %p296 = scmp.ne.s32.totalorder %s285, %s288
      %p297 = scmp.eq.s32.totalorder %s30, 1
      %p298 = por %p296, %p297
      %p299 = scmp.ne.s32.totalorder %s288, %s289
      %p300 = scmp.eq.s32.totalorder %s30, 0
      %p301 = por %p299, %p300
      %p302 = scmp.ne.s32.totalorder %s288, %s289
      %p303 = scmp.eq.s32.totalorder %s31, 1
      %p304 = por %p302, %p303
      %p306 = scmp.ne.s32.totalorder %s289, %s305
      %p307 = scmp.eq.s32.totalorder %s31, 0
      %p308 = por %p306, %p307
      %p309 = scmp.le.s32.totalorder 1, %s25
      %p310 = scmp.lt.s32.totalorder %s25, 3
      %p311 = pnand %p309, %p310
      %p312 = pneg %p311
      // Predicated region
      $region9: #{tpu_custom_call.1} parent=5 // pred_check
        _
      $region10: #{tpu_custom_call.1} parent=5 // pred_check_branch
        %314 = sbr.rel (%p311) target = $region12
      $region11: #{tpu_custom_call.1} parent=5 // pred_region
        %s315 = ssub.s32 %s25, 1
        // Predicated region
        $region13: #{tpu_custom_call.1} parent=11 // pred_check
          %p316 = pneg %p254
        $region14: #{tpu_custom_call.1} parent=11 // pred_check_branch
          %318 = sbr.rel (%p316) target = $region16
        $region15: #{tpu_custom_call.1} parent=11 // pred_region
          _
        $region16: #{tpu_custom_call.1} parent=11 // pred_fallthru
          _
        // Predicated region
        $region17: #{tpu_custom_call.1} parent=11 // pred_check
          %p319 = pneg %p275
        $region18: #{tpu_custom_call.1} parent=11 // pred_check_branch
          %321 = sbr.rel (%p319) target = $region20
        $region19: #{tpu_custom_call.1} parent=11 // pred_region
          _
        $region20: #{tpu_custom_call.1} parent=11 // pred_fallthru
          _
      $region12: #{tpu_custom_call.1} parent=5 // pred_fallthru
        _
      %p322 = scmp.lt.s32.totalorder %s25, 2
      // Predicated region
      $region21: #{tpu_custom_call.1} parent=5 // pred_check
        %p323 = pneg %p322
      $region22: #{tpu_custom_call.1} parent=5 // pred_check_branch
        %325 = sbr.rel (%p323) target = $region24
      $region23: #{tpu_custom_call.1} parent=5 // pred_region
        // Predicated region
        $region25: #{tpu_custom_call.1} parent=23 // pred_check
          %p326 = pneg %p45
        $region26: #{tpu_custom_call.1} parent=23 // pred_check_branch
          %328 = sbr.rel (%p326) target = $region28
        $region27: #{tpu_custom_call.1} parent=23 // pred_region
          %s329 = smul.u32 4, %s25
          %p330 = scmp.lt.s32.totalorder %s329, 7
          %s331 = scalar_select %p330, %s329, 7
          %s332 = smul.addr %s331, 8
          %s333 = scalar_lea.vmem %s0, %s332
          %s334 = smul.u32 4, %s25
        $region28: #{tpu_custom_call.1} parent=23 // pred_fallthru
          _
        // Predicated region
        $region29: #{tpu_custom_call.1} parent=23 // pred_check
          %p335 = pneg %p71
        $region30: #{tpu_custom_call.1} parent=23 // pred_check_branch
          %337 = sbr.rel (%p335) target = $region32
        $region31: #{tpu_custom_call.1} parent=23 // pred_region
          %s338 = smul.u32 4, %s25
          %p339 = scmp.lt.s32.totalorder %s338, 7
          %s340 = scalar_select %p339, %s338, 7
          %s341 = smul.addr %s340, 8
          %s342 = scalar_lea.vmem %s1, %s341
          %s343 = smul.u32 4, %s25
        $region32: #{tpu_custom_call.1} parent=23 // pred_fallthru
          _
        // Predicated region
        $region33: #{tpu_custom_call.1} parent=23 // pred_check
          %p344 = pneg %p97
        $region34: #{tpu_custom_call.1} parent=23 // pred_check_branch
          %346 = sbr.rel (%p344) target = $region36
        $region35: #{tpu_custom_call.1} parent=23 // pred_region
          %s347 = sand.u32 %s87, 1
          %s348 = scalar_lea.sflag [#allocation3], %s347
          %s349 = sand.u32 %s87, 1
          %s350 = smul.addr %s349, 4
          %s351 = scalar_lea.vmem [#allocation2], %s350
          %s352 = smul.u32 4, %s25
          %s354 = ssub.s32 64, 64
          %355 = vsyncadd %s348, %s354
          %s356 = smul.addr %s352, 16
          %s357 = scalar_lea.hbm %s2, %s356
          %s358 = sshll.u32 %s351, 4
          %s359 = int_to_ptr.vmem [resolvable:$true] %s358
          %364 = dma.hbm_to_vmem [thread:$0]  %s357, 64, %s359, %s348, 16, 16, 1
        $region36: #{tpu_custom_call.1} parent=23 // pred_fallthru
          _
        // Predicated region
        $region37: #{tpu_custom_call.1} parent=23 // pred_check
          %p365 = pneg %p123
        $region38: #{tpu_custom_call.1} parent=23 // pred_check_branch
          %367 = sbr.rel (%p365) target = $region40
        $region39: #{tpu_custom_call.1} parent=23 // pred_region
          %s368 = sand.u32 %s113, 1
          %s369 = scalar_lea.sflag [#allocation6], %s368
          %s370 = sand.u32 %s113, 1
          %s371 = smul.addr %s370, 4
          %s372 = scalar_lea.vmem [#allocation5], %s371
          %s373 = smul.u32 4, %s25
          %s375 = ssub.s32 64, 64
          %376 = vsyncadd %s369, %s375
          %s377 = smul.addr %s373, 16
          %s378 = scalar_lea.hbm %s3, %s377
          %s379 = sshll.u32 %s372, 4
          %s380 = int_to_ptr.vmem [resolvable:$true] %s379
          %385 = dma.hbm_to_vmem [thread:$0]  %s378, 64, %s380, %s369, 16, 16, 1
        $region40: #{tpu_custom_call.1} parent=23 // pred_fallthru
          _
        // Predicated region
        $region41: #{tpu_custom_call.1} parent=23 // pred_check
          %p386 = pneg %p149
        $region42: #{tpu_custom_call.1} parent=23 // pred_check_branch
          %388 = sbr.rel (%p386) target = $region44
        $region43: #{tpu_custom_call.1} parent=23 // pred_region
          %s389 = smul.u32 4, %s25
          %p390 = scmp.lt.s32.totalorder %s389, 7
          %s391 = scalar_select %p390, %s389, 7
          %s392 = smul.addr %s391, 8
          %s393 = scalar_lea.vmem %s4, %s392
          %s394 = smul.u32 4, %s25
        $region44: #{tpu_custom_call.1} parent=23 // pred_fallthru
          _
        // Predicated region
        $region45: #{tpu_custom_call.1} parent=23 // pred_check
          %p395 = pneg %p175
        $region46: #{tpu_custom_call.1} parent=23 // pred_check_branch
          %397 = sbr.rel (%p395) target = $region48
        $region47: #{tpu_custom_call.1} parent=23 // pred_region
          %s398 = smul.u32 4, %s25
          %p399 = scmp.lt.s32.totalorder %s398, 7
          %s400 = scalar_select %p399, %s398, 7
          %s401 = smul.addr %s400, 8
          %s402 = scalar_lea.vmem %s5, %s401
          %s403 = smul.u32 4, %s25
        $region48: #{tpu_custom_call.1} parent=23 // pred_fallthru
          _
        // Predicated region
        $region49: #{tpu_custom_call.1} parent=23 // pred_check
          %p404 = pneg %p201
        $region50: #{tpu_custom_call.1} parent=23 // pred_check_branch
          %406 = sbr.rel (%p404) target = $region52
        $region51: #{tpu_custom_call.1} parent=23 // pred_region
          %s407 = smul.u32 4, %s25
          %p408 = scmp.lt.s32.totalorder %s407, 7
          %s409 = scalar_select %p408, %s407, 7
          %s410 = scalar_lea.vmem %s6, %s409
          %s411 = smul.u32 4, %s25
        $region52: #{tpu_custom_call.1} parent=23 // pred_fallthru
          _
        // Predicated region
        $region53: #{tpu_custom_call.1} parent=23 // pred_check
          %p412 = pneg %p227
        $region54: #{tpu_custom_call.1} parent=23 // pred_check_branch
          %414 = sbr.rel (%p412) target = $region56
        $region55: #{tpu_custom_call.1} parent=23 // pred_region
          %s415 = smul.u32 4, %s25
          %p416 = scmp.lt.s32.totalorder %s415, 7
          %s417 = scalar_select %p416, %s415, 7
          %s418 = scalar_lea.vmem %s7, %s417
          %s419 = smul.u32 4, %s25
        $region56: #{tpu_custom_call.1} parent=23 // pred_fallthru
          _
      $region24: #{tpu_custom_call.1} parent=5 // pred_fallthru
        _
      %p420 = scmp.le.s32.totalorder 1, %s25
      %p421 = scmp.lt.s32.totalorder %s25, 3
      %p422 = pnand %p420, %p421
      %p423 = pneg %p422
      // Predicated region
      $region57: #{tpu_custom_call.1} parent=5 // pred_check
        _
      $region58: #{tpu_custom_call.1} parent=5 // pred_check_branch
        %425 = sbr.rel (%p422) target = $region60
      $region59: #{tpu_custom_call.1} parent=5 // pred_region
        %s426 = ssub.s32 %s25, 1
        %s427 = sand.u32 %s90, 1
        %s428 = scalar_lea.sflag [#allocation3], %s427
        %s429 = sand.u32 %s90, 1
        %s430 = smul.addr %s429, 4
        %s431 = scalar_lea.vmem [#allocation2], %s430
        // Predicated region
        $region61: #{tpu_custom_call.1} parent=59 // pred_check
          %p432 = pneg %p103
        $region62: #{tpu_custom_call.1} parent=59 // pred_check_branch
          %434 = sbr.rel (%p432) target = $region64
        $region63: #{tpu_custom_call.1} parent=59 // pred_region
          %435 = dma.done %s428, 64
        $region64: #{tpu_custom_call.1} parent=59 // pred_fallthru
          _
        %s436 = sand.u32 %s116, 1
        %s437 = scalar_lea.sflag [#allocation6], %s436
        %s438 = sand.u32 %s116, 1
        %s439 = smul.addr %s438, 4
        %s440 = scalar_lea.vmem [#allocation5], %s439
        // Predicated region
        $region65: #{tpu_custom_call.1} parent=59 // pred_check
          %p441 = pneg %p129
        $region66: #{tpu_custom_call.1} parent=59 // pred_check_branch
          %443 = sbr.rel (%p441) target = $region68
        $region67: #{tpu_custom_call.1} parent=59 // pred_region
          %444 = dma.done %s437, 64
        $region68: #{tpu_custom_call.1} parent=59 // pred_fallthru
          _
        %s445 = smul.u32 4, %s30
        %p446 = scmp.lt.s32.totalorder %s445, 7
        %s447 = scalar_select %p446, %s445, 7
        %s448 = smul.addr %s447, 8
        %s449 = scalar_lea.vmem %s0, %s448
        %p450 = pneg %p51
        %p451 = pneg %p48
        %s452 = smul.u32 4, %s30
        %p453 = scmp.lt.s32.totalorder %s452, 7
        %s454 = scalar_select %p453, %s452, 7
        %s455 = smul.addr %s454, 8
        %s456 = scalar_lea.vmem %s1, %s455
        %p457 = pneg %p77
        %p458 = pneg %p74
        %s459 = sand.u32 %s90, 1
        %s460 = scalar_lea.sflag [#allocation3], %s459
        %s461 = sand.u32 %s90, 1
        %s462 = smul.addr %s461, 4
        %s463 = scalar_lea.vmem [#allocation2], %s462
        %p464 = pneg %p103
        %p465 = pneg %p100
        %s466 = sand.u32 %s116, 1
        %s467 = scalar_lea.sflag [#allocation6], %s466
        %s468 = sand.u32 %s116, 1
        %s469 = smul.addr %s468, 4
        %s470 = scalar_lea.vmem [#allocation5], %s469
        %p471 = pneg %p129
        %p472 = pneg %p126
        %s473 = smul.u32 4, %s30
        %p474 = scmp.lt.s32.totalorder %s473, 7
        %s475 = scalar_select %p474, %s473, 7
        %s476 = smul.addr %s475, 8
        %s477 = scalar_lea.vmem %s4, %s476
        %p478 = pneg %p155
        %p479 = pneg %p152
        %s480 = smul.u32 4, %s30
        %p481 = scmp.lt.s32.totalorder %s480, 7
        %s482 = scalar_select %p481, %s480, 7
        %s483 = smul.addr %s482, 8
        %s484 = scalar_lea.vmem %s5, %s483
        %p485 = pneg %p181
        %p486 = pneg %p178
        %s487 = smul.u32 4, %s30
        %p488 = scmp.lt.s32.totalorder %s487, 7
        %s489 = scalar_select %p488, %s487, 7
        %s490 = scalar_lea.vmem %s6, %s489
        %p491 = pneg %p207
        %p492 = pneg %p204
        %s493 = smul.u32 4, %s30
        %p494 = scmp.lt.s32.totalorder %s493, 7
        %s495 = scalar_select %p494, %s493, 7
        %s496 = scalar_lea.vmem %s7, %s495
        %p497 = pneg %p233
        %p498 = pneg %p230
        %p499 = pneg %p254
        %p500 = pneg %p251
        %p501 = pneg %p275
        %p502 = pneg %p272
        %p503 = pneg %p301
        %p504 = pneg %p298
        %s505 = sand.u32 %s288, 1
        %s506 = scalar_lea.sflag [#allocation4], %s505
        %s507 = sand.u32 %s288, 1
        %s508 = scalar_lea.vmem [#allocation7], %s507
        %s509 = smul.u32 4, %s30
        %p510 = scmp.lt.s32.totalorder %s509, 7
        %s511 = scalar_select %p510, %s509, 7
        %s512 = smul.addr %s511, 8
        %s513 = scalar_lea.vmem %s0, %s512
        %s514 = smul.u32 4, %s30
        %s515 = smul.u32 4, %s30
        %p516 = scmp.lt.s32.totalorder %s515, 7
        %s517 = scalar_select %p516, %s515, 7
        %s518 = smul.addr %s517, 8
        %s519 = scalar_lea.vmem %s1, %s518
        %s520 = smul.u32 4, %s30
        %s521 = smul.u32 4, %s30
        %s522 = smul.u32 4, %s30
        %s523 = smul.u32 4, %s30
        %p524 = scmp.lt.s32.totalorder %s523, 7
        %s525 = scalar_select %p524, %s523, 7
        %s526 = smul.addr %s525, 8
        %s527 = scalar_lea.vmem %s4, %s526
        %s528 = smul.u32 4, %s30
        %s529 = smul.u32 4, %s30
        %p530 = scmp.lt.s32.totalorder %s529, 7
        %s531 = scalar_select %p530, %s529, 7
        %s532 = smul.addr %s531, 8
        %s533 = scalar_lea.vmem %s5, %s532
        %s534 = smul.u32 4, %s30
        %s535 = smul.u32 4, %s30
        %p536 = scmp.lt.s32.totalorder %s535, 7
        %s537 = scalar_select %p536, %s535, 7
        %s538 = scalar_lea.vmem %s6, %s537
        %s539 = smul.u32 4, %s30
        %s540 = smul.u32 4, %s30
        %p541 = scmp.lt.s32.totalorder %s540, 7
        %s542 = scalar_select %p541, %s540, 7
        %s543 = scalar_lea.vmem %s7, %s542
        %s544 = smul.u32 4, %s30
        %v545 = vld [vmem:[%s8] sm:$0xff]
        %v546 = vld [vmem:[%s8 + $0x8] sm:$0xff]
        %v547 = vld [vmem:[%s8 + $0x10] sm:$0xff]
        %v548 = vld [vmem:[%s8 + $0x18] sm:$0xff]
        %v549 = vld [vmem:[%s9] sm:$0xff]
        %v550 = vld [vmem:[%s9 + $0x8] sm:$0xff]
        %v551 = vld [vmem:[%s9 + $0x10] sm:$0xff]
        %v552 = vld [vmem:[%s9 + $0x18] sm:$0xff]
        %v553 = vld [vmem:[%s513] sm:$0xff]
        %v554 = vld [vmem:[%s513 + $0x8] sm:$0xff]
        %v555 = vld [vmem:[%s513 + $0x10] sm:$0xff]
        %v556 = vld [vmem:[%s513 + $0x18] sm:$0xff]
        %vm557 = vcmask 261120
        %v559 = vsel %vm557, %v553, 0
        %v562 = vsel %vm557, %v554, 0
        %v565 = vsel %vm557, %v555, 0
        %v568 = vsel %vm557, %v556, 0
        %570 = vmatprep.subr.mxu0 0.0
        %571 = vmatpush1.msra.mxu0 %v545
        %572 = vmatprep.subr.mxu0 0.0
        %573 = vmatpush1.msra.mxu0 %v546
        %574 = vmatprep.subr.mxu0 0.0
        %575 = vmatpush1.msra.mxu0 %v547
        %576 = vmatprep.subr.mxu0 0.0
        %577 = vmatpush1.msra.mxu0 %v548
        %578 = vmatprep.subr.mxu0 0.0
        %579 = vmatpush1.msra.mxu0 0.0
        %580 = vmatprep.subr.mxu0 0.0
        %581 = vmatpush1.msra.mxu0 0.0
        %582 = vmatprep.subr.mxu0 0.0
        %583 = vmatpush1.msra.mxu0 0.0
        %584 = vmatprep.subr.mxu0 0.0
        %585 = vmatpush1.msra.mxu0 0.0
        %586 = vmatprep.subr.mxu0 0.0
        %587 = vmatpush1.msra.mxu0 0.0
        %588 = vmatprep.subr.mxu0 0.0
        %589 = vmatpush1.msra.mxu0 0.0
        %590 = vmatprep.subr.mxu0 0.0
        %591 = vmatpush1.msra.mxu0 0.0
        %592 = vmatprep.subr.mxu0 0.0
        %593 = vmatpush1.msra.mxu0 0.0
        %594 = vmatprep.subr.mxu0 0.0
        %595 = vmatpush1.msra.mxu0 0.0
        %596 = vmatprep.subr.mxu0 0.0
        %597 = vmatpush1.msra.mxu0 0.0
        %598 = vmatprep.subr.mxu0 0.0
        %599 = vmatpush1.msra.mxu0 0.0
        %600 = vmatprep.subr.mxu0 0.0
        %601 = vmatpush1.msra.mxu0 0.0
        %602 = vmatprep.subr.mxu0 0.0
        %603 = vmatpush1.msra.mxu0 0.0
        %604 = vmatprep.subr.mxu0 0.0
        %605 = vmatpush1.msra.mxu0 0.0
        %606 = vmatprep.subr.mxu0 0.0
        %607 = vmatpush1.msra.mxu0 0.0
        %608 = vmatprep.subr.mxu0 0.0
        %609 = vmatpush1.msra.mxu0 0.0
        %610 = vmatprep.subr.mxu0 0.0
        %611 = vmatpush1.msra.mxu0 0.0
        %612 = vmatprep.subr.mxu0 0.0
        %613 = vmatpush1.msra.mxu0 0.0
        %614 = vmatprep.subr.mxu0 0.0
        %615 = vmatpush1.msra.mxu0 0.0
        %616 = vmatprep.subr.mxu0 0.0
        %617 = vmatpush1.msra.mxu0 0.0
        %618 = vmatprep.subr.mxu0 0.0
        %619 = vmatpush1.msra.mxu0 0.0
        %620 = vmatprep.subr.mxu0 0.0
        %621 = vmatpush1.msra.mxu0 0.0
        %622 = vmatprep.subr.mxu0 0.0
        %623 = vmatpush1.msra.mxu0 0.0
        %624 = vmatprep.subr.mxu0 0.0
        %625 = vmatpush1.msra.mxu0 0.0
        %626 = vmatprep.subr.mxu0 0.0
        %627 = vmatpush1.msra.mxu0 0.0
        %628 = vmatprep.subr.mxu0 0.0
        %629 = vmatpush1.msra.mxu0 0.0
        %630 = vmatprep.subr.mxu0 0.0
        %631 = vmatpush1.msra.mxu0 0.0
        %632 = vmatprep.subr.mxu0 0.0
        %633 = vmatpush1.msra.mxu0 0.0
        %634 = vmatprep.mubr.f32.mxu0 0.0
        %635 = vmatmul.mubr.f32.gmra.mrb[0].mxu0 %v559
        %v636 = vpop.f32.mrb[0].mxu0
        %v637 = vadd.f32 0.0, %v636
        %v638 = vpop.f32.mrb[0].mxu0
        %639 = vmatprep.mubr.f32.mxu0 0.0
        %640 = vmatmul.mubr.f32.gmra.mrb[0].mxu0 %v562
        %v641 = vpop.f32.mrb[0].mxu0
        %v642 = vadd.f32 0.0, %v641
        %v643 = vpop.f32.mrb[0].mxu0
        %644 = vmatprep.mubr.f32.mxu0 0.0
        %645 = vmatmul.mubr.f32.gmra.mrb[0].mxu0 %v565
        %v646 = vpop.f32.mrb[0].mxu0
        %v647 = vadd.f32 0.0, %v646
        %v648 = vpop.f32.mrb[0].mxu0
        %649 = vmatprep.mubr.f32.mxu0 0.0
        %650 = vmatmul.mubr.f32.gmra.mrb[0].mxu0 %v568
        %v651 = vpop.f32.mrb[0].mxu0
        %v652 = vadd.f32 0.0, %v651
        %v653 = vpop.f32.mrb[0].mxu0
        %654 = vdwg.mxu0
        %v655 = vld [vmem:[%s519] sm:$0xff]
        %v656 = vld [vmem:[%s519 + $0x8] sm:$0xff]
        %v657 = vld [vmem:[%s519 + $0x10] sm:$0xff]
        %v658 = vld [vmem:[%s519 + $0x18] sm:$0xff]
        %v660 = vsel %vm557, %v655, 0
        %v663 = vsel %vm557, %v656, 0
        %v666 = vsel %vm557, %v657, 0
        %v669 = vsel %vm557, %v658, 0
        %671 = vmatprep.subr.mxu0 0.0
        %672 = vmatpush1.msra.mxu0 %v545
        %673 = vmatprep.subr.mxu0 0.0
        %674 = vmatpush1.msra.mxu0 %v546
        %675 = vmatprep.subr.mxu0 0.0
        %676 = vmatpush1.msra.mxu0 %v547
        %677 = vmatprep.subr.mxu0 0.0
        %678 = vmatpush1.msra.mxu0 %v548
        %679 = vmatprep.subr.mxu0 0.0
        %680 = vmatpush1.msra.mxu0 0.0
        %681 = vmatprep.subr.mxu0 0.0
        %682 = vmatpush1.msra.mxu0 0.0
        %683 = vmatprep.subr.mxu0 0.0
        %684 = vmatpush1.msra.mxu0 0.0
        %685 = vmatprep.subr.mxu0 0.0
        %686 = vmatpush1.msra.mxu0 0.0
        %687 = vmatprep.subr.mxu0 0.0
        %688 = vmatpush1.msra.mxu0 0.0
        %689 = vmatprep.subr.mxu0 0.0
        %690 = vmatpush1.msra.mxu0 0.0
        %691 = vmatprep.subr.mxu0 0.0
        %692 = vmatpush1.msra.mxu0 0.0
        %693 = vmatprep.subr.mxu0 0.0
        %694 = vmatpush1.msra.mxu0 0.0
        %695 = vmatprep.subr.mxu0 0.0
        %696 = vmatpush1.msra.mxu0 0.0
        %697 = vmatprep.subr.mxu0 0.0
        %698 = vmatpush1.msra.mxu0 0.0
        %699 = vmatprep.subr.mxu0 0.0
        %700 = vmatpush1.msra.mxu0 0.0
        %701 = vmatprep.subr.mxu0 0.0
        %702 = vmatpush1.msra.mxu0 0.0
        %703 = vmatprep.subr.mxu0 0.0
        %704 = vmatpush1.msra.mxu0 0.0
        %705 = vmatprep.subr.mxu0 0.0
        %706 = vmatpush1.msra.mxu0 0.0
        %707 = vmatprep.subr.mxu0 0.0
        %708 = vmatpush1.msra.mxu0 0.0
        %709 = vmatprep.subr.mxu0 0.0
        %710 = vmatpush1.msra.mxu0 0.0
        %711 = vmatprep.subr.mxu0 0.0
        %712 = vmatpush1.msra.mxu0 0.0
        %713 = vmatprep.subr.mxu0 0.0
        %714 = vmatpush1.msra.mxu0 0.0
        %715 = vmatprep.subr.mxu0 0.0
        %716 = vmatpush1.msra.mxu0 0.0
        %717 = vmatprep.subr.mxu0 0.0
        %718 = vmatpush1.msra.mxu0 0.0
        %719 = vmatprep.subr.mxu0 0.0
        %720 = vmatpush1.msra.mxu0 0.0
        %721 = vmatprep.subr.mxu0 0.0
        %722 = vmatpush1.msra.mxu0 0.0
        %723 = vmatprep.subr.mxu0 0.0
        %724 = vmatpush1.msra.mxu0 0.0
        %725 = vmatprep.subr.mxu0 0.0
        %726 = vmatpush1.msra.mxu0 0.0
        %727 = vmatprep.subr.mxu0 0.0
        %728 = vmatpush1.msra.mxu0 0.0
        %729 = vmatprep.subr.mxu0 0.0
        %730 = vmatpush1.msra.mxu0 0.0
        %731 = vmatprep.subr.mxu0 0.0
        %732 = vmatpush1.msra.mxu0 0.0
        %733 = vmatprep.subr.mxu0 0.0
        %734 = vmatpush1.msra.mxu0 0.0
        %735 = vmatprep.mubr.f32.mxu0 0.0
        %736 = vmatmul.mubr.f32.gmra.mrb[0].mxu0 %v660
        %v737 = vpop.f32.mrb[0].mxu0
        %v738 = vadd.f32 0.0, %v737
        %v739 = vpop.f32.mrb[0].mxu0
        %740 = vmatprep.mubr.f32.mxu0 0.0
        %741 = vmatmul.mubr.f32.gmra.mrb[0].mxu0 %v663
        %v742 = vpop.f32.mrb[0].mxu0
        %v743 = vadd.f32 0.0, %v742
        %v744 = vpop.f32.mrb[0].mxu0
        %745 = vmatprep.mubr.f32.mxu0 0.0
        %746 = vmatmul.mubr.f32.gmra.mrb[0].mxu0 %v666
        %v747 = vpop.f32.mrb[0].mxu0
        %v748 = vadd.f32 0.0, %v747
        %v749 = vpop.f32.mrb[0].mxu0
        %750 = vmatprep.mubr.f32.mxu0 0.0
        %751 = vmatmul.mubr.f32.gmra.mrb[0].mxu0 %v669
        %v752 = vpop.f32.mrb[0].mxu0
        %v753 = vadd.f32 0.0, %v752
        %v754 = vpop.f32.mrb[0].mxu0
        %755 = vdwg.mxu0
        %v756 = vld [vmem:[%s440] sm:$0x1]
        %v757 = vld [vmem:[%s440 + $0x1] sm:$0x1]
        %v758 = vld [vmem:[%s440 + $0x2] sm:$0x1]
        %v759 = vld [vmem:[%s440 + $0x3] sm:$0x1]
        %v760 = vld [vmem:[%s527] sm:$0xff]
        %v761 = vld [vmem:[%s527 + $0x8] sm:$0xff]
        %v762 = vld [vmem:[%s527 + $0x10] sm:$0xff]
        %v763 = vld [vmem:[%s527 + $0x18] sm:$0xff]
        %v764 = vld [vmem:[%s538] sm:$0x1]
        %v765 = vld [vmem:[%s538 + $0x1] sm:$0x1]
        %v766 = vld [vmem:[%s538 + $0x2] sm:$0x1]
        %v767 = vld [vmem:[%s538 + $0x3] sm:$0x1]
        %769 = vrot.lane.b32.xlu0 %v738, 96
        %v770 = vpop.permute.xlu0 %769
        %v772 = vsel %vm557, %v637, 0
        %v774 = vsel %vm557, %v770, 0
        %776 = vmatprep.subr.mxu0 0.0
        %777 = vmatpush1.xpose.msra.mxu0 %v774
        %778 = vmatprep.subr.mxu0 0.0
        %779 = vmatpush1.xpose.msra.mxu0 0.0
        %780 = vmatprep.subr.mxu0 0.0
        %781 = vmatpush1.xpose.msra.mxu0 0.0
        %782 = vmatprep.subr.mxu0 0.0
        %783 = vmatpush1.xpose.msra.mxu0 0.0
        %784 = vmatprep.subr.mxu0 0.0
        %785 = vmatpush1.xpose.msra.mxu0 0.0
        %786 = vmatprep.subr.mxu0 0.0
        %787 = vmatpush1.xpose.msra.mxu0 0.0
        %788 = vmatprep.subr.mxu0 0.0
        %789 = vmatpush1.xpose.msra.mxu0 0.0
        %790 = vmatprep.subr.mxu0 0.0
        %791 = vmatpush1.xpose.msra.mxu0 0.0
        %792 = vmatprep.subr.mxu0 0.0
        %793 = vmatpush1.xpose.msra.mxu0 0.0
        %794 = vmatprep.subr.mxu0 0.0
        %795 = vmatpush1.xpose.msra.mxu0 0.0
        %796 = vmatprep.subr.mxu0 0.0
        %797 = vmatpush1.xpose.msra.mxu0 0.0
        %798 = vmatprep.subr.mxu0 0.0
        %799 = vmatpush1.xpose.msra.mxu0 0.0
        %800 = vmatprep.subr.mxu0 0.0
        %801 = vmatpush1.xpose.msra.mxu0 0.0
        %802 = vmatprep.subr.mxu0 0.0
        %803 = vmatpush1.xpose.msra.mxu0 0.0
        %804 = vmatprep.subr.mxu0 0.0
        %805 = vmatpush1.xpose.msra.mxu0 0.0
        %806 = vmatprep.subr.mxu0 0.0
        %807 = vmatpush1.xpose.msra.mxu0 0.0
        %808 = vmatprep.subr.mxu0 0.0
        %809 = vmatpush1.xpose.msra.mxu0 0.0
        %810 = vmatprep.subr.mxu0 0.0
        %811 = vmatpush1.xpose.msra.mxu0 0.0
        %812 = vmatprep.subr.mxu0 0.0
        %813 = vmatpush1.xpose.msra.mxu0 0.0
        %814 = vmatprep.subr.mxu0 0.0
        %815 = vmatpush1.xpose.msra.mxu0 0.0
        %816 = vmatprep.subr.mxu0 0.0
        %817 = vmatpush1.xpose.msra.mxu0 0.0
        %818 = vmatprep.subr.mxu0 0.0
        %819 = vmatpush1.xpose.msra.mxu0 0.0
        %820 = vmatprep.subr.mxu0 0.0
        %821 = vmatpush1.xpose.msra.mxu0 0.0
        %822 = vmatprep.subr.mxu0 0.0
        %823 = vmatpush1.xpose.msra.mxu0 0.0
        %824 = vmatprep.subr.mxu0 0.0
        %825 = vmatpush1.xpose.msra.mxu0 0.0
        %826 = vmatprep.subr.mxu0 0.0
        %827 = vmatpush1.xpose.msra.mxu0 0.0
        %828 = vmatprep.subr.mxu0 0.0
        %829 = vmatpush1.xpose.msra.mxu0 0.0
        %830 = vmatprep.subr.mxu0 0.0
        %831 = vmatpush1.xpose.msra.mxu0 0.0
        %832 = vmatprep.subr.mxu0 0.0
        %833 = vmatpush1.xpose.msra.mxu0 0.0
        %834 = vmatprep.subr.mxu0 0.0
        %835 = vmatpush1.xpose.msra.mxu0 0.0
        %836 = vmatprep.subr.mxu0 0.0
        %837 = vmatpush1.xpose.msra.mxu0 0.0
        %838 = vmatprep.subr.mxu0 0.0
        %839 = vmatpush1.xpose.msra.mxu0 0.0
        %840 = vmatprep.mubr.f32.mxu0 0.0
        %841 = vmatmul.mubr.f32.gmra.mrb[0].mxu0 %v772
        %v842 = vpop.f32.mrb[0].mxu0
        %v843 = vadd.f32 0.0, %v842
        %v844 = vpop.f32.mrb[0].mxu0
        %845 = vdwg.mxu0
        %847 = vrot.lane.b32.xlu0 %v743, 96
        %v848 = vpop.permute.xlu0 %847
        %v850 = vsel %vm557, %v642, 0
        %v852 = vsel %vm557, %v848, 0
        %854 = vmatprep.subr.mxu0 0.0
        %855 = vmatpush1.xpose.msra.mxu0 %v852
        %856 = vmatprep.subr.mxu0 0.0
        %857 = vmatpush1.xpose.msra.mxu0 0.0
        %858 = vmatprep.subr.mxu0 0.0
        %859 = vmatpush1.xpose.msra.mxu0 0.0
        %860 = vmatprep.subr.mxu0 0.0
        %861 = vmatpush1.xpose.msra.mxu0 0.0
        %862 = vmatprep.subr.mxu0 0.0
        %863 = vmatpush1.xpose.msra.mxu0 0.0
        %864 = vmatprep.subr.mxu0 0.0
        %865 = vmatpush1.xpose.msra.mxu0 0.0
        %866 = vmatprep.subr.mxu0 0.0
        %867 = vmatpush1.xpose.msra.mxu0 0.0
        %868 = vmatprep.subr.mxu0 0.0
        %869 = vmatpush1.xpose.msra.mxu0 0.0
        %870 = vmatprep.subr.mxu0 0.0
        %871 = vmatpush1.xpose.msra.mxu0 0.0
        %872 = vmatprep.subr.mxu0 0.0
        %873 = vmatpush1.xpose.msra.mxu0 0.0
        %874 = vmatprep.subr.mxu0 0.0
        %875 = vmatpush1.xpose.msra.mxu0 0.0
        %876 = vmatprep.subr.mxu0 0.0
        %877 = vmatpush1.xpose.msra.mxu0 0.0
        %878 = vmatprep.subr.mxu0 0.0
        %879 = vmatpush1.xpose.msra.mxu0 0.0
        %880 = vmatprep.subr.mxu0 0.0
        %881 = vmatpush1.xpose.msra.mxu0 0.0
        %882 = vmatprep.subr.mxu0 0.0
        %883 = vmatpush1.xpose.msra.mxu0 0.0
        %884 = vmatprep.subr.mxu0 0.0
        %885 = vmatpush1.xpose.msra.mxu0 0.0
        %886 = vmatprep.subr.mxu0 0.0
        %887 = vmatpush1.xpose.msra.mxu0 0.0
        %888 = vmatprep.subr.mxu0 0.0
        %889 = vmatpush1.xpose.msra.mxu0 0.0
        %890 = vmatprep.subr.mxu0 0.0
        %891 = vmatpush1.xpose.msra.mxu0 0.0
        %892 = vmatprep.subr.mxu0 0.0
        %893 = vmatpush1.xpose.msra.mxu0 0.0
        %894 = vmatprep.subr.mxu0 0.0
        %895 = vmatpush1.xpose.msra.mxu0 0.0
        %896 = vmatprep.subr.mxu0 0.0
        %897 = vmatpush1.xpose.msra.mxu0 0.0
        %898 = vmatprep.subr.mxu0 0.0
        %899 = vmatpush1.xpose.msra.mxu0 0.0
        %900 = vmatprep.subr.mxu0 0.0
        %901 = vmatpush1.xpose.msra.mxu0 0.0
        %902 = vmatprep.subr.mxu0 0.0
        %903 = vmatpush1.xpose.msra.mxu0 0.0
        %904 = vmatprep.subr.mxu0 0.0
        %905 = vmatpush1.xpose.msra.mxu0 0.0
        %906 = vmatprep.subr.mxu0 0.0
        %907 = vmatpush1.xpose.msra.mxu0 0.0
        %908 = vmatprep.subr.mxu0 0.0
        %909 = vmatpush1.xpose.msra.mxu0 0.0
        %910 = vmatprep.subr.mxu0 0.0
        %911 = vmatpush1.xpose.msra.mxu0 0.0
        %912 = vmatprep.subr.mxu0 0.0
        %913 = vmatpush1.xpose.msra.mxu0 0.0
        %914 = vmatprep.subr.mxu0 0.0
        %915 = vmatpush1.xpose.msra.mxu0 0.0
        %916 = vmatprep.subr.mxu0 0.0
        %917 = vmatpush1.xpose.msra.mxu0 0.0
        %918 = vmatprep.mubr.f32.mxu0 0.0
        %919 = vmatmul.mubr.f32.gmra.mrb[0].mxu0 %v850
        %v920 = vpop.f32.mrb[0].mxu0
        %v921 = vadd.f32 0.0, %v920
        %v922 = vpop.f32.mrb[0].mxu0
        %923 = vdwg.mxu0
        %925 = vrot.lane.b32.xlu0 %v748, 96
        %v926 = vpop.permute.xlu0 %925
        %v928 = vsel %vm557, %v647, 0
        %v930 = vsel %vm557, %v926, 0
        %932 = vmatprep.subr.mxu0 0.0
        %933 = vmatpush1.xpose.msra.mxu0 %v930
        %934 = vmatprep.subr.mxu0 0.0
        %935 = vmatpush1.xpose.msra.mxu0 0.0
        %936 = vmatprep.subr.mxu0 0.0
        %937 = vmatpush1.xpose.msra.mxu0 0.0
        %938 = vmatprep.subr.mxu0 0.0
        %939 = vmatpush1.xpose.msra.mxu0 0.0
        %940 = vmatprep.subr.mxu0 0.0
        %941 = vmatpush1.xpose.msra.mxu0 0.0
        %942 = vmatprep.subr.mxu0 0.0
        %943 = vmatpush1.xpose.msra.mxu0 0.0
        %944 = vmatprep.subr.mxu0 0.0
        %945 = vmatpush1.xpose.msra.mxu0 0.0
        %946 = vmatprep.subr.mxu0 0.0
        %947 = vmatpush1.xpose.msra.mxu0 0.0
        %948 = vmatprep.subr.mxu0 0.0
        %949 = vmatpush1.xpose.msra.mxu0 0.0
        %950 = vmatprep.subr.mxu0 0.0
        %951 = vmatpush1.xpose.msra.mxu0 0.0
        %952 = vmatprep.subr.mxu0 0.0
        %953 = vmatpush1.xpose.msra.mxu0 0.0
        %954 = vmatprep.subr.mxu0 0.0
        %955 = vmatpush1.xpose.msra.mxu0 0.0
        %956 = vmatprep.subr.mxu0 0.0
        %957 = vmatpush1.xpose.msra.mxu0 0.0
        %958 = vmatprep.subr.mxu0 0.0
        %959 = vmatpush1.xpose.msra.mxu0 0.0
        %960 = vmatprep.subr.mxu0 0.0
        %961 = vmatpush1.xpose.msra.mxu0 0.0
        %962 = vmatprep.subr.mxu0 0.0
        %963 = vmatpush1.xpose.msra.mxu0 0.0
        %964 = vmatprep.subr.mxu0 0.0
        %965 = vmatpush1.xpose.msra.mxu0 0.0
        %966 = vmatprep.subr.mxu0 0.0
        %967 = vmatpush1.xpose.msra.mxu0 0.0
        %968 = vmatprep.subr.mxu0 0.0
        %969 = vmatpush1.xpose.msra.mxu0 0.0
        %970 = vmatprep.subr.mxu0 0.0
        %971 = vmatpush1.xpose.msra.mxu0 0.0
        %972 = vmatprep.subr.mxu0 0.0
        %973 = vmatpush1.xpose.msra.mxu0 0.0
        %974 = vmatprep.subr.mxu0 0.0
        %975 = vmatpush1.xpose.msra.mxu0 0.0
        %976 = vmatprep.subr.mxu0 0.0
        %977 = vmatpush1.xpose.msra.mxu0 0.0
        %978 = vmatprep.subr.mxu0 0.0
        %979 = vmatpush1.xpose.msra.mxu0 0.0
        %980 = vmatprep.subr.mxu0 0.0
        %981 = vmatpush1.xpose.msra.mxu0 0.0
        %982 = vmatprep.subr.mxu0 0.0
        %983 = vmatpush1.xpose.msra.mxu0 0.0
        %984 = vmatprep.subr.mxu0 0.0
        %985 = vmatpush1.xpose.msra.mxu0 0.0
        %986 = vmatprep.subr.mxu0 0.0
        %987 = vmatpush1.xpose.msra.mxu0 0.0
        %988 = vmatprep.subr.mxu0 0.0
        %989 = vmatpush1.xpose.msra.mxu0 0.0
        %990 = vmatprep.subr.mxu0 0.0
        %991 = vmatpush1.xpose.msra.mxu0 0.0
        %992 = vmatprep.subr.mxu0 0.0
        %993 = vmatpush1.xpose.msra.mxu0 0.0
        %994 = vmatprep.subr.mxu0 0.0
        %995 = vmatpush1.xpose.msra.mxu0 0.0
        %996 = vmatprep.mubr.f32.mxu0 0.0
        %997 = vmatmul.mubr.f32.gmra.mrb[0].mxu0 %v928
        %v998 = vpop.f32.mrb[0].mxu0
        %v999 = vadd.f32 0.0, %v998
        %v1000 = vpop.f32.mrb[0].mxu0
        %1001 = vdwg.mxu0
        %1003 = vrot.lane.b32.xlu0 %v753, 96
        %v1004 = vpop.permute.xlu0 %1003
        %v1006 = vsel %vm557, %v652, 0
        %v1008 = vsel %vm557, %v1004, 0
        %1010 = vmatprep.subr.mxu0 0.0
        %1011 = vmatpush1.xpose.msra.mxu0 %v1008
        %1012 = vmatprep.subr.mxu0 0.0
        %1013 = vmatpush1.xpose.msra.mxu0 0.0
        %1014 = vmatprep.subr.mxu0 0.0
        %1015 = vmatpush1.xpose.msra.mxu0 0.0
        %1016 = vmatprep.subr.mxu0 0.0
        %1017 = vmatpush1.xpose.msra.mxu0 0.0
        %1018 = vmatprep.subr.mxu0 0.0
        %1019 = vmatpush1.xpose.msra.mxu0 0.0
        %1020 = vmatprep.subr.mxu0 0.0
        %1021 = vmatpush1.xpose.msra.mxu0 0.0
        %1022 = vmatprep.subr.mxu0 0.0
        %1023 = vmatpush1.xpose.msra.mxu0 0.0
        %1024 = vmatprep.subr.mxu0 0.0
        %1025 = vmatpush1.xpose.msra.mxu0 0.0
        %1026 = vmatprep.subr.mxu0 0.0
        %1027 = vmatpush1.xpose.msra.mxu0 0.0
        %1028 = vmatprep.subr.mxu0 0.0
        %1029 = vmatpush1.xpose.msra.mxu0 0.0
        %1030 = vmatprep.subr.mxu0 0.0
        %1031 = vmatpush1.xpose.msra.mxu0 0.0
        %1032 = vmatprep.subr.mxu0 0.0
        %1033 = vmatpush1.xpose.msra.mxu0 0.0
        %1034 = vmatprep.subr.mxu0 0.0
        %1035 = vmatpush1.xpose.msra.mxu0 0.0
        %1036 = vmatprep.subr.mxu0 0.0
        %1037 = vmatpush1.xpose.msra.mxu0 0.0
        %1038 = vmatprep.subr.mxu0 0.0
        %1039 = vmatpush1.xpose.msra.mxu0 0.0
        %1040 = vmatprep.subr.mxu0 0.0
        %1041 = vmatpush1.xpose.msra.mxu0 0.0
        %1042 = vmatprep.subr.mxu0 0.0
        %1043 = vmatpush1.xpose.msra.mxu0 0.0
        %1044 = vmatprep.subr.mxu0 0.0
        %1045 = vmatpush1.xpose.msra.mxu0 0.0
        %1046 = vmatprep.subr.mxu0 0.0
        %1047 = vmatpush1.xpose.msra.mxu0 0.0
        %1048 = vmatprep.subr.mxu0 0.0
        %1049 = vmatpush1.xpose.msra.mxu0 0.0
        %1050 = vmatprep.subr.mxu0 0.0
        %1051 = vmatpush1.xpose.msra.mxu0 0.0
        %1052 = vmatprep.subr.mxu0 0.0
        %1053 = vmatpush1.xpose.msra.mxu0 0.0
        %1054 = vmatprep.subr.mxu0 0.0
        %1055 = vmatpush1.xpose.msra.mxu0 0.0
        %1056 = vmatprep.subr.mxu0 0.0
        %1057 = vmatpush1.xpose.msra.mxu0 0.0
        %1058 = vmatprep.subr.mxu0 0.0
        %1059 = vmatpush1.xpose.msra.mxu0 0.0
        %1060 = vmatprep.subr.mxu0 0.0
        %1061 = vmatpush1.xpose.msra.mxu0 0.0
        %1062 = vmatprep.subr.mxu0 0.0
        %1063 = vmatpush1.xpose.msra.mxu0 0.0
        %1064 = vmatprep.subr.mxu0 0.0
        %1065 = vmatpush1.xpose.msra.mxu0 0.0
        %1066 = vmatprep.subr.mxu0 0.0
        %1067 = vmatpush1.xpose.msra.mxu0 0.0
        %1068 = vmatprep.subr.mxu0 0.0
        %1069 = vmatpush1.xpose.msra.mxu0 0.0
        %1070 = vmatprep.subr.mxu0 0.0
        %1071 = vmatpush1.xpose.msra.mxu0 0.0
        %1072 = vmatprep.subr.mxu0 0.0
        %1073 = vmatpush1.xpose.msra.mxu0 0.0
        %1074 = vmatprep.mubr.f32.mxu0 0.0
        %1075 = vmatmul.mubr.f32.gmra.mrb[0].mxu0 %v1006
        %v1076 = vpop.f32.mrb[0].mxu0
        %v1077 = vadd.f32 0.0, %v1076
        %v1078 = vpop.f32.mrb[0].mxu0
        %1079 = vdwg.mxu0
        %v1080 = vmul.f32 %v843, 0.17677669
        %v1081 = vmul.f32 %v921, 0.17677669
        %v1082 = vmul.f32 %v999, 0.17677669
        %v1083 = vmul.f32 %v1077, 0.17677669
        %v1088 = vlaneseq
        %v1089 = vshrl.u32 %v1088, 7
        %v1090 = vsub.s32 0, %v1089
        %v1091 = vrot.slane %v756, %v1090
        %v1092 = vlaneseq
        %v1093 = vshrl.u32 %v1092, 7
        %v1094 = vsub.s32 0, %v1093
        %v1095 = vrot.slane %v757, %v1094
        %v1096 = vlaneseq
        %v1097 = vshrl.u32 %v1096, 7
        %v1098 = vsub.s32 0, %v1097
        %v1099 = vrot.slane %v758, %v1098
        %v1100 = vlaneseq
        %v1101 = vshrl.u32 %v1100, 7
        %v1102 = vsub.s32 0, %v1101
        %v1103 = vrot.slane %v759, %v1102
        %v1108 = vadd.f32 %v1080, %v1091
        %v1109 = vadd.f32 %v1081, %v1095
        %v1110 = vadd.f32 %v1082, %v1099
        %v1111 = vadd.f32 %v1083, %v1103
        %vm1112 = vcmask 64512
        %v1113 = vsel %vm1112, %v1108, -inf
        %1114 = vmax.xlane.f32.xlu0 %v1113
        %v1115 = vpop.xlane.xlu0 %1114
        %v1116 = vsel %vm1112, %v1109, -inf
        %1117 = vmax.xlane.f32.xlu0 %v1116
        %v1118 = vpop.xlane.xlu0 %1117
        %v1119 = vsel %vm1112, %v1110, -inf
        %1120 = vmax.xlane.f32.xlu0 %v1119
        %v1121 = vpop.xlane.xlu0 %1120
        %v1122 = vsel %vm1112, %v1111, -inf
        %1123 = vmax.xlane.f32.xlu0 %v1122
        %v1124 = vpop.xlane.xlu0 %1123
        %v1125 = vsub.f32 %v1108, %v1115
        %v1126 = vsub.f32 %v1109, %v1118
        %v1127 = vsub.f32 %v1110, %v1121
        %v1128 = vsub.f32 %v1111, %v1124
        %v1129 = vmul.f32 %v1125, 1.442695
        %v1130 = vpow.pop %v1129
        %v1131 = vmul.f32 %v1126, 1.442695
        %v1132 = vpow.pop %v1131
        %v1133 = vmul.f32 %v1127, 1.442695
        %v1134 = vpow.pop %v1133
        %v1135 = vmul.f32 %v1128, 1.442695
        %v1136 = vpow.pop %v1135
        %v1137 = vsel %vm1112, %v1130, 0.0
        %1138 = vadd.xlane.f32.xlu0 %v1137
        %v1139 = vpop.xlane.xlu0 %1138
        %v1140 = vsel %vm1112, %v1132, 0.0
        %1141 = vadd.xlane.f32.xlu0 %v1140
        %v1142 = vpop.xlane.xlu0 %1141
        %v1143 = vsel %vm1112, %v1134, 0.0
        %1144 = vadd.xlane.f32.xlu0 %v1143
        %v1145 = vpop.xlane.xlu0 %1144
        %v1146 = vsel %vm1112, %v1136, 0.0
        %1147 = vadd.xlane.f32.xlu0 %v1146
        %v1148 = vpop.xlane.xlu0 %1147
        %1149 = vrot.lane.b32.xlu0 %v738, 64
        %v1150 = vpop.permute.xlu0 %1149
        %v1153 = vsel %vm1112, %v1130, 0
        %1155 = vmatprep.subr.mxu0 0.0
        %1156 = vmatpush1.msra.mxu0 %v1150
        %1157 = vmatprep.subr.mxu0 0.0
        %1158 = vmatpush1.msra.mxu0 0.0
        %1159 = vmatprep.subr.mxu0 0.0
        %1160 = vmatpush1.msra.mxu0 0.0
        %1161 = vmatprep.subr.mxu0 0.0
        %1162 = vmatpush1.msra.mxu0 0.0
        %1163 = vmatprep.subr.mxu0 0.0
        %1164 = vmatpush1.msra.mxu0 0.0
        %1165 = vmatprep.subr.mxu0 0.0
        %1166 = vmatpush1.msra.mxu0 0.0
        %1167 = vmatprep.subr.mxu0 0.0
        %1168 = vmatpush1.msra.mxu0 0.0
        %1169 = vmatprep.subr.mxu0 0.0
        %1170 = vmatpush1.msra.mxu0 0.0
        %1171 = vmatprep.subr.mxu0 0.0
        %1172 = vmatpush1.msra.mxu0 0.0
        %1173 = vmatprep.subr.mxu0 0.0
        %1174 = vmatpush1.msra.mxu0 0.0
        %1175 = vmatprep.subr.mxu0 0.0
        %1176 = vmatpush1.msra.mxu0 0.0
        %1177 = vmatprep.subr.mxu0 0.0
        %1178 = vmatpush1.msra.mxu0 0.0
        %1179 = vmatprep.subr.mxu0 0.0
        %1180 = vmatpush1.msra.mxu0 0.0
        %1181 = vmatprep.subr.mxu0 0.0
        %1182 = vmatpush1.msra.mxu0 0.0
        %1183 = vmatprep.subr.mxu0 0.0
        %1184 = vmatpush1.msra.mxu0 0.0
        %1185 = vmatprep.subr.mxu0 0.0
        %1186 = vmatpush1.msra.mxu0 0.0
        %1187 = vmatprep.subr.mxu0 0.0
        %1188 = vmatpush1.msra.mxu0 0.0
        %1189 = vmatprep.subr.mxu0 0.0
        %1190 = vmatpush1.msra.mxu0 0.0
        %1191 = vmatprep.subr.mxu0 0.0
        %1192 = vmatpush1.msra.mxu0 0.0
        %1193 = vmatprep.subr.mxu0 0.0
        %1194 = vmatpush1.msra.mxu0 0.0
        %1195 = vmatprep.subr.mxu0 0.0
        %1196 = vmatpush1.msra.mxu0 0.0
        %1197 = vmatprep.subr.mxu0 0.0
        %1198 = vmatpush1.msra.mxu0 0.0
        %1199 = vmatprep.subr.mxu0 0.0
        %1200 = vmatpush1.msra.mxu0 0.0
        %1201 = vmatprep.subr.mxu0 0.0
        %1202 = vmatpush1.msra.mxu0 0.0
        %1203 = vmatprep.subr.mxu0 0.0
        %1204 = vmatpush1.msra.mxu0 0.0
        %1205 = vmatprep.subr.mxu0 0.0
        %1206 = vmatpush1.msra.mxu0 0.0
        %1207 = vmatprep.subr.mxu0 0.0
        %1208 = vmatpush1.msra.mxu0 0.0
        %1209 = vmatprep.subr.mxu0 0.0
        %1210 = vmatpush1.msra.mxu0 0.0
        %1211 = vmatprep.subr.mxu0 0.0
        %1212 = vmatpush1.msra.mxu0 0.0
        %1213 = vmatprep.subr.mxu0 0.0
        %1214 = vmatpush1.msra.mxu0 0.0
        %1215 = vmatprep.subr.mxu0 0.0
        %1216 = vmatpush1.msra.mxu0 0.0
        %1217 = vmatprep.subr.mxu0 0.0
        %1218 = vmatpush1.msra.mxu0 0.0
        %1219 = vmatprep.mubr.f32.mxu0 0.0
        %1220 = vmatmul.mubr.f32.gmra.mrb[0].mxu0 %v1153
        %v1221 = vpop.f32.mrb[0].mxu0
        %v1222 = vadd.f32 0.0, %v1221
        %v1223 = vpop.f32.mrb[0].mxu0
        %1224 = vdwg.mxu0
        %1225 = vrot.lane.b32.xlu0 %v743, 64
        %v1226 = vpop.permute.xlu0 %1225
        %v1229 = vsel %vm1112, %v1132, 0
        %1231 = vmatprep.subr.mxu0 0.0
        %1232 = vmatpush1.msra.mxu0 %v1226
        %1233 = vmatprep.subr.mxu0 0.0
        %1234 = vmatpush1.msra.mxu0 0.0
        %1235 = vmatprep.subr.mxu0 0.0
        %1236 = vmatpush1.msra.mxu0 0.0
        %1237 = vmatprep.subr.mxu0 0.0
        %1238 = vmatpush1.msra.mxu0 0.0
        %1239 = vmatprep.subr.mxu0 0.0
        %1240 = vmatpush1.msra.mxu0 0.0
        %1241 = vmatprep.subr.mxu0 0.0
        %1242 = vmatpush1.msra.mxu0 0.0
        %1243 = vmatprep.subr.mxu0 0.0
        %1244 = vmatpush1.msra.mxu0 0.0
        %1245 = vmatprep.subr.mxu0 0.0
        %1246 = vmatpush1.msra.mxu0 0.0
        %1247 = vmatprep.subr.mxu0 0.0
        %1248 = vmatpush1.msra.mxu0 0.0
        %1249 = vmatprep.subr.mxu0 0.0
        %1250 = vmatpush1.msra.mxu0 0.0
        %1251 = vmatprep.subr.mxu0 0.0
        %1252 = vmatpush1.msra.mxu0 0.0
        %1253 = vmatprep.subr.mxu0 0.0
        %1254 = vmatpush1.msra.mxu0 0.0
        %1255 = vmatprep.subr.mxu0 0.0
        %1256 = vmatpush1.msra.mxu0 0.0
        %1257 = vmatprep.subr.mxu0 0.0
        %1258 = vmatpush1.msra.mxu0 0.0
        %1259 = vmatprep.subr.mxu0 0.0
        %1260 = vmatpush1.msra.mxu0 0.0
        %1261 = vmatprep.subr.mxu0 0.0
        %1262 = vmatpush1.msra.mxu0 0.0
        %1263 = vmatprep.subr.mxu0 0.0
        %1264 = vmatpush1.msra.mxu0 0.0
        %1265 = vmatprep.subr.mxu0 0.0
        %1266 = vmatpush1.msra.mxu0 0.0
        %1267 = vmatprep.subr.mxu0 0.0
        %1268 = vmatpush1.msra.mxu0 0.0
        %1269 = vmatprep.subr.mxu0 0.0
        %1270 = vmatpush1.msra.mxu0 0.0
        %1271 = vmatprep.subr.mxu0 0.0
        %1272 = vmatpush1.msra.mxu0 0.0
        %1273 = vmatprep.subr.mxu0 0.0
        %1274 = vmatpush1.msra.mxu0 0.0
        %1275 = vmatprep.subr.mxu0 0.0
        %1276 = vmatpush1.msra.mxu0 0.0
        %1277 = vmatprep.subr.mxu0 0.0
        %1278 = vmatpush1.msra.mxu0 0.0
        %1279 = vmatprep.subr.mxu0 0.0
        %1280 = vmatpush1.msra.mxu0 0.0
        %1281 = vmatprep.subr.mxu0 0.0
        %1282 = vmatpush1.msra.mxu0 0.0
        %1283 = vmatprep.subr.mxu0 0.0
        %1284 = vmatpush1.msra.mxu0 0.0
        %1285 = vmatprep.subr.mxu0 0.0
        %1286 = vmatpush1.msra.mxu0 0.0
        %1287 = vmatprep.subr.mxu0 0.0
        %1288 = vmatpush1.msra.mxu0 0.0
        %1289 = vmatprep.subr.mxu0 0.0
        %1290 = vmatpush1.msra.mxu0 0.0
        %1291 = vmatprep.subr.mxu0 0.0
        %1292 = vmatpush1.msra.mxu0 0.0
        %1293 = vmatprep.subr.mxu0 0.0
        %1294 = vmatpush1.msra.mxu0 0.0
        %1295 = vmatprep.mubr.f32.mxu0 0.0
        %1296 = vmatmul.mubr.f32.gmra.mrb[0].mxu0 %v1229
        %v1297 = vpop.f32.mrb[0].mxu0
        %v1298 = vadd.f32 0.0, %v1297
        %v1299 = vpop.f32.mrb[0].mxu0
        %1300 = vdwg.mxu0
        %1301 = vrot.lane.b32.xlu0 %v748, 64
        %v1302 = vpop.permute.xlu0 %1301
        %v1305 = vsel %vm1112, %v1134, 0
        %1307 = vmatprep.subr.mxu0 0.0
        %1308 = vmatpush1.msra.mxu0 %v1302
        %1309 = vmatprep.subr.mxu0 0.0
        %1310 = vmatpush1.msra.mxu0 0.0
        %1311 = vmatprep.subr.mxu0 0.0
        %1312 = vmatpush1.msra.mxu0 0.0
        %1313 = vmatprep.subr.mxu0 0.0
        %1314 = vmatpush1.msra.mxu0 0.0
        %1315 = vmatprep.subr.mxu0 0.0
        %1316 = vmatpush1.msra.mxu0 0.0
        %1317 = vmatprep.subr.mxu0 0.0
        %1318 = vmatpush1.msra.mxu0 0.0
        %1319 = vmatprep.subr.mxu0 0.0
        %1320 = vmatpush1.msra.mxu0 0.0
        %1321 = vmatprep.subr.mxu0 0.0
        %1322 = vmatpush1.msra.mxu0 0.0
        %1323 = vmatprep.subr.mxu0 0.0
        %1324 = vmatpush1.msra.mxu0 0.0
        %1325 = vmatprep.subr.mxu0 0.0
        %1326 = vmatpush1.msra.mxu0 0.0
        %1327 = vmatprep.subr.mxu0 0.0
        %1328 = vmatpush1.msra.mxu0 0.0
        %1329 = vmatprep.subr.mxu0 0.0
        %1330 = vmatpush1.msra.mxu0 0.0
        %1331 = vmatprep.subr.mxu0 0.0
        %1332 = vmatpush1.msra.mxu0 0.0
        %1333 = vmatprep.subr.mxu0 0.0
        %1334 = vmatpush1.msra.mxu0 0.0
        %1335 = vmatprep.subr.mxu0 0.0
        %1336 = vmatpush1.msra.mxu0 0.0
        %1337 = vmatprep.subr.mxu0 0.0
        %1338 = vmatpush1.msra.mxu0 0.0
        %1339 = vmatprep.subr.mxu0 0.0
        %1340 = vmatpush1.msra.mxu0 0.0
        %1341 = vmatprep.subr.mxu0 0.0
        %1342 = vmatpush1.msra.mxu0 0.0
        %1343 = vmatprep.subr.mxu0 0.0
        %1344 = vmatpush1.msra.mxu0 0.0
        %1345 = vmatprep.subr.mxu0 0.0
        %1346 = vmatpush1.msra.mxu0 0.0
        %1347 = vmatprep.subr.mxu0 0.0
        %1348 = vmatpush1.msra.mxu0 0.0
        %1349 = vmatprep.subr.mxu0 0.0
        %1350 = vmatpush1.msra.mxu0 0.0
        %1351 = vmatprep.subr.mxu0 0.0
        %1352 = vmatpush1.msra.mxu0 0.0
        %1353 = vmatprep.subr.mxu0 0.0
        %1354 = vmatpush1.msra.mxu0 0.0
        %1355 = vmatprep.subr.mxu0 0.0
        %1356 = vmatpush1.msra.mxu0 0.0
        %1357 = vmatprep.subr.mxu0 0.0
        %1358 = vmatpush1.msra.mxu0 0.0
        %1359 = vmatprep.subr.mxu0 0.0
        %1360 = vmatpush1.msra.mxu0 0.0
        %1361 = vmatprep.subr.mxu0 0.0
        %1362 = vmatpush1.msra.mxu0 0.0
        %1363 = vmatprep.subr.mxu0 0.0
        %1364 = vmatpush1.msra.mxu0 0.0
        %1365 = vmatprep.subr.mxu0 0.0
        %1366 = vmatpush1.msra.mxu0 0.0
        %1367 = vmatprep.subr.mxu0 0.0
        %1368 = vmatpush1.msra.mxu0 0.0
        %1369 = vmatprep.subr.mxu0 0.0
        %1370 = vmatpush1.msra.mxu0 0.0
        %1371 = vmatprep.mubr.f32.mxu0 0.0
        %1372 = vmatmul.mubr.f32.gmra.mrb[0].mxu0 %v1305
        %v1373 = vpop.f32.mrb[0].mxu0
        %v1374 = vadd.f32 0.0, %v1373
        %v1375 = vpop.f32.mrb[0].mxu0
        %1376 = vdwg.mxu0
        %1377 = vrot.lane.b32.xlu0 %v753, 64
        %v1378 = vpop.permute.xlu0 %1377
        %v1381 = vsel %vm1112, %v1136, 0
        %1383 = vmatprep.subr.mxu0 0.0
        %1384 = vmatpush1.msra.mxu0 %v1378
        %1385 = vmatprep.subr.mxu0 0.0
        %1386 = vmatpush1.msra.mxu0 0.0
        %1387 = vmatprep.subr.mxu0 0.0
        %1388 = vmatpush1.msra.mxu0 0.0
        %1389 = vmatprep.subr.mxu0 0.0
        %1390 = vmatpush1.msra.mxu0 0.0
        %1391 = vmatprep.subr.mxu0 0.0
        %1392 = vmatpush1.msra.mxu0 0.0
        %1393 = vmatprep.subr.mxu0 0.0
        %1394 = vmatpush1.msra.mxu0 0.0
        %1395 = vmatprep.subr.mxu0 0.0
        %1396 = vmatpush1.msra.mxu0 0.0
        %1397 = vmatprep.subr.mxu0 0.0
        %1398 = vmatpush1.msra.mxu0 0.0
        %1399 = vmatprep.subr.mxu0 0.0
        %1400 = vmatpush1.msra.mxu0 0.0
        %1401 = vmatprep.subr.mxu0 0.0
        %1402 = vmatpush1.msra.mxu0 0.0
        %1403 = vmatprep.subr.mxu0 0.0
        %1404 = vmatpush1.msra.mxu0 0.0
        %1405 = vmatprep.subr.mxu0 0.0
        %1406 = vmatpush1.msra.mxu0 0.0
        %1407 = vmatprep.subr.mxu0 0.0
        %1408 = vmatpush1.msra.mxu0 0.0
        %1409 = vmatprep.subr.mxu0 0.0
        %1410 = vmatpush1.msra.mxu0 0.0
        %1411 = vmatprep.subr.mxu0 0.0
        %1412 = vmatpush1.msra.mxu0 0.0
        %1413 = vmatprep.subr.mxu0 0.0
        %1414 = vmatpush1.msra.mxu0 0.0
        %1415 = vmatprep.subr.mxu0 0.0
        %1416 = vmatpush1.msra.mxu0 0.0
        %1417 = vmatprep.subr.mxu0 0.0
        %1418 = vmatpush1.msra.mxu0 0.0
        %1419 = vmatprep.subr.mxu0 0.0
        %1420 = vmatpush1.msra.mxu0 0.0
        %1421 = vmatprep.subr.mxu0 0.0
        %1422 = vmatpush1.msra.mxu0 0.0
        %1423 = vmatprep.subr.mxu0 0.0
        %1424 = vmatpush1.msra.mxu0 0.0
        %1425 = vmatprep.subr.mxu0 0.0
        %1426 = vmatpush1.msra.mxu0 0.0
        %1427 = vmatprep.subr.mxu0 0.0
        %1428 = vmatpush1.msra.mxu0 0.0
        %1429 = vmatprep.subr.mxu0 0.0
        %1430 = vmatpush1.msra.mxu0 0.0
        %1431 = vmatprep.subr.mxu0 0.0
        %1432 = vmatpush1.msra.mxu0 0.0
        %1433 = vmatprep.subr.mxu0 0.0
        %1434 = vmatpush1.msra.mxu0 0.0
        %1435 = vmatprep.subr.mxu0 0.0
        %1436 = vmatpush1.msra.mxu0 0.0
        %1437 = vmatprep.subr.mxu0 0.0
        %1438 = vmatpush1.msra.mxu0 0.0
        %1439 = vmatprep.subr.mxu0 0.0
        %1440 = vmatpush1.msra.mxu0 0.0
        %1441 = vmatprep.subr.mxu0 0.0
        %1442 = vmatpush1.msra.mxu0 0.0
        %1443 = vmatprep.subr.mxu0 0.0
        %1444 = vmatpush1.msra.mxu0 0.0
        %1445 = vmatprep.subr.mxu0 0.0
        %1446 = vmatpush1.msra.mxu0 0.0
        %1447 = vmatprep.mubr.f32.mxu0 0.0
        %1448 = vmatmul.mubr.f32.gmra.mrb[0].mxu0 %v1381
        %v1449 = vpop.f32.mrb[0].mxu0
        %v1450 = vadd.f32 0.0, %v1449
        %v1451 = vpop.f32.mrb[0].mxu0
        %1452 = vdwg.mxu0
        %v1453 = vrcp.pop %v1139
        %v1454 = vrcp.pop %v1142
        %v1455 = vrcp.pop %v1145
        %v1456 = vrcp.pop %v1148
        %v1457 = vmul.f32 %v760, %v1453
        %v1458 = vmul.f32 %v761, %v1454
        %v1459 = vmul.f32 %v762, %v1455
        %v1460 = vmul.f32 %v763, %v1456
        %1462 = vset.pattern.permute.xlu0 0
        %1463 = vperm.xlu0 %1462, %v1457
        %v1464 = vpop.permute.xlu0 %1463
        %1467 = vset.pattern.permute.xlu0 0
        %1468 = vperm.xlu0 %1467, %v1458
        %v1469 = vpop.permute.xlu0 %1468
        %1472 = vset.pattern.permute.xlu0 0
        %1473 = vperm.xlu0 %1472, %v1459
        %v1474 = vpop.permute.xlu0 %1473
        %1477 = vset.pattern.permute.xlu0 0
        %1478 = vperm.xlu0 %1477, %v1460
        %v1479 = vpop.permute.xlu0 %1478
        %v1481 = vmul.f32 %v1222, %v1464
        %v1482 = vmul.f32 %v1298, %v1469
        %v1483 = vmul.f32 %v1374, %v1474
        %v1484 = vmul.f32 %v1450, %v1479
        %v1485 = vsel %vm557, %v1481, 0.0
        %v1486 = vrot.slane %v1485, 4
        %v1487 = vadd.f32 %v1485, %v1486
        %v1488 = vrot.slane %v1487, 2
        %v1489 = vadd.f32 %v1487, %v1488
        %v1490 = vrot.slane %v1489, 1
        %v1491 = vadd.f32 %v1489, %v1490
        %v1492 = vsel %vm557, %v1482, 0.0
        %v1493 = vrot.slane %v1492, 4
        %v1494 = vadd.f32 %v1492, %v1493
        %v1495 = vrot.slane %v1494, 2
        %v1496 = vadd.f32 %v1494, %v1495
        %v1497 = vrot.slane %v1496, 1
        %v1498 = vadd.f32 %v1496, %v1497
        %v1499 = vsel %vm557, %v1483, 0.0
        %v1500 = vrot.slane %v1499, 4
        %v1501 = vadd.f32 %v1499, %v1500
        %v1502 = vrot.slane %v1501, 2
        %v1503 = vadd.f32 %v1501, %v1502
        %v1504 = vrot.slane %v1503, 1
        %v1505 = vadd.f32 %v1503, %v1504
        %v1506 = vsel %vm557, %v1484, 0.0
        %v1507 = vrot.slane %v1506, 4
        %v1508 = vadd.f32 %v1506, %v1507
        %v1509 = vrot.slane %v1508, 2
        %v1510 = vadd.f32 %v1508, %v1509
        %v1511 = vrot.slane %v1510, 1
        %v1512 = vadd.f32 %v1510, %v1511
        %1514 = vset.pattern.permute.xlu0 0
        %1515 = vperm.xlu0 %1514, %v764
        %v1516 = vpop.permute.xlu0 %1515
        %v1518 = vlaneseq
        %v1519 = vshrl.u32 %v1518, 7
        %v1520 = vsub.s32 0, %v1519
        %v1521 = vrot.slane %v1516, %v1520
        %1523 = vset.pattern.permute.xlu0 0
        %1524 = vperm.xlu0 %1523, %v765
        %v1525 = vpop.permute.xlu0 %1524
        %v1527 = vlaneseq
        %v1528 = vshrl.u32 %v1527, 7
        %v1529 = vsub.s32 0, %v1528
        %v1530 = vrot.slane %v1525, %v1529
        %1532 = vset.pattern.permute.xlu0 0
        %1533 = vperm.xlu0 %1532, %v766
        %v1534 = vpop.permute.xlu0 %1533
        %v1536 = vlaneseq
        %v1537 = vshrl.u32 %v1536, 7
        %v1538 = vsub.s32 0, %v1537
        %v1539 = vrot.slane %v1534, %v1538
        %1541 = vset.pattern.permute.xlu0 0
        %1542 = vperm.xlu0 %1541, %v767
        %v1543 = vpop.permute.xlu0 %1542
        %v1545 = vlaneseq
        %v1546 = vshrl.u32 %v1545, 7
        %v1547 = vsub.s32 0, %v1546
        %v1548 = vrot.slane %v1543, %v1547
        %v1549 = vmul.f32 %v1491, %v1521
        %v1550 = vmul.f32 %v1498, %v1530
        %v1551 = vmul.f32 %v1505, %v1539
        %v1552 = vmul.f32 %v1512, %v1548
        %v1553 = vld [vmem:[%s431] sm:$0x1]
        %v1554 = vld [vmem:[%s431 + $0x1] sm:$0x1]
        %v1555 = vld [vmem:[%s431 + $0x2] sm:$0x1]
        %v1556 = vld [vmem:[%s431 + $0x3] sm:$0x1]
        %v1557 = vld [vmem:[%s533] sm:$0xff]
        %v1558 = vld [vmem:[%s533 + $0x8] sm:$0xff]
        %v1559 = vld [vmem:[%s533 + $0x10] sm:$0xff]
        %v1560 = vld [vmem:[%s533 + $0x18] sm:$0xff]
        %v1561 = vld [vmem:[%s543] sm:$0x1]
        %v1562 = vld [vmem:[%s543 + $0x1] sm:$0x1]
        %v1563 = vld [vmem:[%s543 + $0x2] sm:$0x1]
        %v1564 = vld [vmem:[%s543 + $0x3] sm:$0x1]
        %1565 = vrot.lane.b32.xlu0 %v637, 96
        %v1566 = vpop.permute.xlu0 %1565
        %v1567 = vsel %vm557, %v738, 0
        %v1569 = vsel %vm557, %v1566, 0
        %1571 = vmatprep.subr.mxu0 0.0
        %1572 = vmatpush1.xpose.msra.mxu0 %v1569
        %1573 = vmatprep.subr.mxu0 0.0
        %1574 = vmatpush1.xpose.msra.mxu0 0.0
        %1575 = vmatprep.subr.mxu0 0.0
        %1576 = vmatpush1.xpose.msra.mxu0 0.0
        %1577 = vmatprep.subr.mxu0 0.0
        %1578 = vmatpush1.xpose.msra.mxu0 0.0
        %1579 = vmatprep.subr.mxu0 0.0
        %1580 = vmatpush1.xpose.msra.mxu0 0.0
        %1581 = vmatprep.subr.mxu0 0.0
        %1582 = vmatpush1.xpose.msra.mxu0 0.0
        %1583 = vmatprep.subr.mxu0 0.0
        %1584 = vmatpush1.xpose.msra.mxu0 0.0
        %1585 = vmatprep.subr.mxu0 0.0
        %1586 = vmatpush1.xpose.msra.mxu0 0.0
        %1587 = vmatprep.subr.mxu0 0.0
        %1588 = vmatpush1.xpose.msra.mxu0 0.0
        %1589 = vmatprep.subr.mxu0 0.0
        %1590 = vmatpush1.xpose.msra.mxu0 0.0
        %1591 = vmatprep.subr.mxu0 0.0
        %1592 = vmatpush1.xpose.msra.mxu0 0.0
        %1593 = vmatprep.subr.mxu0 0.0
        %1594 = vmatpush1.xpose.msra.mxu0 0.0
        %1595 = vmatprep.subr.mxu0 0.0
        %1596 = vmatpush1.xpose.msra.mxu0 0.0
        %1597 = vmatprep.subr.mxu0 0.0
        %1598 = vmatpush1.xpose.msra.mxu0 0.0
        %1599 = vmatprep.subr.mxu0 0.0
        %1600 = vmatpush1.xpose.msra.mxu0 0.0
        %1601 = vmatprep.subr.mxu0 0.0
        %1602 = vmatpush1.xpose.msra.mxu0 0.0
        %1603 = vmatprep.subr.mxu0 0.0
        %1604 = vmatpush1.xpose.msra.mxu0 0.0
        %1605 = vmatprep.subr.mxu0 0.0
        %1606 = vmatpush1.xpose.msra.mxu0 0.0
        %1607 = vmatprep.subr.mxu0 0.0
        %1608 = vmatpush1.xpose.msra.mxu0 0.0
        %1609 = vmatprep.subr.mxu0 0.0
        %1610 = vmatpush1.xpose.msra.mxu0 0.0
        %1611 = vmatprep.subr.mxu0 0.0
        %1612 = vmatpush1.xpose.msra.mxu0 0.0
        %1613 = vmatprep.subr.mxu0 0.0
        %1614 = vmatpush1.xpose.msra.mxu0 0.0
        %1615 = vmatprep.subr.mxu0 0.0
        %1616 = vmatpush1.xpose.msra.mxu0 0.0
        %1617 = vmatprep.subr.mxu0 0.0
        %1618 = vmatpush1.xpose.msra.mxu0 0.0
        %1619 = vmatprep.subr.mxu0 0.0
        %1620 = vmatpush1.xpose.msra.mxu0 0.0
        %1621 = vmatprep.subr.mxu0 0.0
        %1622 = vmatpush1.xpose.msra.mxu0 0.0
        %1623 = vmatprep.subr.mxu0 0.0
        %1624 = vmatpush1.xpose.msra.mxu0 0.0
        %1625 = vmatprep.subr.mxu0 0.0
        %1626 = vmatpush1.xpose.msra.mxu0 0.0
        %1627 = vmatprep.subr.mxu0 0.0
        %1628 = vmatpush1.xpose.msra.mxu0 0.0
        %1629 = vmatprep.subr.mxu0 0.0
        %1630 = vmatpush1.xpose.msra.mxu0 0.0
        %1631 = vmatprep.subr.mxu0 0.0
        %1632 = vmatpush1.xpose.msra.mxu0 0.0
        %1633 = vmatprep.subr.mxu0 0.0
        %1634 = vmatpush1.xpose.msra.mxu0 0.0
        %1635 = vmatprep.mubr.f32.mxu0 0.0
        %1636 = vmatmul.mubr.f32.gmra.mrb[0].mxu0 %v1567
        %v1637 = vpop.f32.mrb[0].mxu0
        %v1638 = vadd.f32 0.0, %v1637
        %v1639 = vpop.f32.mrb[0].mxu0
        %1640 = vdwg.mxu0
        %1641 = vrot.lane.b32.xlu0 %v642, 96
        %v1642 = vpop.permute.xlu0 %1641
        %v1643 = vsel %vm557, %v743, 0
        %v1645 = vsel %vm557, %v1642, 0
        %1647 = vmatprep.subr.mxu0 0.0
        %1648 = vmatpush1.xpose.msra.mxu0 %v1645
        %1649 = vmatprep.subr.mxu0 0.0
        %1650 = vmatpush1.xpose.msra.mxu0 0.0
        %1651 = vmatprep.subr.mxu0 0.0
        %1652 = vmatpush1.xpose.msra.mxu0 0.0
        %1653 = vmatprep.subr.mxu0 0.0
        %1654 = vmatpush1.xpose.msra.mxu0 0.0
        %1655 = vmatprep.subr.mxu0 0.0
        %1656 = vmatpush1.xpose.msra.mxu0 0.0
        %1657 = vmatprep.subr.mxu0 0.0
        %1658 = vmatpush1.xpose.msra.mxu0 0.0
        %1659 = vmatprep.subr.mxu0 0.0
        %1660 = vmatpush1.xpose.msra.mxu0 0.0
        %1661 = vmatprep.subr.mxu0 0.0
        %1662 = vmatpush1.xpose.msra.mxu0 0.0
        %1663 = vmatprep.subr.mxu0 0.0
        %1664 = vmatpush1.xpose.msra.mxu0 0.0
        %1665 = vmatprep.subr.mxu0 0.0
        %1666 = vmatpush1.xpose.msra.mxu0 0.0
        %1667 = vmatprep.subr.mxu0 0.0
        %1668 = vmatpush1.xpose.msra.mxu0 0.0
        %1669 = vmatprep.subr.mxu0 0.0
        %1670 = vmatpush1.xpose.msra.mxu0 0.0
        %1671 = vmatprep.subr.mxu0 0.0
        %1672 = vmatpush1.xpose.msra.mxu0 0.0
        %1673 = vmatprep.subr.mxu0 0.0
        %1674 = vmatpush1.xpose.msra.mxu0 0.0
        %1675 = vmatprep.subr.mxu0 0.0
        %1676 = vmatpush1.xpose.msra.mxu0 0.0
        %1677 = vmatprep.subr.mxu0 0.0
        %1678 = vmatpush1.xpose.msra.mxu0 0.0
        %1679 = vmatprep.subr.mxu0 0.0
        %1680 = vmatpush1.xpose.msra.mxu0 0.0
        %1681 = vmatprep.subr.mxu0 0.0
        %1682 = vmatpush1.xpose.msra.mxu0 0.0
        %1683 = vmatprep.subr.mxu0 0.0
        %1684 = vmatpush1.xpose.msra.mxu0 0.0
        %1685 = vmatprep.subr.mxu0 0.0
        %1686 = vmatpush1.xpose.msra.mxu0 0.0
        %1687 = vmatprep.subr.mxu0 0.0
        %1688 = vmatpush1.xpose.msra.mxu0 0.0
        %1689 = vmatprep.subr.mxu0 0.0
        %1690 = vmatpush1.xpose.msra.mxu0 0.0
        %1691 = vmatprep.subr.mxu0 0.0
        %1692 = vmatpush1.xpose.msra.mxu0 0.0
        %1693 = vmatprep.subr.mxu0 0.0
        %1694 = vmatpush1.xpose.msra.mxu0 0.0
        %1695 = vmatprep.subr.mxu0 0.0
        %1696 = vmatpush1.xpose.msra.mxu0 0.0
        %1697 = vmatprep.subr.mxu0 0.0
        %1698 = vmatpush1.xpose.msra.mxu0 0.0
        %1699 = vmatprep.subr.mxu0 0.0
        %1700 = vmatpush1.xpose.msra.mxu0 0.0
        %1701 = vmatprep.subr.mxu0 0.0
        %1702 = vmatpush1.xpose.msra.mxu0 0.0
        %1703 = vmatprep.subr.mxu0 0.0
        %1704 = vmatpush1.xpose.msra.mxu0 0.0
        %1705 = vmatprep.subr.mxu0 0.0
        %1706 = vmatpush1.xpose.msra.mxu0 0.0
        %1707 = vmatprep.subr.mxu0 0.0
        %1708 = vmatpush1.xpose.msra.mxu0 0.0
        %1709 = vmatprep.subr.mxu0 0.0
        %1710 = vmatpush1.xpose.msra.mxu0 0.0
        %1711 = vmatprep.mubr.f32.mxu0 0.0
        %1712 = vmatmul.mubr.f32.gmra.mrb[0].mxu0 %v1643
        %v1713 = vpop.f32.mrb[0].mxu0
        %v1714 = vadd.f32 0.0, %v1713
        %v1715 = vpop.f32.mrb[0].mxu0
        %1716 = vdwg.mxu0
        %1717 = vrot.lane.b32.xlu0 %v647, 96
        %v1718 = vpop.permute.xlu0 %1717
        %v1719 = vsel %vm557, %v748, 0
        %v1721 = vsel %vm557, %v1718, 0
        %1723 = vmatprep.subr.mxu0 0.0
        %1724 = vmatpush1.xpose.msra.mxu0 %v1721
        %1725 = vmatprep.subr.mxu0 0.0
        %1726 = vmatpush1.xpose.msra.mxu0 0.0
        %1727 = vmatprep.subr.mxu0 0.0
        %1728 = vmatpush1.xpose.msra.mxu0 0.0
        %1729 = vmatprep.subr.mxu0 0.0
        %1730 = vmatpush1.xpose.msra.mxu0 0.0
        %1731 = vmatprep.subr.mxu0 0.0
        %1732 = vmatpush1.xpose.msra.mxu0 0.0
        %1733 = vmatprep.subr.mxu0 0.0
        %1734 = vmatpush1.xpose.msra.mxu0 0.0
        %1735 = vmatprep.subr.mxu0 0.0
        %1736 = vmatpush1.xpose.msra.mxu0 0.0
        %1737 = vmatprep.subr.mxu0 0.0
        %1738 = vmatpush1.xpose.msra.mxu0 0.0
        %1739 = vmatprep.subr.mxu0 0.0
        %1740 = vmatpush1.xpose.msra.mxu0 0.0
        %1741 = vmatprep.subr.mxu0 0.0
        %1742 = vmatpush1.xpose.msra.mxu0 0.0
        %1743 = vmatprep.subr.mxu0 0.0
        %1744 = vmatpush1.xpose.msra.mxu0 0.0
        %1745 = vmatprep.subr.mxu0 0.0
        %1746 = vmatpush1.xpose.msra.mxu0 0.0
        %1747 = vmatprep.subr.mxu0 0.0
        %1748 = vmatpush1.xpose.msra.mxu0 0.0
        %1749 = vmatprep.subr.mxu0 0.0
        %1750 = vmatpush1.xpose.msra.mxu0 0.0
        %1751 = vmatprep.subr.mxu0 0.0
        %1752 = vmatpush1.xpose.msra.mxu0 0.0
        %1753 = vmatprep.subr.mxu0 0.0
        %1754 = vmatpush1.xpose.msra.mxu0 0.0
        %1755 = vmatprep.subr.mxu0 0.0
        %1756 = vmatpush1.xpose.msra.mxu0 0.0
        %1757 = vmatprep.subr.mxu0 0.0
        %1758 = vmatpush1.xpose.msra.mxu0 0.0
        %1759 = vmatprep.subr.mxu0 0.0
        %1760 = vmatpush1.xpose.msra.mxu0 0.0
        %1761 = vmatprep.subr.mxu0 0.0
        %1762 = vmatpush1.xpose.msra.mxu0 0.0
        %1763 = vmatprep.subr.mxu0 0.0
        %1764 = vmatpush1.xpose.msra.mxu0 0.0
        %1765 = vmatprep.subr.mxu0 0.0
        %1766 = vmatpush1.xpose.msra.mxu0 0.0
        %1767 = vmatprep.subr.mxu0 0.0
        %1768 = vmatpush1.xpose.msra.mxu0 0.0
        %1769 = vmatprep.subr.mxu0 0.0
        %1770 = vmatpush1.xpose.msra.mxu0 0.0
        %1771 = vmatprep.subr.mxu0 0.0
        %1772 = vmatpush1.xpose.msra.mxu0 0.0
        %1773 = vmatprep.subr.mxu0 0.0
        %1774 = vmatpush1.xpose.msra.mxu0 0.0
        %1775 = vmatprep.subr.mxu0 0.0
        %1776 = vmatpush1.xpose.msra.mxu0 0.0
        %1777 = vmatprep.subr.mxu0 0.0
        %1778 = vmatpush1.xpose.msra.mxu0 0.0
        %1779 = vmatprep.subr.mxu0 0.0
        %1780 = vmatpush1.xpose.msra.mxu0 0.0
        %1781 = vmatprep.subr.mxu0 0.0
        %1782 = vmatpush1.xpose.msra.mxu0 0.0
        %1783 = vmatprep.subr.mxu0 0.0
        %1784 = vmatpush1.xpose.msra.mxu0 0.0
        %1785 = vmatprep.subr.mxu0 0.0
        %1786 = vmatpush1.xpose.msra.mxu0 0.0
        %1787 = vmatprep.mubr.f32.mxu0 0.0
        %1788 = vmatmul.mubr.f32.gmra.mrb[0].mxu0 %v1719
        %v1789 = vpop.f32.mrb[0].mxu0
        %v1790 = vadd.f32 0.0, %v1789
        %v1791 = vpop.f32.mrb[0].mxu0
        %1792 = vdwg.mxu0
        %1793 = vrot.lane.b32.xlu0 %v652, 96
        %v1794 = vpop.permute.xlu0 %1793
        %v1795 = vsel %vm557, %v753, 0
        %v1797 = vsel %vm557, %v1794, 0
        %1799 = vmatprep.subr.mxu0 0.0
        %1800 = vmatpush1.xpose.msra.mxu0 %v1797
        %1801 = vmatprep.subr.mxu0 0.0
        %1802 = vmatpush1.xpose.msra.mxu0 0.0
        %1803 = vmatprep.subr.mxu0 0.0
        %1804 = vmatpush1.xpose.msra.mxu0 0.0
        %1805 = vmatprep.subr.mxu0 0.0
        %1806 = vmatpush1.xpose.msra.mxu0 0.0
        %1807 = vmatprep.subr.mxu0 0.0
        %1808 = vmatpush1.xpose.msra.mxu0 0.0
        %1809 = vmatprep.subr.mxu0 0.0
        %1810 = vmatpush1.xpose.msra.mxu0 0.0
        %1811 = vmatprep.subr.mxu0 0.0
        %1812 = vmatpush1.xpose.msra.mxu0 0.0
        %1813 = vmatprep.subr.mxu0 0.0
        %1814 = vmatpush1.xpose.msra.mxu0 0.0
        %1815 = vmatprep.subr.mxu0 0.0
        %1816 = vmatpush1.xpose.msra.mxu0 0.0
        %1817 = vmatprep.subr.mxu0 0.0
        %1818 = vmatpush1.xpose.msra.mxu0 0.0
        %1819 = vmatprep.subr.mxu0 0.0
        %1820 = vmatpush1.xpose.msra.mxu0 0.0
        %1821 = vmatprep.subr.mxu0 0.0
        %1822 = vmatpush1.xpose.msra.mxu0 0.0
        %1823 = vmatprep.subr.mxu0 0.0
        %1824 = vmatpush1.xpose.msra.mxu0 0.0
        %1825 = vmatprep.subr.mxu0 0.0
        %1826 = vmatpush1.xpose.msra.mxu0 0.0
        %1827 = vmatprep.subr.mxu0 0.0
        %1828 = vmatpush1.xpose.msra.mxu0 0.0
        %1829 = vmatprep.subr.mxu0 0.0
        %1830 = vmatpush1.xpose.msra.mxu0 0.0
        %1831 = vmatprep.subr.mxu0 0.0
        %1832 = vmatpush1.xpose.msra.mxu0 0.0
        %1833 = vmatprep.subr.mxu0 0.0
        %1834 = vmatpush1.xpose.msra.mxu0 0.0
        %1835 = vmatprep.subr.mxu0 0.0
        %1836 = vmatpush1.xpose.msra.mxu0 0.0
        %1837 = vmatprep.subr.mxu0 0.0
        %1838 = vmatpush1.xpose.msra.mxu0 0.0
        %1839 = vmatprep.subr.mxu0 0.0
        %1840 = vmatpush1.xpose.msra.mxu0 0.0
        %1841 = vmatprep.subr.mxu0 0.0
        %1842 = vmatpush1.xpose.msra.mxu0 0.0
        %1843 = vmatprep.subr.mxu0 0.0
        %1844 = vmatpush1.xpose.msra.mxu0 0.0
        %1845 = vmatprep.subr.mxu0 0.0
        %1846 = vmatpush1.xpose.msra.mxu0 0.0
        %1847 = vmatprep.subr.mxu0 0.0
        %1848 = vmatpush1.xpose.msra.mxu0 0.0
        %1849 = vmatprep.subr.mxu0 0.0
        %1850 = vmatpush1.xpose.msra.mxu0 0.0
        %1851 = vmatprep.subr.mxu0 0.0
        %1852 = vmatpush1.xpose.msra.mxu0 0.0
        %1853 = vmatprep.subr.mxu0 0.0
        %1854 = vmatpush1.xpose.msra.mxu0 0.0
        %1855 = vmatprep.subr.mxu0 0.0
        %1856 = vmatpush1.xpose.msra.mxu0 0.0
        %1857 = vmatprep.subr.mxu0 0.0
        %1858 = vmatpush1.xpose.msra.mxu0 0.0
        %1859 = vmatprep.subr.mxu0 0.0
        %1860 = vmatpush1.xpose.msra.mxu0 0.0
        %1861 = vmatprep.subr.mxu0 0.0
        %1862 = vmatpush1.xpose.msra.mxu0 0.0
        %1863 = vmatprep.mubr.f32.mxu0 0.0
        %1864 = vmatmul.mubr.f32.gmra.mrb[0].mxu0 %v1795
        %v1865 = vpop.f32.mrb[0].mxu0
        %v1866 = vadd.f32 0.0, %v1865
        %v1867 = vpop.f32.mrb[0].mxu0
        %1868 = vdwg.mxu0
        %v1869 = vmul.f32 %v1638, 0.17677669
        %v1870 = vmul.f32 %v1714, 0.17677669
        %v1871 = vmul.f32 %v1790, 0.17677669
        %v1872 = vmul.f32 %v1866, 0.17677669
        %v1877 = vlaneseq
        %v1878 = vshrl.u32 %v1877, 7
        %v1879 = vsub.s32 0, %v1878
        %v1880 = vrot.slane %v1553, %v1879
        %v1881 = vlaneseq
        %v1882 = vshrl.u32 %v1881, 7
        %v1883 = vsub.s32 0, %v1882
        %v1884 = vrot.slane %v1554, %v1883
        %v1885 = vlaneseq
        %v1886 = vshrl.u32 %v1885, 7
        %v1887 = vsub.s32 0, %v1886
        %v1888 = vrot.slane %v1555, %v1887
        %v1889 = vlaneseq
        %v1890 = vshrl.u32 %v1889, 7
        %v1891 = vsub.s32 0, %v1890
        %v1892 = vrot.slane %v1556, %v1891
        %v1897 = vadd.f32 %v1869, %v1880
        %v1898 = vadd.f32 %v1870, %v1884
        %v1899 = vadd.f32 %v1871, %v1888
        %v1900 = vadd.f32 %v1872, %v1892
        %v1901 = vsel %vm1112, %v1897, -inf
        %1902 = vmax.xlane.f32.xlu0 %v1901
        %v1903 = vpop.xlane.xlu0 %1902
        %v1904 = vsel %vm1112, %v1898, -inf
        %1905 = vmax.xlane.f32.xlu0 %v1904
        %v1906 = vpop.xlane.xlu0 %1905
        %v1907 = vsel %vm1112, %v1899, -inf
        %1908 = vmax.xlane.f32.xlu0 %v1907
        %v1909 = vpop.xlane.xlu0 %1908
        %v1910 = vsel %vm1112, %v1900, -inf
        %1911 = vmax.xlane.f32.xlu0 %v1910
        %v1912 = vpop.xlane.xlu0 %1911
        %v1913 = vsub.f32 %v1897, %v1903
        %v1914 = vsub.f32 %v1898, %v1906
        %v1915 = vsub.f32 %v1899, %v1909
        %v1916 = vsub.f32 %v1900, %v1912
        %v1917 = vmul.f32 %v1913, 1.442695
        %v1918 = vpow.pop %v1917
        %v1919 = vmul.f32 %v1914, 1.442695
        %v1920 = vpow.pop %v1919
        %v1921 = vmul.f32 %v1915, 1.442695
        %v1922 = vpow.pop %v1921
        %v1923 = vmul.f32 %v1916, 1.442695
        %v1924 = vpow.pop %v1923
        %v1925 = vsel %vm1112, %v1918, 0.0
        %1926 = vadd.xlane.f32.xlu0 %v1925
        %v1927 = vpop.xlane.xlu0 %1926
        %v1928 = vsel %vm1112, %v1920, 0.0
        %1929 = vadd.xlane.f32.xlu0 %v1928
        %v1930 = vpop.xlane.xlu0 %1929
        %v1931 = vsel %vm1112, %v1922, 0.0
        %1932 = vadd.xlane.f32.xlu0 %v1931
        %v1933 = vpop.xlane.xlu0 %1932
        %v1934 = vsel %vm1112, %v1924, 0.0
        %1935 = vadd.xlane.f32.xlu0 %v1934
        %v1936 = vpop.xlane.xlu0 %1935
        %1937 = vrot.lane.b32.xlu0 %v637, 64
        %v1938 = vpop.permute.xlu0 %1937
        %v1941 = vsel %vm1112, %v1918, 0
        %1943 = vmatprep.subr.mxu0 0.0
        %1944 = vmatpush1.msra.mxu0 %v1938
        %1945 = vmatprep.subr.mxu0 0.0
        %1946 = vmatpush1.msra.mxu0 0.0
        %1947 = vmatprep.subr.mxu0 0.0
        %1948 = vmatpush1.msra.mxu0 0.0
        %1949 = vmatprep.subr.mxu0 0.0
        %1950 = vmatpush1.msra.mxu0 0.0
        %1951 = vmatprep.subr.mxu0 0.0
        %1952 = vmatpush1.msra.mxu0 0.0
        %1953 = vmatprep.subr.mxu0 0.0
        %1954 = vmatpush1.msra.mxu0 0.0
        %1955 = vmatprep.subr.mxu0 0.0
        %1956 = vmatpush1.msra.mxu0 0.0
        %1957 = vmatprep.subr.mxu0 0.0
        %1958 = vmatpush1.msra.mxu0 0.0
        %1959 = vmatprep.subr.mxu0 0.0
        %1960 = vmatpush1.msra.mxu0 0.0
        %1961 = vmatprep.subr.mxu0 0.0
        %1962 = vmatpush1.msra.mxu0 0.0
        %1963 = vmatprep.subr.mxu0 0.0
        %1964 = vmatpush1.msra.mxu0 0.0
        %1965 = vmatprep.subr.mxu0 0.0
        %1966 = vmatpush1.msra.mxu0 0.0
        %1967 = vmatprep.subr.mxu0 0.0
        %1968 = vmatpush1.msra.mxu0 0.0
        %1969 = vmatprep.subr.mxu0 0.0
        %1970 = vmatpush1.msra.mxu0 0.0
        %1971 = vmatprep.subr.mxu0 0.0
        %1972 = vmatpush1.msra.mxu0 0.0
        %1973 = vmatprep.subr.mxu0 0.0
        %1974 = vmatpush1.msra.mxu0 0.0
        %1975 = vmatprep.subr.mxu0 0.0
        %1976 = vmatpush1.msra.mxu0 0.0
        %1977 = vmatprep.subr.mxu0 0.0
        %1978 = vmatpush1.msra.mxu0 0.0
        %1979 = vmatprep.subr.mxu0 0.0
        %1980 = vmatpush1.msra.mxu0 0.0
        %1981 = vmatprep.subr.mxu0 0.0
        %1982 = vmatpush1.msra.mxu0 0.0
        %1983 = vmatprep.subr.mxu0 0.0
        %1984 = vmatpush1.msra.mxu0 0.0
        %1985 = vmatprep.subr.mxu0 0.0
        %1986 = vmatpush1.msra.mxu0 0.0
        %1987 = vmatprep.subr.mxu0 0.0
        %1988 = vmatpush1.msra.mxu0 0.0
        %1989 = vmatprep.subr.mxu0 0.0
        %1990 = vmatpush1.msra.mxu0 0.0
        %1991 = vmatprep.subr.mxu0 0.0
        %1992 = vmatpush1.msra.mxu0 0.0
        %1993 = vmatprep.subr.mxu0 0.0
        %1994 = vmatpush1.msra.mxu0 0.0
        %1995 = vmatprep.subr.mxu0 0.0
        %1996 = vmatpush1.msra.mxu0 0.0
        %1997 = vmatprep.subr.mxu0 0.0
        %1998 = vmatpush1.msra.mxu0 0.0
        %1999 = vmatprep.subr.mxu0 0.0
        %2000 = vmatpush1.msra.mxu0 0.0
        %2001 = vmatprep.subr.mxu0 0.0
        %2002 = vmatpush1.msra.mxu0 0.0
        %2003 = vmatprep.subr.mxu0 0.0
        %2004 = vmatpush1.msra.mxu0 0.0
        %2005 = vmatprep.subr.mxu0 0.0
        %2006 = vmatpush1.msra.mxu0 0.0
        %2007 = vmatprep.mubr.f32.mxu0 0.0
        %2008 = vmatmul.mubr.f32.gmra.mrb[0].mxu0 %v1941
        %v2009 = vpop.f32.mrb[0].mxu0
        %v2010 = vadd.f32 0.0, %v2009
        %v2011 = vpop.f32.mrb[0].mxu0
        %2012 = vdwg.mxu0
        %2013 = vrot.lane.b32.xlu0 %v642, 64
        %v2014 = vpop.permute.xlu0 %2013
        %v2017 = vsel %vm1112, %v1920, 0
        %2019 = vmatprep.subr.mxu0 0.0
        %2020 = vmatpush1.msra.mxu0 %v2014
        %2021 = vmatprep.subr.mxu0 0.0
        %2022 = vmatpush1.msra.mxu0 0.0
        %2023 = vmatprep.subr.mxu0 0.0
        %2024 = vmatpush1.msra.mxu0 0.0
        %2025 = vmatprep.subr.mxu0 0.0
        %2026 = vmatpush1.msra.mxu0 0.0
        %2027 = vmatprep.subr.mxu0 0.0
        %2028 = vmatpush1.msra.mxu0 0.0
        %2029 = vmatprep.subr.mxu0 0.0
        %2030 = vmatpush1.msra.mxu0 0.0
        %2031 = vmatprep.subr.mxu0 0.0
        %2032 = vmatpush1.msra.mxu0 0.0
        %2033 = vmatprep.subr.mxu0 0.0
        %2034 = vmatpush1.msra.mxu0 0.0
        %2035 = vmatprep.subr.mxu0 0.0
        %2036 = vmatpush1.msra.mxu0 0.0
        %2037 = vmatprep.subr.mxu0 0.0
        %2038 = vmatpush1.msra.mxu0 0.0
        %2039 = vmatprep.subr.mxu0 0.0
        %2040 = vmatpush1.msra.mxu0 0.0
        %2041 = vmatprep.subr.mxu0 0.0
        %2042 = vmatpush1.msra.mxu0 0.0
        %2043 = vmatprep.subr.mxu0 0.0
        %2044 = vmatpush1.msra.mxu0 0.0
        %2045 = vmatprep.subr.mxu0 0.0
        %2046 = vmatpush1.msra.mxu0 0.0
        %2047 = vmatprep.subr.mxu0 0.0
        %2048 = vmatpush1.msra.mxu0 0.0
        %2049 = vmatprep.subr.mxu0 0.0
        %2050 = vmatpush1.msra.mxu0 0.0
        %2051 = vmatprep.subr.mxu0 0.0
        %2052 = vmatpush1.msra.mxu0 0.0
        %2053 = vmatprep.subr.mxu0 0.0
        %2054 = vmatpush1.msra.mxu0 0.0
        %2055 = vmatprep.subr.mxu0 0.0
        %2056 = vmatpush1.msra.mxu0 0.0
        %2057 = vmatprep.subr.mxu0 0.0
        %2058 = vmatpush1.msra.mxu0 0.0
        %2059 = vmatprep.subr.mxu0 0.0
        %2060 = vmatpush1.msra.mxu0 0.0
        %2061 = vmatprep.subr.mxu0 0.0
        %2062 = vmatpush1.msra.mxu0 0.0
        %2063 = vmatprep.subr.mxu0 0.0
        %2064 = vmatpush1.msra.mxu0 0.0
        %2065 = vmatprep.subr.mxu0 0.0
        %2066 = vmatpush1.msra.mxu0 0.0
        %2067 = vmatprep.subr.mxu0 0.0
        %2068 = vmatpush1.msra.mxu0 0.0
        %2069 = vmatprep.subr.mxu0 0.0
        %2070 = vmatpush1.msra.mxu0 0.0
        %2071 = vmatprep.subr.mxu0 0.0
        %2072 = vmatpush1.msra.mxu0 0.0
        %2073 = vmatprep.subr.mxu0 0.0
        %2074 = vmatpush1.msra.mxu0 0.0
        %2075 = vmatprep.subr.mxu0 0.0
        %2076 = vmatpush1.msra.mxu0 0.0
        %2077 = vmatprep.subr.mxu0 0.0
        %2078 = vmatpush1.msra.mxu0 0.0
        %2079 = vmatprep.subr.mxu0 0.0
        %2080 = vmatpush1.msra.mxu0 0.0
        %2081 = vmatprep.subr.mxu0 0.0
        %2082 = vmatpush1.msra.mxu0 0.0
        %2083 = vmatprep.mubr.f32.mxu0 0.0
        %2084 = vmatmul.mubr.f32.gmra.mrb[0].mxu0 %v2017
        %v2085 = vpop.f32.mrb[0].mxu0
        %v2086 = vadd.f32 0.0, %v2085
        %v2087 = vpop.f32.mrb[0].mxu0
        %2088 = vdwg.mxu0
        %2089 = vrot.lane.b32.xlu0 %v647, 64
        %v2090 = vpop.permute.xlu0 %2089
        %v2093 = vsel %vm1112, %v1922, 0
        %2095 = vmatprep.subr.mxu0 0.0
        %2096 = vmatpush1.msra.mxu0 %v2090
        %2097 = vmatprep.subr.mxu0 0.0
        %2098 = vmatpush1.msra.mxu0 0.0
        %2099 = vmatprep.subr.mxu0 0.0
        %2100 = vmatpush1.msra.mxu0 0.0
        %2101 = vmatprep.subr.mxu0 0.0
        %2102 = vmatpush1.msra.mxu0 0.0
        %2103 = vmatprep.subr.mxu0 0.0
        %2104 = vmatpush1.msra.mxu0 0.0
        %2105 = vmatprep.subr.mxu0 0.0
        %2106 = vmatpush1.msra.mxu0 0.0
        %2107 = vmatprep.subr.mxu0 0.0
        %2108 = vmatpush1.msra.mxu0 0.0
        %2109 = vmatprep.subr.mxu0 0.0
        %2110 = vmatpush1.msra.mxu0 0.0
        %2111 = vmatprep.subr.mxu0 0.0
        %2112 = vmatpush1.msra.mxu0 0.0
        %2113 = vmatprep.subr.mxu0 0.0
        %2114 = vmatpush1.msra.mxu0 0.0
        %2115 = vmatprep.subr.mxu0 0.0
        %2116 = vmatpush1.msra.mxu0 0.0
        %2117 = vmatprep.subr.mxu0 0.0
        %2118 = vmatpush1.msra.mxu0 0.0
        %2119 = vmatprep.subr.mxu0 0.0
        %2120 = vmatpush1.msra.mxu0 0.0
        %2121 = vmatprep.subr.mxu0 0.0
        %2122 = vmatpush1.msra.mxu0 0.0
        %2123 = vmatprep.subr.mxu0 0.0
        %2124 = vmatpush1.msra.mxu0 0.0
        %2125 = vmatprep.subr.mxu0 0.0
        %2126 = vmatpush1.msra.mxu0 0.0
        %2127 = vmatprep.subr.mxu0 0.0
        %2128 = vmatpush1.msra.mxu0 0.0
        %2129 = vmatprep.subr.mxu0 0.0
        %2130 = vmatpush1.msra.mxu0 0.0
        %2131 = vmatprep.subr.mxu0 0.0
        %2132 = vmatpush1.msra.mxu0 0.0
        %2133 = vmatprep.subr.mxu0 0.0
        %2134 = vmatpush1.msra.mxu0 0.0
        %2135 = vmatprep.subr.mxu0 0.0
        %2136 = vmatpush1.msra.mxu0 0.0
        %2137 = vmatprep.subr.mxu0 0.0
        %2138 = vmatpush1.msra.mxu0 0.0
        %2139 = vmatprep.subr.mxu0 0.0
        %2140 = vmatpush1.msra.mxu0 0.0
        %2141 = vmatprep.subr.mxu0 0.0
        %2142 = vmatpush1.msra.mxu0 0.0
        %2143 = vmatprep.subr.mxu0 0.0
        %2144 = vmatpush1.msra.mxu0 0.0
        %2145 = vmatprep.subr.mxu0 0.0
        %2146 = vmatpush1.msra.mxu0 0.0
        %2147 = vmatprep.subr.mxu0 0.0
        %2148 = vmatpush1.msra.mxu0 0.0
        %2149 = vmatprep.subr.mxu0 0.0
        %2150 = vmatpush1.msra.mxu0 0.0
        %2151 = vmatprep.subr.mxu0 0.0
        %2152 = vmatpush1.msra.mxu0 0.0
        %2153 = vmatprep.subr.mxu0 0.0
        %2154 = vmatpush1.msra.mxu0 0.0
        %2155 = vmatprep.subr.mxu0 0.0
        %2156 = vmatpush1.msra.mxu0 0.0
        %2157 = vmatprep.subr.mxu0 0.0
        %2158 = vmatpush1.msra.mxu0 0.0
        %2159 = vmatprep.mubr.f32.mxu0 0.0
        %2160 = vmatmul.mubr.f32.gmra.mrb[0].mxu0 %v2093
        %v2161 = vpop.f32.mrb[0].mxu0
        %v2162 = vadd.f32 0.0, %v2161
        %v2163 = vpop.f32.mrb[0].mxu0
        %2164 = vdwg.mxu0
        %2165 = vrot.lane.b32.xlu0 %v652, 64
        %v2166 = vpop.permute.xlu0 %2165
        %v2169 = vsel %vm1112, %v1924, 0
        %2171 = vmatprep.subr.mxu0 0.0
        %2172 = vmatpush1.msra.mxu0 %v2166
        %2173 = vmatprep.subr.mxu0 0.0
        %2174 = vmatpush1.msra.mxu0 0.0
        %2175 = vmatprep.subr.mxu0 0.0
        %2176 = vmatpush1.msra.mxu0 0.0
        %2177 = vmatprep.subr.mxu0 0.0
        %2178 = vmatpush1.msra.mxu0 0.0
        %2179 = vmatprep.subr.mxu0 0.0
        %2180 = vmatpush1.msra.mxu0 0.0
        %2181 = vmatprep.subr.mxu0 0.0
        %2182 = vmatpush1.msra.mxu0 0.0
        %2183 = vmatprep.subr.mxu0 0.0
        %2184 = vmatpush1.msra.mxu0 0.0
        %2185 = vmatprep.subr.mxu0 0.0
        %2186 = vmatpush1.msra.mxu0 0.0
        %2187 = vmatprep.subr.mxu0 0.0
        %2188 = vmatpush1.msra.mxu0 0.0
        %2189 = vmatprep.subr.mxu0 0.0
        %2190 = vmatpush1.msra.mxu0 0.0
        %2191 = vmatprep.subr.mxu0 0.0
        %2192 = vmatpush1.msra.mxu0 0.0
        %2193 = vmatprep.subr.mxu0 0.0
        %2194 = vmatpush1.msra.mxu0 0.0
        %2195 = vmatprep.subr.mxu0 0.0
        %2196 = vmatpush1.msra.mxu0 0.0
        %2197 = vmatprep.subr.mxu0 0.0
        %2198 = vmatpush1.msra.mxu0 0.0
        %2199 = vmatprep.subr.mxu0 0.0
        %2200 = vmatpush1.msra.mxu0 0.0
        %2201 = vmatprep.subr.mxu0 0.0
        %2202 = vmatpush1.msra.mxu0 0.0
        %2203 = vmatprep.subr.mxu0 0.0
        %2204 = vmatpush1.msra.mxu0 0.0
        %2205 = vmatprep.subr.mxu0 0.0
        %2206 = vmatpush1.msra.mxu0 0.0
        %2207 = vmatprep.subr.mxu0 0.0
        %2208 = vmatpush1.msra.mxu0 0.0
        %2209 = vmatprep.subr.mxu0 0.0
        %2210 = vmatpush1.msra.mxu0 0.0
        %2211 = vmatprep.subr.mxu0 0.0
        %2212 = vmatpush1.msra.mxu0 0.0
        %2213 = vmatprep.subr.mxu0 0.0
        %2214 = vmatpush1.msra.mxu0 0.0
        %2215 = vmatprep.subr.mxu0 0.0
        %2216 = vmatpush1.msra.mxu0 0.0
        %2217 = vmatprep.subr.mxu0 0.0
        %2218 = vmatpush1.msra.mxu0 0.0
        %2219 = vmatprep.subr.mxu0 0.0
        %2220 = vmatpush1.msra.mxu0 0.0
        %2221 = vmatprep.subr.mxu0 0.0
        %2222 = vmatpush1.msra.mxu0 0.0
        %2223 = vmatprep.subr.mxu0 0.0
        %2224 = vmatpush1.msra.mxu0 0.0
        %2225 = vmatprep.subr.mxu0 0.0
        %2226 = vmatpush1.msra.mxu0 0.0
        %2227 = vmatprep.subr.mxu0 0.0
        %2228 = vmatpush1.msra.mxu0 0.0
        %2229 = vmatprep.subr.mxu0 0.0
        %2230 = vmatpush1.msra.mxu0 0.0
        %2231 = vmatprep.subr.mxu0 0.0
        %2232 = vmatpush1.msra.mxu0 0.0
        %2233 = vmatprep.subr.mxu0 0.0
        %2234 = vmatpush1.msra.mxu0 0.0
        %2235 = vmatprep.mubr.f32.mxu0 0.0
        %2236 = vmatmul.mubr.f32.gmra.mrb[0].mxu0 %v2169
        %v2237 = vpop.f32.mrb[0].mxu0
        %v2238 = vadd.f32 0.0, %v2237
        %v2239 = vpop.f32.mrb[0].mxu0
        %2240 = vdwg.mxu0
        %v2241 = vrcp.pop %v1927
        %v2242 = vrcp.pop %v1930
        %v2243 = vrcp.pop %v1933
        %v2244 = vrcp.pop %v1936
        %v2245 = vmul.f32 %v1557, %v2241
        %v2246 = vmul.f32 %v1558, %v2242
        %v2247 = vmul.f32 %v1559, %v2243
        %v2248 = vmul.f32 %v1560, %v2244
        %2250 = vset.pattern.permute.xlu0 0
        %2251 = vperm.xlu0 %2250, %v2245
        %v2252 = vpop.permute.xlu0 %2251
        %2255 = vset.pattern.permute.xlu0 0
        %2256 = vperm.xlu0 %2255, %v2246
        %v2257 = vpop.permute.xlu0 %2256
        %2260 = vset.pattern.permute.xlu0 0
        %2261 = vperm.xlu0 %2260, %v2247
        %v2262 = vpop.permute.xlu0 %2261
        %2265 = vset.pattern.permute.xlu0 0
        %2266 = vperm.xlu0 %2265, %v2248
        %v2267 = vpop.permute.xlu0 %2266
        %v2269 = vmul.f32 %v2010, %v2252
        %v2270 = vmul.f32 %v2086, %v2257
        %v2271 = vmul.f32 %v2162, %v2262
        %v2272 = vmul.f32 %v2238, %v2267
        %v2273 = vsel %vm557, %v2269, 0.0
        %v2274 = vrot.slane %v2273, 4
        %v2275 = vadd.f32 %v2273, %v2274
        %v2276 = vrot.slane %v2275, 2
        %v2277 = vadd.f32 %v2275, %v2276
        %v2278 = vrot.slane %v2277, 1
        %v2279 = vadd.f32 %v2277, %v2278
        %v2280 = vsel %vm557, %v2270, 0.0
        %v2281 = vrot.slane %v2280, 4
        %v2282 = vadd.f32 %v2280, %v2281
        %v2283 = vrot.slane %v2282, 2
        %v2284 = vadd.f32 %v2282, %v2283
        %v2285 = vrot.slane %v2284, 1
        %v2286 = vadd.f32 %v2284, %v2285
        %v2287 = vsel %vm557, %v2271, 0.0
        %v2288 = vrot.slane %v2287, 4
        %v2289 = vadd.f32 %v2287, %v2288
        %v2290 = vrot.slane %v2289, 2
        %v2291 = vadd.f32 %v2289, %v2290
        %v2292 = vrot.slane %v2291, 1
        %v2293 = vadd.f32 %v2291, %v2292
        %v2294 = vsel %vm557, %v2272, 0.0
        %v2295 = vrot.slane %v2294, 4
        %v2296 = vadd.f32 %v2294, %v2295
        %v2297 = vrot.slane %v2296, 2
        %v2298 = vadd.f32 %v2296, %v2297
        %v2299 = vrot.slane %v2298, 1
        %v2300 = vadd.f32 %v2298, %v2299
        %2302 = vset.pattern.permute.xlu0 0
        %2303 = vperm.xlu0 %2302, %v1561
        %v2304 = vpop.permute.xlu0 %2303
        %v2306 = vlaneseq
        %v2307 = vshrl.u32 %v2306, 7
        %v2308 = vsub.s32 0, %v2307
        %v2309 = vrot.slane %v2304, %v2308
        %2311 = vset.pattern.permute.xlu0 0
        %2312 = vperm.xlu0 %2311, %v1562
        %v2313 = vpop.permute.xlu0 %2312
        %v2315 = vlaneseq
        %v2316 = vshrl.u32 %v2315, 7
        %v2317 = vsub.s32 0, %v2316
        %v2318 = vrot.slane %v2313, %v2317
        %2320 = vset.pattern.permute.xlu0 0
        %2321 = vperm.xlu0 %2320, %v1563
        %v2322 = vpop.permute.xlu0 %2321
        %v2324 = vlaneseq
        %v2325 = vshrl.u32 %v2324, 7
        %v2326 = vsub.s32 0, %v2325
        %v2327 = vrot.slane %v2322, %v2326
        %2329 = vset.pattern.permute.xlu0 0
        %2330 = vperm.xlu0 %2329, %v1564
        %v2331 = vpop.permute.xlu0 %2330
        %v2333 = vlaneseq
        %v2334 = vshrl.u32 %v2333, 7
        %v2335 = vsub.s32 0, %v2334
        %v2336 = vrot.slane %v2331, %v2335
        %v2337 = vmul.f32 %v2279, %v2309
        %v2338 = vmul.f32 %v2286, %v2318
        %v2339 = vmul.f32 %v2293, %v2327
        %v2340 = vmul.f32 %v2300, %v2336
        %v2345 = vrot.slane %v1550, 7
        %vm2346 = vcmask 1041409
        %v2347 = vsel %vm2346, %v2345, %v1549
        %v2348 = vrot.slane %v1551, 6
        %vm2349 = vcmask 1042434
        %v2350 = vsel %vm2349, %v2348, %v2347
        %v2351 = vrot.slane %v1552, 5
        %vm2352 = vcmask 1043459
        %v2353 = vsel %vm2352, %v2351, %v2350
        %v2359 = vrot.slane %v2337, 4
        %v2360 = vrot.slane %v2338, 3
        %vm2361 = vcmask 1045509
        %v2362 = vsel %vm2361, %v2360, %v2359
        %v2363 = vrot.slane %v2339, 2
        %vm2364 = vcmask 1046534
        %v2365 = vsel %vm2364, %v2363, %v2362
        %v2366 = vrot.slane %v2340, 1
        %vm2367 = vcmask 1047559
        %v2368 = vsel %vm2367, %v2366, %v2365
        %vm2370 = vcmask 1043456
        %v2371 = vsel %vm2370, %v2353, %v2368
        %v2373 = vsel %vm557, %v2371, 0
        %2375 = vmatprep.subr.mxu0 0.0
        %2376 = vmatpush1.msra.mxu0 %v549
        %2377 = vmatprep.subr.mxu0 0.0
        %2378 = vmatpush1.msra.mxu0 %v550
        %2379 = vmatprep.subr.mxu0 0.0
        %2380 = vmatpush1.msra.mxu0 %v551
        %2381 = vmatprep.subr.mxu0 0.0
        %2382 = vmatpush1.msra.mxu0 %v552
        %2383 = vmatprep.subr.mxu0 0.0
        %2384 = vmatpush1.msra.mxu0 0.0
        %2385 = vmatprep.subr.mxu0 0.0
        %2386 = vmatpush1.msra.mxu0 0.0
        %2387 = vmatprep.subr.mxu0 0.0
        %2388 = vmatpush1.msra.mxu0 0.0
        %2389 = vmatprep.subr.mxu0 0.0
        %2390 = vmatpush1.msra.mxu0 0.0
        %2391 = vmatprep.subr.mxu0 0.0
        %2392 = vmatpush1.msra.mxu0 0.0
        %2393 = vmatprep.subr.mxu0 0.0
        %2394 = vmatpush1.msra.mxu0 0.0
        %2395 = vmatprep.subr.mxu0 0.0
        %2396 = vmatpush1.msra.mxu0 0.0
        %2397 = vmatprep.subr.mxu0 0.0
        %2398 = vmatpush1.msra.mxu0 0.0
        %2399 = vmatprep.subr.mxu0 0.0
        %2400 = vmatpush1.msra.mxu0 0.0
        %2401 = vmatprep.subr.mxu0 0.0
        %2402 = vmatpush1.msra.mxu0 0.0
        %2403 = vmatprep.subr.mxu0 0.0
        %2404 = vmatpush1.msra.mxu0 0.0
        %2405 = vmatprep.subr.mxu0 0.0
        %2406 = vmatpush1.msra.mxu0 0.0
        %2407 = vmatprep.subr.mxu0 0.0
        %2408 = vmatpush1.msra.mxu0 0.0
        %2409 = vmatprep.subr.mxu0 0.0
        %2410 = vmatpush1.msra.mxu0 0.0
        %2411 = vmatprep.subr.mxu0 0.0
        %2412 = vmatpush1.msra.mxu0 0.0
        %2413 = vmatprep.subr.mxu0 0.0
        %2414 = vmatpush1.msra.mxu0 0.0
        %2415 = vmatprep.subr.mxu0 0.0
        %2416 = vmatpush1.msra.mxu0 0.0
        %2417 = vmatprep.subr.mxu0 0.0
        %2418 = vmatpush1.msra.mxu0 0.0
        %2419 = vmatprep.subr.mxu0 0.0
        %2420 = vmatpush1.msra.mxu0 0.0
        %2421 = vmatprep.subr.mxu0 0.0
        %2422 = vmatpush1.msra.mxu0 0.0
        %2423 = vmatprep.subr.mxu0 0.0
        %2424 = vmatpush1.msra.mxu0 0.0
        %2425 = vmatprep.subr.mxu0 0.0
        %2426 = vmatpush1.msra.mxu0 0.0
        %2427 = vmatprep.subr.mxu0 0.0
        %2428 = vmatpush1.msra.mxu0 0.0
        %2429 = vmatprep.subr.mxu0 0.0
        %2430 = vmatpush1.msra.mxu0 0.0
        %2431 = vmatprep.subr.mxu0 0.0
        %2432 = vmatpush1.msra.mxu0 0.0
        %2433 = vmatprep.subr.mxu0 0.0
        %2434 = vmatpush1.msra.mxu0 0.0
        %2435 = vmatprep.subr.mxu0 0.0
        %2436 = vmatpush1.msra.mxu0 0.0
        %2437 = vmatprep.subr.mxu0 0.0
        %2438 = vmatpush1.msra.mxu0 0.0
        %2439 = vmatprep.mubr.f32.mxu0 0.0
        %2440 = vmatmul.mubr.f32.gmra.mrb[0].mxu0 %v2373
        %v2441 = vpop.f32.mrb[0].mxu0
        %v2442 = vadd.f32 0.0, %v2441
        %v2443 = vpop.f32.mrb[0].mxu0
        %2444 = vdwg.mxu0
        %v2446 = vrot.slane %v2442, 4
        %v2448 = vmul.f32 %v2442, %v2446
        %vm2449 = vcmask 257024
        %v2450 = vsel %vm2449, %v2448, 0.0
        %2451 = vadd.xlane.f32.xlu0 %v2450
        %v2452 = vpop.xlane.xlu0 %2451
        %v2453 = vmul.f32 %v2442, %v2442
        %v2454 = vsel %vm2449, %v2453, 0.0
        %2455 = vadd.xlane.f32.xlu0 %v2454
        %v2456 = vpop.xlane.xlu0 %2455
        %v2457 = vrsqrt.pop %v2456
        %v2458 = vmul.f32 %v2456, %v2457
        %vm2459 = vcmp.eq.f32.partialorder %v2456, inf
        %v2460 = vsel %vm2459, %v2456, %v2458
        %vm2461 = vcmp.eq.f32.partialorder %v2456, 0.0
        %v2462 = vand.u32 %v2456, 2147483648
        %v2463 = vsel %vm2461, %v2462, %v2460
        %vm2464 = vcmask 261124
        %v2465 = vsel %vm2464, %v2453, 0.0
        %2466 = vadd.xlane.f32.xlu0 %v2465
        %v2467 = vpop.xlane.xlu0 %2466
        %v2468 = vrsqrt.pop %v2467
        %v2469 = vmul.f32 %v2467, %v2468
        %vm2470 = vcmp.eq.f32.partialorder %v2467, inf
        %v2471 = vsel %vm2470, %v2467, %v2469
        %vm2472 = vcmp.eq.f32.partialorder %v2467, 0.0
        %v2473 = vand.u32 %v2467, 2147483648
        %v2474 = vsel %vm2472, %v2473, %v2471
        %v2475 = vmax.f32 %v2463, 1e-08
        %v2476 = vmax.f32 %v2474, 1e-08
        %v2478 = vrot.slane %v2476, 4
        %v2480 = vmul.f32 %v2475, %v2478
        %v2481 = vrcp.pop %v2480
        %v2482 = vmul.f32 %v2452, %v2481
        %2484 = vset.pattern.permute.xlu0 0
        %2485 = vperm.xlu0 %2484, %v2482
        %v2486 = vpop.permute.xlu0 %2485
        %v2487 = vlaneseq
        %v2488 = vand.u32 %v2487, 127
        %v2489 = vlaneseq
        %v2490 = vshrl.u32 %v2489, 7
        %v2491 = vsub.s32 %v2488, %v2490
        %v2492 = vrot.slane %v2486, %v2491
        %vm2494 = vcmask 24576
        %2495 = vst.msk [vmem:[%s508] sm:$0x1] %vm2494, %v2492
        %s2496 = sand.u32 %s288, 1
        %s2497 = scalar_lea.sflag [#allocation4], %s2496
        %s2498 = sand.u32 %s288, 1
        %s2499 = scalar_lea.vmem [#allocation7], %s2498
        // Predicated region
        $region69: #{tpu_custom_call.1} parent=59 // pred_check
          %p2500 = pneg %p298
        $region70: #{tpu_custom_call.1} parent=59 // pred_check_branch
          %2502 = sbr.rel (%p2500) target = $region72
        $region71: #{tpu_custom_call.1} parent=59 // pred_region
          %s2504 = ssub.s32 16, 16
          %2505 = vsyncadd %s2497, %s2504
          %s2506 = smul.addr %s30, 16
          %s2507 = scalar_lea.hbm %s10, %s2506
          %s2509 = sshll.u32 %s2499, 4
          %s2510 = int_to_ptr.vmem [resolvable:$true] %s2509
          %2512 = dma.vmem_to_hbm [thread:$0]  %s2510, 16, %s2507, %s2497
        $region72: #{tpu_custom_call.1} parent=59 // pred_fallthru
          _
      $region60: #{tpu_custom_call.1} parent=5 // pred_fallthru
        _
      %p2513 = scmp.le.s32.totalorder 2, %s25
      // Predicated region
      $region73: #{tpu_custom_call.1} parent=5 // pred_check
        %p2514 = pneg %p2513
      $region74: #{tpu_custom_call.1} parent=5 // pred_check_branch
        %2516 = sbr.rel (%p2514) target = $region76
      $region75: #{tpu_custom_call.1} parent=5 // pred_region
        %s2517 = ssub.s32 %s25, 2
        // Predicated region
        $region77: #{tpu_custom_call.1} parent=75 // pred_check
          %p2518 = pneg %p304
        $region78: #{tpu_custom_call.1} parent=75 // pred_check_branch
          %2520 = sbr.rel (%p2518) target = $region80
        $region79: #{tpu_custom_call.1} parent=75 // pred_region
          %s2521 = sand.u32 %s289, 1
          %s2522 = scalar_lea.sflag [#allocation4], %s2521
          %s2523 = sand.u32 %s289, 1
          %s2524 = scalar_lea.vmem [#allocation7], %s2523
          %2525 = dma.done %s2522, 16
        $region80: #{tpu_custom_call.1} parent=75 // pred_fallthru
          _
      $region76: #{tpu_custom_call.1} parent=5 // pred_fallthru
        _
    $region6: #{tpu_custom_call.1} parent=1 // loop_footer
      %s29 = sadd.s32 1, %s25
    $region7: #{tpu_custom_call.1} parent=1 // loop_footer_branch
      %24 = sbr.rel target = $region3
    $region8: #{tpu_custom_call.1} parent=1 // loop_exit
      _
    %2526 = vsyncpa [#allocation3], 1
    %s2527 = scalar_lea.sflag [#allocation3], 1
    %2528 = vsyncpa %s2527, 1
    %2529 = vsyncpa [#allocation6], 1
    %s2530 = scalar_lea.sflag [#allocation6], 1
    %2531 = vsyncpa %s2530, 1
    %2532 = vsyncpa [#allocation4], 1
    %s2533 = scalar_lea.sflag [#allocation4], 1
    %2534 = vsyncpa %s2533, 1

// kernel: tpu_custom_call.1
$region0: #{tpu_custom_call.1}
  #allocation0 [shape = 'u32[]', space=smem, size = 0x4, offset = 0x4, fixed_abs, tag = 'smem constant byte address 0x4 - core index']
  #allocation1 [shape = 'u32[144,128]{1,0:T(1,128)}', space=vmem, size = 0x12000, scoped, tag = 'internal scratch']
  %s0 = inlined_call_operand.vmem [shape: f32[8,8,32], index: 0, kind: input, shape index: {}]
  %s1 = inlined_call_operand.vmem [shape: f32[8,8,32], index: 1, kind: input, shape index: {}]
  %s2 = inlined_call_operand.hbm [shape: f32[8,1,8], index: 2, kind: input, shape index: {}]
  %s3 = inlined_call_operand.hbm [shape: f32[8,1,8], index: 3, kind: input, shape index: {}]
  %s4 = inlined_call_operand.vmem [shape: f32[8,8,1], index: 4, kind: input, shape index: {}]
  %s5 = inlined_call_operand.vmem [shape: f32[8,8,1], index: 5, kind: input, shape index: {}]
  %s6 = inlined_call_operand.vmem [shape: f32[8,1,1], index: 6, kind: input, shape index: {}]
  %s7 = inlined_call_operand.vmem [shape: f32[8,1,1], index: 7, kind: input, shape index: {}]
  %s8 = inlined_call_operand.vmem [shape: f32[32,96], index: 8, kind: input, shape index: {}]
  %s9 = inlined_call_operand.vmem [shape: f32[32,32], index: 9, kind: input, shape index: {}]
  %s10 = inlined_call_operand.hbm [shape: f32[2,1,4], index: 10, kind: output, shape index: {}]
  %s11 = sld [smem:[#allocation0]]
  $region81: #{tpu_custom_call.1} parent=0
    _
  %s13 = ssub.s32 1, %s11
  %s14 = scalar_select 0, %s13, %s11
  $region1: #{tpu_custom_call.1} parent=0
    #allocation2 [shape = 'u8[4096]{0}', space=vmem, size = 0x1000, scoped, tag = 'input window, operand 2']
    #allocation3 [shape = 's32[2]{0}', space=sflag, size = 0x8, scoped, tag = 'scoped memory for tpu_custom_call.1']
    #allocation4 [shape = 's32[2]{0}', space=sflag, size = 0x8, scoped, tag = 'scoped memory for tpu_custom_call.1']
    #allocation5 [shape = 'u8[4096]{0}', space=vmem, size = 0x1000, scoped, tag = 'input window, operand 3']
    #allocation6 [shape = 's32[2]{0}', space=sflag, size = 0x8, scoped, tag = 'scoped memory for tpu_custom_call.1']
    #allocation7 [shape = 'u8[1024]{0}', space=vmem, size = 0x400, scoped, tag = 'output window, operand 0']
    %15 = vsyncpa [#allocation3], 0
    %s16 = scalar_lea.sflag [#allocation3], 1
    %17 = vsyncpa %s16, 0
    %18 = vsyncpa [#allocation6], 0
    %s19 = scalar_lea.sflag [#allocation6], 1
    %20 = vsyncpa %s19, 0
    %21 = vsyncpa [#allocation4], 0
    %s22 = scalar_lea.sflag [#allocation4], 1
    %23 = vsyncpa %s22, 0
    loop: start=0, step=1, limit=4
    $region2: #{tpu_custom_call.1} parent=1 // loop_pre_header
      _
    $region3: #{tpu_custom_call.1} parent=1 // loop_header
      %s25 = sphi 0, %s29
      %p26 = scmp.ge.s32.totalorder %s25, 4
      %s35 = sphi 0, %s37
      %s38 = sphi 0, %s35
      %s39 = sphi 0, %s38
      %s55 = sphi 0, %s39
      %s61 = sphi 0, %s63
      %s64 = sphi 0, %s61
      %s65 = sphi 0, %s64
      %s81 = sphi 0, %s65
      %s87 = sphi 0, %s89
      %s90 = sphi 0, %s87
      %s91 = sphi 0, %s90
      %s107 = sphi 0, %s91
      %s113 = sphi 0, %s115
      %s116 = sphi 0, %s113
      %s117 = sphi 0, %s116
      %s133 = sphi 0, %s117
      %s139 = sphi 0, %s141
      %s142 = sphi 0, %s139
      %s143 = sphi 0, %s142
      %s159 = sphi 0, %s143
      %s165 = sphi 0, %s167
      %s168 = sphi 0, %s165
      %s169 = sphi 0, %s168
      %s185 = sphi 0, %s169
      %s191 = sphi 0, %s193
      %s194 = sphi 0, %s191
      %s195 = sphi 0, %s194
      %s211 = sphi 0, %s195
      %s217 = sphi 0, %s219
      %s220 = sphi 0, %s217
      %s221 = sphi 0, %s220
      %s237 = sphi 0, %s221
      %s241 = sphi 0, %s241
      %s243 = sphi 0, %s241
      %s244 = sphi 0, %s243
      %s258 = sphi 0, %s244
      %s262 = sphi 0, %s262
      %s264 = sphi 0, %s262
      %s265 = sphi 0, %s264
      %s279 = sphi 0, %s265
      %s285 = sphi 0, %s287
      %s288 = sphi 0, %s285
      %s289 = sphi 0, %s288
      %s305 = sphi 0, %s289
    $region4: #{tpu_custom_call.1} parent=1 // loop_header_branch
      %28 = sbr.rel (%p26) target = $region8
    $region5: #{tpu_custom_call.1} parent=1 // loop_body
      %s30 = ssub.s32 %s25, 1
      %s31 = ssub.s32 %s25, 2
      %s32 = sadd.s32 %s25, 1
      %s33 = ssub.s32 %s25, %s32
      %p34 = scmp.eq.s32.totalorder %s33, 0
      %s36 = sadd.s32 %s35, 1
      %s37 = scalar_select %p34, %s35, %s36
      %p40 = pneg %p34
      %p41 = scmp.eq.s32.totalorder %s25, 1
      %p42 = por %p40, %p41
      %p43 = scmp.ne.s32.totalorder %s35, %s38
      %p44 = scmp.eq.s32.totalorder %s25, 0
      %p45 = por %p43, %p44
      %p46 = scmp.ne.s32.totalorder %s35, %s38
      %p47 = scmp.eq.s32.totalorder %s30, 1
      %p48 = por %p46, %p47
      %p49 = scmp.ne.s32.totalorder %s38, %s39
      %p50 = scmp.eq.s32.totalorder %s30, 0
      %p51 = por %p49, %p50
      %p52 = scmp.ne.s32.totalorder %s38, %s39
      %p53 = scmp.eq.s32.totalorder %s31, 1
      %p54 = por %p52, %p53
      %p56 = scmp.ne.s32.totalorder %s39, %s55
      %p57 = scmp.eq.s32.totalorder %s31, 0
      %p58 = por %p56, %p57
      %s59 = ssub.s32 %s25, %s32
      %p60 = scmp.eq.s32.totalorder %s59, 0
      %s62 = sadd.s32 %s61, 1
      %s63 = scalar_select %p60, %s61, %s62
      %p66 = pneg %p60
      %p67 = scmp.eq.s32.totalorder %s25, 1
      %p68 = por %p66, %p67
      %p69 = scmp.ne.s32.totalorder %s61, %s64
      %p70 = scmp.eq.s32.totalorder %s25, 0
      %p71 = por %p69, %p70
      %p72 = scmp.ne.s32.totalorder %s61, %s64
      %p73 = scmp.eq.s32.totalorder %s30, 1
      %p74 = por %p72, %p73
      %p75 = scmp.ne.s32.totalorder %s64, %s65
      %p76 = scmp.eq.s32.totalorder %s30, 0
      %p77 = por %p75, %p76
      %p78 = scmp.ne.s32.totalorder %s64, %s65
      %p79 = scmp.eq.s32.totalorder %s31, 1
      %p80 = por %p78, %p79
      %p82 = scmp.ne.s32.totalorder %s65, %s81
      %p83 = scmp.eq.s32.totalorder %s31, 0
      %p84 = por %p82, %p83
      %s85 = ssub.s32 %s25, %s32
      %p86 = scmp.eq.s32.totalorder %s85, 0
      %s88 = sadd.s32 %s87, 1
      %s89 = scalar_select %p86, %s87, %s88
      %p92 = pneg %p86
      %p93 = scmp.eq.s32.totalorder %s25, 1
      %p94 = por %p92, %p93
      %p95 = scmp.ne.s32.totalorder %s87, %s90
      %p96 = scmp.eq.s32.totalorder %s25, 0
      %p97 = por %p95, %p96
      %p98 = scmp.ne.s32.totalorder %s87, %s90
      %p99 = scmp.eq.s32.totalorder %s30, 1
      %p100 = por %p98, %p99
      %p101 = scmp.ne.s32.totalorder %s90, %s91
      %p102 = scmp.eq.s32.totalorder %s30, 0
      %p103 = por %p101, %p102
      %p104 = scmp.ne.s32.totalorder %s90, %s91
      %p105 = scmp.eq.s32.totalorder %s31, 1
      %p106 = por %p104, %p105
      %p108 = scmp.ne.s32.totalorder %s91, %s107
      %p109 = scmp.eq.s32.totalorder %s31, 0
      %p110 = por %p108, %p109
      %s111 = ssub.s32 %s25, %s32
      %p112 = scmp.eq.s32.totalorder %s111, 0
      %s114 = sadd.s32 %s113, 1
      %s115 = scalar_select %p112, %s113, %s114
      %p118 = pneg %p112
      %p119 = scmp.eq.s32.totalorder %s25, 1
      %p120 = por %p118, %p119
      %p121 = scmp.ne.s32.totalorder %s113, %s116
      %p122 = scmp.eq.s32.totalorder %s25, 0
      %p123 = por %p121, %p122
      %p124 = scmp.ne.s32.totalorder %s113, %s116
      %p125 = scmp.eq.s32.totalorder %s30, 1
      %p126 = por %p124, %p125
      %p127 = scmp.ne.s32.totalorder %s116, %s117
      %p128 = scmp.eq.s32.totalorder %s30, 0
      %p129 = por %p127, %p128
      %p130 = scmp.ne.s32.totalorder %s116, %s117
      %p131 = scmp.eq.s32.totalorder %s31, 1
      %p132 = por %p130, %p131
      %p134 = scmp.ne.s32.totalorder %s117, %s133
      %p135 = scmp.eq.s32.totalorder %s31, 0
      %p136 = por %p134, %p135
      %s137 = ssub.s32 %s25, %s32
      %p138 = scmp.eq.s32.totalorder %s137, 0
      %s140 = sadd.s32 %s139, 1
      %s141 = scalar_select %p138, %s139, %s140
      %p144 = pneg %p138
      %p145 = scmp.eq.s32.totalorder %s25, 1
      %p146 = por %p144, %p145
      %p147 = scmp.ne.s32.totalorder %s139, %s142
      %p148 = scmp.eq.s32.totalorder %s25, 0
      %p149 = por %p147, %p148
      %p150 = scmp.ne.s32.totalorder %s139, %s142
      %p151 = scmp.eq.s32.totalorder %s30, 1
      %p152 = por %p150, %p151
      %p153 = scmp.ne.s32.totalorder %s142, %s143
      %p154 = scmp.eq.s32.totalorder %s30, 0
      %p155 = por %p153, %p154
      %p156 = scmp.ne.s32.totalorder %s142, %s143
      %p157 = scmp.eq.s32.totalorder %s31, 1
      %p158 = por %p156, %p157
      %p160 = scmp.ne.s32.totalorder %s143, %s159
      %p161 = scmp.eq.s32.totalorder %s31, 0
      %p162 = por %p160, %p161
      %s163 = ssub.s32 %s25, %s32
      %p164 = scmp.eq.s32.totalorder %s163, 0
      %s166 = sadd.s32 %s165, 1
      %s167 = scalar_select %p164, %s165, %s166
      %p170 = pneg %p164
      %p171 = scmp.eq.s32.totalorder %s25, 1
      %p172 = por %p170, %p171
      %p173 = scmp.ne.s32.totalorder %s165, %s168
      %p174 = scmp.eq.s32.totalorder %s25, 0
      %p175 = por %p173, %p174
      %p176 = scmp.ne.s32.totalorder %s165, %s168
      %p177 = scmp.eq.s32.totalorder %s30, 1
      %p178 = por %p176, %p177
      %p179 = scmp.ne.s32.totalorder %s168, %s169
      %p180 = scmp.eq.s32.totalorder %s30, 0
      %p181 = por %p179, %p180
      %p182 = scmp.ne.s32.totalorder %s168, %s169
      %p183 = scmp.eq.s32.totalorder %s31, 1
      %p184 = por %p182, %p183
      %p186 = scmp.ne.s32.totalorder %s169, %s185
      %p187 = scmp.eq.s32.totalorder %s31, 0
      %p188 = por %p186, %p187
      %s189 = ssub.s32 %s25, %s32
      %p190 = scmp.eq.s32.totalorder %s189, 0
      %s192 = sadd.s32 %s191, 1
      %s193 = scalar_select %p190, %s191, %s192
      %p196 = pneg %p190
      %p197 = scmp.eq.s32.totalorder %s25, 1
      %p198 = por %p196, %p197
      %p199 = scmp.ne.s32.totalorder %s191, %s194
      %p200 = scmp.eq.s32.totalorder %s25, 0
      %p201 = por %p199, %p200
      %p202 = scmp.ne.s32.totalorder %s191, %s194
      %p203 = scmp.eq.s32.totalorder %s30, 1
      %p204 = por %p202, %p203
      %p205 = scmp.ne.s32.totalorder %s194, %s195
      %p206 = scmp.eq.s32.totalorder %s30, 0
      %p207 = por %p205, %p206
      %p208 = scmp.ne.s32.totalorder %s194, %s195
      %p209 = scmp.eq.s32.totalorder %s31, 1
      %p210 = por %p208, %p209
      %p212 = scmp.ne.s32.totalorder %s195, %s211
      %p213 = scmp.eq.s32.totalorder %s31, 0
      %p214 = por %p212, %p213
      %s215 = ssub.s32 %s25, %s32
      %p216 = scmp.eq.s32.totalorder %s215, 0
      %s218 = sadd.s32 %s217, 1
      %s219 = scalar_select %p216, %s217, %s218
      %p222 = pneg %p216
      %p223 = scmp.eq.s32.totalorder %s25, 1
      %p224 = por %p222, %p223
      %p225 = scmp.ne.s32.totalorder %s217, %s220
      %p226 = scmp.eq.s32.totalorder %s25, 0
      %p227 = por %p225, %p226
      %p228 = scmp.ne.s32.totalorder %s217, %s220
      %p229 = scmp.eq.s32.totalorder %s30, 1
      %p230 = por %p228, %p229
      %p231 = scmp.ne.s32.totalorder %s220, %s221
      %p232 = scmp.eq.s32.totalorder %s30, 0
      %p233 = por %p231, %p232
      %p234 = scmp.ne.s32.totalorder %s220, %s221
      %p235 = scmp.eq.s32.totalorder %s31, 1
      %p236 = por %p234, %p235
      %p238 = scmp.ne.s32.totalorder %s221, %s237
      %p239 = scmp.eq.s32.totalorder %s31, 0
      %p240 = por %p238, %p239
      %s242 = sadd.s32 %s241, 1
      %p245 = scmp.eq.s32.totalorder %s25, 1
      %p246 = scmp.ne.s32.totalorder %s241, %s243
      %p247 = scmp.eq.s32.totalorder %s25, 0
      %p248 = por %p246, %p247
      %p249 = scmp.ne.s32.totalorder %s241, %s243
      %p250 = scmp.eq.s32.totalorder %s30, 1
      %p251 = por %p249, %p250
      %p252 = scmp.ne.s32.totalorder %s243, %s244
      %p253 = scmp.eq.s32.totalorder %s30, 0
      %p254 = por %p252, %p253
      %p255 = scmp.ne.s32.totalorder %s243, %s244
      %p256 = scmp.eq.s32.totalorder %s31, 1
      %p257 = por %p255, %p256
      %p259 = scmp.ne.s32.totalorder %s244, %s258
      %p260 = scmp.eq.s32.totalorder %s31, 0
      %p261 = por %p259, %p260
      %s263 = sadd.s32 %s262, 1
      %p266 = scmp.eq.s32.totalorder %s25, 1
      %p267 = scmp.ne.s32.totalorder %s262, %s264
      %p268 = scmp.eq.s32.totalorder %s25, 0
      %p269 = por %p267, %p268
      %p270 = scmp.ne.s32.totalorder %s262, %s264
      %p271 = scmp.eq.s32.totalorder %s30, 1
      %p272 = por %p270, %p271
      %p273 = scmp.ne.s32.totalorder %s264, %s265
      %p274 = scmp.eq.s32.totalorder %s30, 0
      %p275 = por %p273, %p274
      %p276 = scmp.ne.s32.totalorder %s264, %s265
      %p277 = scmp.eq.s32.totalorder %s31, 1
      %p278 = por %p276, %p277
      %p280 = scmp.ne.s32.totalorder %s265, %s279
      %p281 = scmp.eq.s32.totalorder %s31, 0
      %p282 = por %p280, %p281
      %s283 = ssub.s32 %s25, %s32
      %p284 = scmp.eq.s32.totalorder %s283, 0
      %s286 = sadd.s32 %s285, 1
      %s287 = scalar_select %p284, %s285, %s286
      %p290 = pneg %p284
      %p291 = scmp.eq.s32.totalorder %s25, 1
      %p292 = por %p290, %p291
      %p293 = scmp.ne.s32.totalorder %s285, %s288
      %p294 = scmp.eq.s32.totalorder %s25, 0
      %p295 = por %p293, %p294
      %p296 = scmp.ne.s32.totalorder %s285, %s288
      %p297 = scmp.eq.s32.totalorder %s30, 1
      %p298 = por %p296, %p297
      %p299 = scmp.ne.s32.totalorder %s288, %s289
      %p300 = scmp.eq.s32.totalorder %s30, 0
      %p301 = por %p299, %p300
      %p302 = scmp.ne.s32.totalorder %s288, %s289
      %p303 = scmp.eq.s32.totalorder %s31, 1
      %p304 = por %p302, %p303
      %p306 = scmp.ne.s32.totalorder %s289, %s305
      %p307 = scmp.eq.s32.totalorder %s31, 0
      %p308 = por %p306, %p307
      %p309 = scmp.le.s32.totalorder 1, %s25
      %p310 = scmp.lt.s32.totalorder %s25, 3
      %p311 = pnand %p309, %p310
      %p312 = pneg %p311
      // Predicated region
      $region9: #{tpu_custom_call.1} parent=5 // pred_check
        _
      $region10: #{tpu_custom_call.1} parent=5 // pred_check_branch
        %314 = sbr.rel (%p311) target = $region12
      $region11: #{tpu_custom_call.1} parent=5 // pred_region
        %s315 = ssub.s32 %s25, 1
        // Predicated region
        $region13: #{tpu_custom_call.1} parent=11 // pred_check
          %p316 = pneg %p254
        $region14: #{tpu_custom_call.1} parent=11 // pred_check_branch
          %318 = sbr.rel (%p316) target = $region16
        $region15: #{tpu_custom_call.1} parent=11 // pred_region
          _
        $region16: #{tpu_custom_call.1} parent=11 // pred_fallthru
          _
        // Predicated region
        $region17: #{tpu_custom_call.1} parent=11 // pred_check
          %p319 = pneg %p275
        $region18: #{tpu_custom_call.1} parent=11 // pred_check_branch
          %321 = sbr.rel (%p319) target = $region20
        $region19: #{tpu_custom_call.1} parent=11 // pred_region
          _
        $region20: #{tpu_custom_call.1} parent=11 // pred_fallthru
          _
      $region12: #{tpu_custom_call.1} parent=5 // pred_fallthru
        _
      %p322 = scmp.lt.s32.totalorder %s25, 2
      // Predicated region
      $region21: #{tpu_custom_call.1} parent=5 // pred_check
        %p323 = pneg %p322
      $region22: #{tpu_custom_call.1} parent=5 // pred_check_branch
        %325 = sbr.rel (%p323) target = $region24
      $region23: #{tpu_custom_call.1} parent=5 // pred_region
        // Predicated region
        $region25: #{tpu_custom_call.1} parent=23 // pred_check
          %p326 = pneg %p45
        $region26: #{tpu_custom_call.1} parent=23 // pred_check_branch
          %328 = sbr.rel (%p326) target = $region28
        $region27: #{tpu_custom_call.1} parent=23 // pred_region
          %s329 = smul.u32 4, %s25
          %p330 = scmp.lt.s32.totalorder %s329, 7
          %s331 = scalar_select %p330, %s329, 7
          %s332 = smul.addr %s331, 8
          %s333 = scalar_lea.vmem %s0, %s332
          %s334 = smul.u32 4, %s25
        $region28: #{tpu_custom_call.1} parent=23 // pred_fallthru
          _
        // Predicated region
        $region29: #{tpu_custom_call.1} parent=23 // pred_check
          %p335 = pneg %p71
        $region30: #{tpu_custom_call.1} parent=23 // pred_check_branch
          %337 = sbr.rel (%p335) target = $region32
        $region31: #{tpu_custom_call.1} parent=23 // pred_region
          %s338 = smul.u32 4, %s25
          %p339 = scmp.lt.s32.totalorder %s338, 7
          %s340 = scalar_select %p339, %s338, 7
          %s341 = smul.addr %s340, 8
          %s342 = scalar_lea.vmem %s1, %s341
          %s343 = smul.u32 4, %s25
        $region32: #{tpu_custom_call.1} parent=23 // pred_fallthru
          _
        // Predicated region
        $region33: #{tpu_custom_call.1} parent=23 // pred_check
          %p344 = pneg %p97
        $region34: #{tpu_custom_call.1} parent=23 // pred_check_branch
          %346 = sbr.rel (%p344) target = $region36
        $region35: #{tpu_custom_call.1} parent=23 // pred_region
          %s347 = sand.u32 %s87, 1
          %s348 = scalar_lea.sflag [#allocation3], %s347
          %s349 = sand.u32 %s87, 1
          %s350 = smul.addr %s349, 4
          %s351 = scalar_lea.vmem [#allocation2], %s350
          %s352 = smul.u32 4, %s25
          %s354 = ssub.s32 64, 64
          %355 = vsyncadd %s348, %s354
          %s356 = smul.addr %s352, 16
          %s357 = scalar_lea.hbm %s2, %s356
          %s358 = sshll.u32 %s351, 4
          %s359 = int_to_ptr.vmem [resolvable:$true] %s358
          %364 = dma.hbm_to_vmem [thread:$0]  %s357, 64, %s359, %s348, 16, 16, 1
        $region36: #{tpu_custom_call.1} parent=23 // pred_fallthru
          _
        // Predicated region
        $region37: #{tpu_custom_call.1} parent=23 // pred_check
          %p365 = pneg %p123
        $region38: #{tpu_custom_call.1} parent=23 // pred_check_branch
          %367 = sbr.rel (%p365) target = $region40
        $region39: #{tpu_custom_call.1} parent=23 // pred_region
          %s368 = sand.u32 %s113, 1
          %s369 = scalar_lea.sflag [#allocation6], %s368
          %s370 = sand.u32 %s113, 1
          %s371 = smul.addr %s370, 4
          %s372 = scalar_lea.vmem [#allocation5], %s371
          %s373 = smul.u32 4, %s25
          %s375 = ssub.s32 64, 64
          %376 = vsyncadd %s369, %s375
          %s377 = smul.addr %s373, 16
          %s378 = scalar_lea.hbm %s3, %s377
          %s379 = sshll.u32 %s372, 4
          %s380 = int_to_ptr.vmem [resolvable:$true] %s379
          %385 = dma.hbm_to_vmem [thread:$0]  %s378, 64, %s380, %s369, 16, 16, 1
        $region40: #{tpu_custom_call.1} parent=23 // pred_fallthru
          _
        // Predicated region
        $region41: #{tpu_custom_call.1} parent=23 // pred_check
          %p386 = pneg %p149
        $region42: #{tpu_custom_call.1} parent=23 // pred_check_branch
          %388 = sbr.rel (%p386) target = $region44
        $region43: #{tpu_custom_call.1} parent=23 // pred_region
          %s389 = smul.u32 4, %s25
          %p390 = scmp.lt.s32.totalorder %s389, 7
          %s391 = scalar_select %p390, %s389, 7
          %s392 = smul.addr %s391, 8
          %s393 = scalar_lea.vmem %s4, %s392
          %s394 = smul.u32 4, %s25
        $region44: #{tpu_custom_call.1} parent=23 // pred_fallthru
          _
        // Predicated region
        $region45: #{tpu_custom_call.1} parent=23 // pred_check
          %p395 = pneg %p175
        $region46: #{tpu_custom_call.1} parent=23 // pred_check_branch
          %397 = sbr.rel (%p395) target = $region48
        $region47: #{tpu_custom_call.1} parent=23 // pred_region
          %s398 = smul.u32 4, %s25
          %p399 = scmp.lt.s32.totalorder %s398, 7
          %s400 = scalar_select %p399, %s398, 7
          %s401 = smul.addr %s400, 8
          %s402 = scalar_lea.vmem %s5, %s401
          %s403 = smul.u32 4, %s25
        $region48: #{tpu_custom_call.1} parent=23 // pred_fallthru
          _
        // Predicated region
        $region49: #{tpu_custom_call.1} parent=23 // pred_check
          %p404 = pneg %p201
        $region50: #{tpu_custom_call.1} parent=23 // pred_check_branch
          %406 = sbr.rel (%p404) target = $region52
        $region51: #{tpu_custom_call.1} parent=23 // pred_region
          %s407 = smul.u32 4, %s25
          %p408 = scmp.lt.s32.totalorder %s407, 7
          %s409 = scalar_select %p408, %s407, 7
          %s410 = scalar_lea.vmem %s6, %s409
          %s411 = smul.u32 4, %s25
        $region52: #{tpu_custom_call.1} parent=23 // pred_fallthru
          _
        // Predicated region
        $region53: #{tpu_custom_call.1} parent=23 // pred_check
          %p412 = pneg %p227
        $region54: #{tpu_custom_call.1} parent=23 // pred_check_branch
          %414 = sbr.rel (%p412) target = $region56
        $region55: #{tpu_custom_call.1} parent=23 // pred_region
          %s415 = smul.u32 4, %s25
          %p416 = scmp.lt.s32.totalorder %s415, 7
          %s417 = scalar_select %p416, %s415, 7
          %s418 = scalar_lea.vmem %s7, %s417
          %s419 = smul.u32 4, %s25
        $region56: #{tpu_custom_call.1} parent=23 // pred_fallthru
          _
      $region24: #{tpu_custom_call.1} parent=5 // pred_fallthru
        _
      %p420 = scmp.le.s32.totalorder 1, %s25
      %p421 = scmp.lt.s32.totalorder %s25, 3
      %p422 = pnand %p420, %p421
      %p423 = pneg %p422
      // Predicated region
      $region57: #{tpu_custom_call.1} parent=5 // pred_check
        _
      $region58: #{tpu_custom_call.1} parent=5 // pred_check_branch
        %425 = sbr.rel (%p422) target = $region60
      $region59: #{tpu_custom_call.1} parent=5 // pred_region
        %s426 = ssub.s32 %s25, 1
        %s427 = sand.u32 %s90, 1
        %s428 = scalar_lea.sflag [#allocation3], %s427
        %s429 = sand.u32 %s90, 1
        %s430 = smul.addr %s429, 4
        %s431 = scalar_lea.vmem [#allocation2], %s430
        // Predicated region
        $region61: #{tpu_custom_call.1} parent=59 // pred_check
          %p432 = pneg %p103
        $region62: #{tpu_custom_call.1} parent=59 // pred_check_branch
          %434 = sbr.rel (%p432) target = $region64
        $region63: #{tpu_custom_call.1} parent=59 // pred_region
          %435 = dma.done %s428, 64
        $region64: #{tpu_custom_call.1} parent=59 // pred_fallthru
          _
        %s436 = sand.u32 %s116, 1
        %s437 = scalar_lea.sflag [#allocation6], %s436
        %s438 = sand.u32 %s116, 1
        %s439 = smul.addr %s438, 4
        %s440 = scalar_lea.vmem [#allocation5], %s439
        // Predicated region
        $region65: #{tpu_custom_call.1} parent=59 // pred_check
          %p441 = pneg %p129
        $region66: #{tpu_custom_call.1} parent=59 // pred_check_branch
          %443 = sbr.rel (%p441) target = $region68
        $region67: #{tpu_custom_call.1} parent=59 // pred_region
          %444 = dma.done %s437, 64
        $region68: #{tpu_custom_call.1} parent=59 // pred_fallthru
          _
        %s445 = smul.u32 4, %s30
        %p446 = scmp.lt.s32.totalorder %s445, 7
        %s447 = scalar_select %p446, %s445, 7
        %s448 = smul.addr %s447, 8
        %s449 = scalar_lea.vmem %s0, %s448
        %p450 = pneg %p51
        %p451 = pneg %p48
        %s452 = smul.u32 4, %s30
        %p453 = scmp.lt.s32.totalorder %s452, 7
        %s454 = scalar_select %p453, %s452, 7
        %s455 = smul.addr %s454, 8
        %s456 = scalar_lea.vmem %s1, %s455
        %p457 = pneg %p77
        %p458 = pneg %p74
        %s459 = sand.u32 %s90, 1
        %s460 = scalar_lea.sflag [#allocation3], %s459
        %s461 = sand.u32 %s90, 1
        %s462 = smul.addr %s461, 4
        %s463 = scalar_lea.vmem [#allocation2], %s462
        %p464 = pneg %p103
        %p465 = pneg %p100
        %s466 = sand.u32 %s116, 1
        %s467 = scalar_lea.sflag [#allocation6], %s466
        %s468 = sand.u32 %s116, 1
        %s469 = smul.addr %s468, 4
        %s470 = scalar_lea.vmem [#allocation5], %s469
        %p471 = pneg %p129
        %p472 = pneg %p126
        %s473 = smul.u32 4, %s30
        %p474 = scmp.lt.s32.totalorder %s473, 7
        %s475 = scalar_select %p474, %s473, 7
        %s476 = smul.addr %s475, 8
        %s477 = scalar_lea.vmem %s4, %s476
        %p478 = pneg %p155
        %p479 = pneg %p152
        %s480 = smul.u32 4, %s30
        %p481 = scmp.lt.s32.totalorder %s480, 7
        %s482 = scalar_select %p481, %s480, 7
        %s483 = smul.addr %s482, 8
        %s484 = scalar_lea.vmem %s5, %s483
        %p485 = pneg %p181
        %p486 = pneg %p178
        %s487 = smul.u32 4, %s30
        %p488 = scmp.lt.s32.totalorder %s487, 7
        %s489 = scalar_select %p488, %s487, 7
        %s490 = scalar_lea.vmem %s6, %s489
        %p491 = pneg %p207
        %p492 = pneg %p204
        %s493 = smul.u32 4, %s30
        %p494 = scmp.lt.s32.totalorder %s493, 7
        %s495 = scalar_select %p494, %s493, 7
        %s496 = scalar_lea.vmem %s7, %s495
        %p497 = pneg %p233
        %p498 = pneg %p230
        %p499 = pneg %p254
        %p500 = pneg %p251
        %p501 = pneg %p275
        %p502 = pneg %p272
        %p503 = pneg %p301
        %p504 = pneg %p298
        %s505 = sand.u32 %s288, 1
        %s506 = scalar_lea.sflag [#allocation4], %s505
        %s507 = sand.u32 %s288, 1
        %s508 = scalar_lea.vmem [#allocation7], %s507
        %s509 = smul.u32 4, %s30
        %p510 = scmp.lt.s32.totalorder %s509, 7
        %s511 = scalar_select %p510, %s509, 7
        %s512 = smul.addr %s511, 8
        %s513 = scalar_lea.vmem %s0, %s512
        %s514 = smul.u32 4, %s30
        %s515 = smul.u32 4, %s30
        %p516 = scmp.lt.s32.totalorder %s515, 7
        %s517 = scalar_select %p516, %s515, 7
        %s518 = smul.addr %s517, 8
        %s519 = scalar_lea.vmem %s1, %s518
        %s520 = smul.u32 4, %s30
        %s521 = smul.u32 4, %s30
        %s522 = smul.u32 4, %s30
        %s523 = smul.u32 4, %s30
        %p524 = scmp.lt.s32.totalorder %s523, 7
        %s525 = scalar_select %p524, %s523, 7
        %s526 = smul.addr %s525, 8
        %s527 = scalar_lea.vmem %s4, %s526
        %s528 = smul.u32 4, %s30
        %s529 = smul.u32 4, %s30
        %p530 = scmp.lt.s32.totalorder %s529, 7
        %s531 = scalar_select %p530, %s529, 7
        %s532 = smul.addr %s531, 8
        %s533 = scalar_lea.vmem %s5, %s532
        %s534 = smul.u32 4, %s30
        %s535 = smul.u32 4, %s30
        %p536 = scmp.lt.s32.totalorder %s535, 7
        %s537 = scalar_select %p536, %s535, 7
        %s538 = scalar_lea.vmem %s6, %s537
        %s539 = smul.u32 4, %s30
        %s540 = smul.u32 4, %s30
        %p541 = scmp.lt.s32.totalorder %s540, 7
        %s542 = scalar_select %p541, %s540, 7
        %s543 = scalar_lea.vmem %s7, %s542
        %s544 = smul.u32 4, %s30
        %v545 = vld [vmem:[%s8] sm:$0xff]
        %v546 = vld [vmem:[%s8 + $0x8] sm:$0xff]
        %v547 = vld [vmem:[%s8 + $0x10] sm:$0xff]
        %v548 = vld [vmem:[%s8 + $0x18] sm:$0xff]
        %v549 = vld [vmem:[%s9] sm:$0xff]
        %v550 = vld [vmem:[%s9 + $0x8] sm:$0xff]
        %v551 = vld [vmem:[%s9 + $0x10] sm:$0xff]
        %v552 = vld [vmem:[%s9 + $0x18] sm:$0xff]
        %v553 = vld [vmem:[%s513] sm:$0xff]
        %v554 = vld [vmem:[%s513 + $0x8] sm:$0xff]
        %v555 = vld [vmem:[%s513 + $0x10] sm:$0xff]
        %v556 = vld [vmem:[%s513 + $0x18] sm:$0xff]
        %vm557 = vcmask 261120
        %v559 = vsel %vm557, %v553, 0
        %v562 = vsel %vm557, %v554, 0
        %v565 = vsel %vm557, %v555, 0
        %v568 = vsel %vm557, %v556, 0
        %570 = vmatprep.subr.mxu0 0.0
        %571 = vmatpush1.msra.mxu0 %v545
        %572 = vmatprep.subr.mxu0 0.0
        %573 = vmatpush1.msra.mxu0 %v546
        %574 = vmatprep.subr.mxu0 0.0
        %575 = vmatpush1.msra.mxu0 %v547
        %576 = vmatprep.subr.mxu0 0.0
        %577 = vmatpush1.msra.mxu0 %v548
        %578 = vmatprep.subr.mxu0 0.0
        %579 = vmatpush1.msra.mxu0 0.0
        %580 = vmatprep.subr.mxu0 0.0
        %581 = vmatpush1.msra.mxu0 0.0
        %582 = vmatprep.subr.mxu0 0.0
        %583 = vmatpush1.msra.mxu0 0.0
        %584 = vmatprep.subr.mxu0 0.0
        %585 = vmatpush1.msra.mxu0 0.0
        %586 = vmatprep.subr.mxu0 0.0
        %587 = vmatpush1.msra.mxu0 0.0
        %588 = vmatprep.subr.mxu0 0.0
        %589 = vmatpush1.msra.mxu0 0.0
        %590 = vmatprep.subr.mxu0 0.0
        %591 = vmatpush1.msra.mxu0 0.0
        %592 = vmatprep.subr.mxu0 0.0
        %593 = vmatpush1.msra.mxu0 0.0
        %594 = vmatprep.subr.mxu0 0.0
        %595 = vmatpush1.msra.mxu0 0.0
        %596 = vmatprep.subr.mxu0 0.0
        %597 = vmatpush1.msra.mxu0 0.0
        %598 = vmatprep.subr.mxu0 0.0
        %599 = vmatpush1.msra.mxu0 0.0
        %600 = vmatprep.subr.mxu0 0.0
        %601 = vmatpush1.msra.mxu0 0.0
        %602 = vmatprep.subr.mxu0 0.0
        %603 = vmatpush1.msra.mxu0 0.0
        %604 = vmatprep.subr.mxu0 0.0
        %605 = vmatpush1.msra.mxu0 0.0
        %606 = vmatprep.subr.mxu0 0.0
        %607 = vmatpush1.msra.mxu0 0.0
        %608 = vmatprep.subr.mxu0 0.0
        %609 = vmatpush1.msra.mxu0 0.0
        %610 = vmatprep.subr.mxu0 0.0
        %611 = vmatpush1.msra.mxu0 0.0
        %612 = vmatprep.subr.mxu0 0.0
        %613 = vmatpush1.msra.mxu0 0.0
        %614 = vmatprep.subr.mxu0 0.0
        %615 = vmatpush1.msra.mxu0 0.0
        %616 = vmatprep.subr.mxu0 0.0
        %617 = vmatpush1.msra.mxu0 0.0
        %618 = vmatprep.subr.mxu0 0.0
        %619 = vmatpush1.msra.mxu0 0.0
        %620 = vmatprep.subr.mxu0 0.0
        %621 = vmatpush1.msra.mxu0 0.0
        %622 = vmatprep.subr.mxu0 0.0
        %623 = vmatpush1.msra.mxu0 0.0
        %624 = vmatprep.subr.mxu0 0.0
        %625 = vmatpush1.msra.mxu0 0.0
        %626 = vmatprep.subr.mxu0 0.0
        %627 = vmatpush1.msra.mxu0 0.0
        %628 = vmatprep.subr.mxu0 0.0
        %629 = vmatpush1.msra.mxu0 0.0
        %630 = vmatprep.subr.mxu0 0.0
        %631 = vmatpush1.msra.mxu0 0.0
        %632 = vmatprep.subr.mxu0 0.0
        %633 = vmatpush1.msra.mxu0 0.0
        %634 = vmatprep.mubr.f32.mxu0 0.0
        %635 = vmatmul.mubr.f32.gmra.mrb[0].mxu0 %v559
        %v636 = vpop.f32.mrb[0].mxu0
        %v637 = vadd.f32 0.0, %v636
        %v638 = vpop.f32.mrb[0].mxu0
        %639 = vmatprep.mubr.f32.mxu0 0.0
        %640 = vmatmul.mubr.f32.gmra.mrb[0].mxu0 %v562
        %v641 = vpop.f32.mrb[0].mxu0
        %v642 = vadd.f32 0.0, %v641
        %v643 = vpop.f32.mrb[0].mxu0
        %644 = vmatprep.mubr.f32.mxu0 0.0
        %645 = vmatmul.mubr.f32.gmra.mrb[0].mxu0 %v565
        %v646 = vpop.f32.mrb[0].mxu0
        %v647 = vadd.f32 0.0, %v646
        %v648 = vpop.f32.mrb[0].mxu0
        %649 = vmatprep.mubr.f32.mxu0 0.0
        %650 = vmatmul.mubr.f32.gmra.mrb[0].mxu0 %v568
        %v651 = vpop.f32.mrb[0].mxu0
        %v652 = vadd.f32 0.0, %v651
        %v653 = vpop.f32.mrb[0].mxu0
        %654 = vdwg.mxu0
        %v655 = vld [vmem:[%s519] sm:$0xff]
        %v656 = vld [vmem:[%s519 + $0x8] sm:$0xff]
        %v657 = vld [vmem:[%s519 + $0x10] sm:$0xff]
        %v658 = vld [vmem:[%s519 + $0x18] sm:$0xff]
        %v660 = vsel %vm557, %v655, 0
        %v663 = vsel %vm557, %v656, 0
        %v666 = vsel %vm557, %v657, 0
        %v669 = vsel %vm557, %v658, 0
        %671 = vmatprep.subr.mxu0 0.0
        %672 = vmatpush1.msra.mxu0 %v545
        %673 = vmatprep.subr.mxu0 0.0
        %674 = vmatpush1.msra.mxu0 %v546
        %675 = vmatprep.subr.mxu0 0.0
        %676 = vmatpush1.msra.mxu0 %v547
        %677 = vmatprep.subr.mxu0 0.0
        %678 = vmatpush1.msra.mxu0 %v548
        %679 = vmatprep.subr.mxu0 0.0
        %680 = vmatpush1.msra.mxu0 0.0
        %681 = vmatprep.subr.mxu0 0.0
        %682 = vmatpush1.msra.mxu0 0.0
        %683 = vmatprep.subr.mxu0 0.0
        %684 = vmatpush1.msra.mxu0 0.0
        %685 = vmatprep.subr.mxu0 0.0
        %686 = vmatpush1.msra.mxu0 0.0
        %687 = vmatprep.subr.mxu0 0.0
        %688 = vmatpush1.msra.mxu0 0.0
        %689 = vmatprep.subr.mxu0 0.0
        %690 = vmatpush1.msra.mxu0 0.0
        %691 = vmatprep.subr.mxu0 0.0
        %692 = vmatpush1.msra.mxu0 0.0
        %693 = vmatprep.subr.mxu0 0.0
        %694 = vmatpush1.msra.mxu0 0.0
        %695 = vmatprep.subr.mxu0 0.0
        %696 = vmatpush1.msra.mxu0 0.0
        %697 = vmatprep.subr.mxu0 0.0
        %698 = vmatpush1.msra.mxu0 0.0
        %699 = vmatprep.subr.mxu0 0.0
        %700 = vmatpush1.msra.mxu0 0.0
        %701 = vmatprep.subr.mxu0 0.0
        %702 = vmatpush1.msra.mxu0 0.0
        %703 = vmatprep.subr.mxu0 0.0
        %704 = vmatpush1.msra.mxu0 0.0
        %705 = vmatprep.subr.mxu0 0.0
        %706 = vmatpush1.msra.mxu0 0.0
        %707 = vmatprep.subr.mxu0 0.0
        %708 = vmatpush1.msra.mxu0 0.0
        %709 = vmatprep.subr.mxu0 0.0
        %710 = vmatpush1.msra.mxu0 0.0
        %711 = vmatprep.subr.mxu0 0.0
        %712 = vmatpush1.msra.mxu0 0.0
        %713 = vmatprep.subr.mxu0 0.0
        %714 = vmatpush1.msra.mxu0 0.0
        %715 = vmatprep.subr.mxu0 0.0
        %716 = vmatpush1.msra.mxu0 0.0
        %717 = vmatprep.subr.mxu0 0.0
        %718 = vmatpush1.msra.mxu0 0.0
        %719 = vmatprep.subr.mxu0 0.0
        %720 = vmatpush1.msra.mxu0 0.0
        %721 = vmatprep.subr.mxu0 0.0
        %722 = vmatpush1.msra.mxu0 0.0
        %723 = vmatprep.subr.mxu0 0.0
        %724 = vmatpush1.msra.mxu0 0.0
        %725 = vmatprep.subr.mxu0 0.0
        %726 = vmatpush1.msra.mxu0 0.0
        %727 = vmatprep.subr.mxu0 0.0
        %728 = vmatpush1.msra.mxu0 0.0
        %729 = vmatprep.subr.mxu0 0.0
        %730 = vmatpush1.msra.mxu0 0.0
        %731 = vmatprep.subr.mxu0 0.0
        %732 = vmatpush1.msra.mxu0 0.0
        %733 = vmatprep.subr.mxu0 0.0
        %734 = vmatpush1.msra.mxu0 0.0
        %735 = vmatprep.mubr.f32.mxu0 0.0
        %736 = vmatmul.mubr.f32.gmra.mrb[0].mxu0 %v660
        %v737 = vpop.f32.mrb[0].mxu0
        %v738 = vadd.f32 0.0, %v737
        %v739 = vpop.f32.mrb[0].mxu0
        %740 = vmatprep.mubr.f32.mxu0 0.0
        %741 = vmatmul.mubr.f32.gmra.mrb[0].mxu0 %v663
        %v742 = vpop.f32.mrb[0].mxu0
        %v743 = vadd.f32 0.0, %v742
        %v744 = vpop.f32.mrb[0].mxu0
        %745 = vmatprep.mubr.f32.mxu0 0.0
        %746 = vmatmul.mubr.f32.gmra.mrb[0].mxu0 %v666
        %v747 = vpop.f32.mrb[0].mxu0
        %v748 = vadd.f32 0.0, %v747
        %v749 = vpop.f32.mrb[0].mxu0
        %750 = vmatprep.mubr.f32.mxu0 0.0
        %751 = vmatmul.mubr.f32.gmra.mrb[0].mxu0 %v669
        %v752 = vpop.f32.mrb[0].mxu0
        %v753 = vadd.f32 0.0, %v752
        %v754 = vpop.f32.mrb[0].mxu0
        %755 = vdwg.mxu0
        %v756 = vld [vmem:[%s440] sm:$0x1]
        %v757 = vld [vmem:[%s440 + $0x1] sm:$0x1]
        %v758 = vld [vmem:[%s440 + $0x2] sm:$0x1]
        %v759 = vld [vmem:[%s440 + $0x3] sm:$0x1]
        %v760 = vld [vmem:[%s527] sm:$0xff]
        %v761 = vld [vmem:[%s527 + $0x8] sm:$0xff]
        %v762 = vld [vmem:[%s527 + $0x10] sm:$0xff]
        %v763 = vld [vmem:[%s527 + $0x18] sm:$0xff]
        %v764 = vld [vmem:[%s538] sm:$0x1]
        %v765 = vld [vmem:[%s538 + $0x1] sm:$0x1]
        %v766 = vld [vmem:[%s538 + $0x2] sm:$0x1]
        %v767 = vld [vmem:[%s538 + $0x3] sm:$0x1]
        %769 = vrot.lane.b32.xlu0 %v738, 96
        %v770 = vpop.permute.xlu0 %769
        %v772 = vsel %vm557, %v637, 0
        %v774 = vsel %vm557, %v770, 0
        %776 = vmatprep.subr.mxu0 0.0
        %777 = vmatpush1.xpose.msra.mxu0 %v774
        %778 = vmatprep.subr.mxu0 0.0
        %779 = vmatpush1.xpose.msra.mxu0 0.0
        %780 = vmatprep.subr.mxu0 0.0
        %781 = vmatpush1.xpose.msra.mxu0 0.0
        %782 = vmatprep.subr.mxu0 0.0
        %783 = vmatpush1.xpose.msra.mxu0 0.0
        %784 = vmatprep.subr.mxu0 0.0
        %785 = vmatpush1.xpose.msra.mxu0 0.0
        %786 = vmatprep.subr.mxu0 0.0
        %787 = vmatpush1.xpose.msra.mxu0 0.0
        %788 = vmatprep.subr.mxu0 0.0
        %789 = vmatpush1.xpose.msra.mxu0 0.0
        %790 = vmatprep.subr.mxu0 0.0
        %791 = vmatpush1.xpose.msra.mxu0 0.0
        %792 = vmatprep.subr.mxu0 0.0
        %793 = vmatpush1.xpose.msra.mxu0 0.0
        %794 = vmatprep.subr.mxu0 0.0
        %795 = vmatpush1.xpose.msra.mxu0 0.0
        %796 = vmatprep.subr.mxu0 0.0
        %797 = vmatpush1.xpose.msra.mxu0 0.0
        %798 = vmatprep.subr.mxu0 0.0
        %799 = vmatpush1.xpose.msra.mxu0 0.0
        %800 = vmatprep.subr.mxu0 0.0
        %801 = vmatpush1.xpose.msra.mxu0 0.0
        %802 = vmatprep.subr.mxu0 0.0
        %803 = vmatpush1.xpose.msra.mxu0 0.0
        %804 = vmatprep.subr.mxu0 0.0
        %805 = vmatpush1.xpose.msra.mxu0 0.0
        %806 = vmatprep.subr.mxu0 0.0
        %807 = vmatpush1.xpose.msra.mxu0 0.0
        %808 = vmatprep.subr.mxu0 0.0
        %809 = vmatpush1.xpose.msra.mxu0 0.0
        %810 = vmatprep.subr.mxu0 0.0
        %811 = vmatpush1.xpose.msra.mxu0 0.0
        %812 = vmatprep.subr.mxu0 0.0
        %813 = vmatpush1.xpose.msra.mxu0 0.0
        %814 = vmatprep.subr.mxu0 0.0
        %815 = vmatpush1.xpose.msra.mxu0 0.0
        %816 = vmatprep.subr.mxu0 0.0
        %817 = vmatpush1.xpose.msra.mxu0 0.0
        %818 = vmatprep.subr.mxu0 0.0
        %819 = vmatpush1.xpose.msra.mxu0 0.0
        %820 = vmatprep.subr.mxu0 0.0
        %821 = vmatpush1.xpose.msra.mxu0 0.0
        %822 = vmatprep.subr.mxu0 0.0
        %823 = vmatpush1.xpose.msra.mxu0 0.0
        %824 = vmatprep.subr.mxu0 0.0
        %825 = vmatpush1.xpose.msra.mxu0 0.0
        %826 = vmatprep.subr.mxu0 0.0
        %827 = vmatpush1.xpose.msra.mxu0 0.0
        %828 = vmatprep.subr.mxu0 0.0
        %829 = vmatpush1.xpose.msra.mxu0 0.0
        %830 = vmatprep.subr.mxu0 0.0
        %831 = vmatpush1.xpose.msra.mxu0 0.0
        %832 = vmatprep.subr.mxu0 0.0
        %833 = vmatpush1.xpose.msra.mxu0 0.0
        %834 = vmatprep.subr.mxu0 0.0
        %835 = vmatpush1.xpose.msra.mxu0 0.0
        %836 = vmatprep.subr.mxu0 0.0
        %837 = vmatpush1.xpose.msra.mxu0 0.0
        %838 = vmatprep.subr.mxu0 0.0
        %839 = vmatpush1.xpose.msra.mxu0 0.0
        %840 = vmatprep.mubr.f32.mxu0 0.0
        %841 = vmatmul.mubr.f32.gmra.mrb[0].mxu0 %v772
        %v842 = vpop.f32.mrb[0].mxu0
        %v843 = vadd.f32 0.0, %v842
        %v844 = vpop.f32.mrb[0].mxu0
        %845 = vdwg.mxu0
        %847 = vrot.lane.b32.xlu0 %v743, 96
        %v848 = vpop.permute.xlu0 %847
        %v850 = vsel %vm557, %v642, 0
        %v852 = vsel %vm557, %v848, 0
        %854 = vmatprep.subr.mxu0 0.0
        %855 = vmatpush1.xpose.msra.mxu0 %v852
        %856 = vmatprep.subr.mxu0 0.0
        %857 = vmatpush1.xpose.msra.mxu0 0.0
        %858 = vmatprep.subr.mxu0 0.0
        %859 = vmatpush1.xpose.msra.mxu0 0.0
        %860 = vmatprep.subr.mxu0 0.0
        %861 = vmatpush1.xpose.msra.mxu0 0.0
        %862 = vmatprep.subr.mxu0 0.0
        %863 = vmatpush1.xpose.msra.mxu0 0.0
        %864 = vmatprep.subr.mxu0 0.0
        %865 = vmatpush1.xpose.msra.mxu0 0.0
        %866 = vmatprep.subr.mxu0 0.0
        %867 = vmatpush1.xpose.msra.mxu0 0.0
        %868 = vmatprep.subr.mxu0 0.0
        %869 = vmatpush1.xpose.msra.mxu0 0.0
        %870 = vmatprep.subr.mxu0 0.0
        %871 = vmatpush1.xpose.msra.mxu0 0.0
        %872 = vmatprep.subr.mxu0 0.0
        %873 = vmatpush1.xpose.msra.mxu0 0.0
        %874 = vmatprep.subr.mxu0 0.0
        %875 = vmatpush1.xpose.msra.mxu0 0.0
        %876 = vmatprep.subr.mxu0 0.0
        %877 = vmatpush1.xpose.msra.mxu0 0.0
        %878 = vmatprep.subr.mxu0 0.0
        %879 = vmatpush1.xpose.msra.mxu0 0.0
        %880 = vmatprep.subr.mxu0 0.0
        %881 = vmatpush1.xpose.msra.mxu0 0.0
        %882 = vmatprep.subr.mxu0 0.0
        %883 = vmatpush1.xpose.msra.mxu0 0.0
        %884 = vmatprep.subr.mxu0 0.0
        %885 = vmatpush1.xpose.msra.mxu0 0.0
        %886 = vmatprep.subr.mxu0 0.0
        %887 = vmatpush1.xpose.msra.mxu0 0.0
        %888 = vmatprep.subr.mxu0 0.0
        %889 = vmatpush1.xpose.msra.mxu0 0.0
        %890 = vmatprep.subr.mxu0 0.0
        %891 = vmatpush1.xpose.msra.mxu0 0.0
        %892 = vmatprep.subr.mxu0 0.0
        %893 = vmatpush1.xpose.msra.mxu0 0.0
        %894 = vmatprep.subr.mxu0 0.0
        %895 = vmatpush1.xpose.msra.mxu0 0.0
        %896 = vmatprep.subr.mxu0 0.0
        %897 = vmatpush1.xpose.msra.mxu0 0.0
        %898 = vmatprep.subr.mxu0 0.0
        %899 = vmatpush1.xpose.msra.mxu0 0.0
        %900 = vmatprep.subr.mxu0 0.0
        %901 = vmatpush1.xpose.msra.mxu0 0.0
        %902 = vmatprep.subr.mxu0 0.0
        %903 = vmatpush1.xpose.msra.mxu0 0.0
        %904 = vmatprep.subr.mxu0 0.0
        %905 = vmatpush1.xpose.msra.mxu0 0.0
        %906 = vmatprep.subr.mxu0 0.0
        %907 = vmatpush1.xpose.msra.mxu0 0.0
        %908 = vmatprep.subr.mxu0 0.0
        %909 = vmatpush1.xpose.msra.mxu0 0.0
        %910 = vmatprep.subr.mxu0 0.0
        %911 = vmatpush1.xpose.msra.mxu0 0.0
        %912 = vmatprep.subr.mxu0 0.0
        %913 = vmatpush1.xpose.msra.mxu0 0.0
        %914 = vmatprep.subr.mxu0 0.0
        %915 = vmatpush1.xpose.msra.mxu0 0.0
        %916 = vmatprep.subr.mxu0 0.0
        %917 = vmatpush1.xpose.msra.mxu0 0.0
        %918 = vmatprep.mubr.f32.mxu0 0.0
        %919 = vmatmul.mubr.f32.gmra.mrb[0].mxu0 %v850
        %v920 = vpop.f32.mrb[0].mxu0
        %v921 = vadd.f32 0.0, %v920
        %v922 = vpop.f32.mrb[0].mxu0
        %923 = vdwg.mxu0
        %925 = vrot.lane.b32.xlu0 %v748, 96
        %v926 = vpop.permute.xlu0 %925
        %v928 = vsel %vm557, %v647, 0
        %v930 = vsel %vm557, %v926, 0
        %932 = vmatprep.subr.mxu0 0.0
        %933 = vmatpush1.xpose.msra.mxu0 %v930
        %934 = vmatprep.subr.mxu0 0.0
        %935 = vmatpush1.xpose.msra.mxu0 0.0
        %936 = vmatprep.subr.mxu0 0.0
        %937 = vmatpush1.xpose.msra.mxu0 0.0
        %938 = vmatprep.subr.mxu0 0.0
        %939 = vmatpush1.xpose.msra.mxu0 0.0
        %940 = vmatprep.subr.mxu0 0.0
        %941 = vmatpush1.xpose.msra.mxu0 0.0
        %942 = vmatprep.subr.mxu0 0.0
        %943 = vmatpush1.xpose.msra.mxu0 0.0
        %944 = vmatprep.subr.mxu0 0.0
        %945 = vmatpush1.xpose.msra.mxu0 0.0
        %946 = vmatprep.subr.mxu0 0.0
        %947 = vmatpush1.xpose.msra.mxu0 0.0
        %948 = vmatprep.subr.mxu0 0.0
        %949 = vmatpush1.xpose.msra.mxu0 0.0
        %950 = vmatprep.subr.mxu0 0.0
        %951 = vmatpush1.xpose.msra.mxu0 0.0
        %952 = vmatprep.subr.mxu0 0.0
        %953 = vmatpush1.xpose.msra.mxu0 0.0
        %954 = vmatprep.subr.mxu0 0.0
        %955 = vmatpush1.xpose.msra.mxu0 0.0
        %956 = vmatprep.subr.mxu0 0.0
        %957 = vmatpush1.xpose.msra.mxu0 0.0
        %958 = vmatprep.subr.mxu0 0.0
        %959 = vmatpush1.xpose.msra.mxu0 0.0
        %960 = vmatprep.subr.mxu0 0.0
        %961 = vmatpush1.xpose.msra.mxu0 0.0
        %962 = vmatprep.subr.mxu0 0.0
        %963 = vmatpush1.xpose.msra.mxu0 0.0
        %964 = vmatprep.subr.mxu0 0.0
        %965 = vmatpush1.xpose.msra.mxu0 0.0
        %966 = vmatprep.subr.mxu0 0.0
        %967 = vmatpush1.xpose.msra.mxu0 0.0
        %968 = vmatprep.subr.mxu0 0.0
        %969 = vmatpush1.xpose.msra.mxu0 0.0
        %970 = vmatprep.subr.mxu0 0.0
        %971 = vmatpush1.xpose.msra.mxu0 0.0
        %972 = vmatprep.subr.mxu0 0.0
        %973 = vmatpush1.xpose.msra.mxu0 0.0
        %974 = vmatprep.subr.mxu0 0.0
        %975 = vmatpush1.xpose.msra.mxu0 0.0
        %976 = vmatprep.subr.mxu0 0.0
        %977 = vmatpush1.xpose.msra.mxu0 0.0
        %978 = vmatprep.subr.mxu0 0.0
        %979 = vmatpush1.xpose.msra.mxu0 0.0
        %980 = vmatprep.subr.mxu0 0.0
        %981 = vmatpush1.xpose.msra.mxu0 0.0
        %982 = vmatprep.subr.mxu0 0.0
        %983 = vmatpush1.xpose.msra.mxu0 0.0
        %984 = vmatprep.subr.mxu0 0.0
        %985 = vmatpush1.xpose.msra.mxu0 0.0
        %986 = vmatprep.subr.mxu0 0.0
        %987 = vmatpush1.xpose.msra.mxu0 0.0
        %988 = vmatprep.subr.mxu0 0.0
        %989 = vmatpush1.xpose.msra.mxu0 0.0
        %990 = vmatprep.subr.mxu0 0.0
        %991 = vmatpush1.xpose.msra.mxu0 0.0
        %992 = vmatprep.subr.mxu0 0.0
        %993 = vmatpush1.xpose.msra.mxu0 0.0
        %994 = vmatprep.subr.mxu0 0.0
        %995 = vmatpush1.xpose.msra.mxu0 0.0
        %996 = vmatprep.mubr.f32.mxu0 0.0
        %997 = vmatmul.mubr.f32.gmra.mrb[0].mxu0 %v928
        %v998 = vpop.f32.mrb[0].mxu0
        %v999 = vadd.f32 0.0, %v998
        %v1000 = vpop.f32.mrb[0].mxu0
        %1001 = vdwg.mxu0
        %1003 = vrot.lane.b32.xlu0 %v753, 96
        %v1004 = vpop.permute.xlu0 %1003
        %v1006 = vsel %vm557, %v652, 0
        %v1008 = vsel %vm557, %v1004, 0
        %1010 = vmatprep.subr.mxu0 0.0
        %1011 = vmatpush1.xpose.msra.mxu0 %v1008
        %1012 = vmatprep.subr.mxu0 0.0
        %1013 = vmatpush1.xpose.msra.mxu0 0.0
        %1014 = vmatprep.subr.mxu0 0.0
        %1015 = vmatpush1.xpose.msra.mxu0 0.0
        %1016 = vmatprep.subr.mxu0 0.0
        %1017 = vmatpush1.xpose.msra.mxu0 0.0
        %1018 = vmatprep.subr.mxu0 0.0
        %1019 = vmatpush1.xpose.msra.mxu0 0.0
        %1020 = vmatprep.subr.mxu0 0.0
        %1021 = vmatpush1.xpose.msra.mxu0 0.0
        %1022 = vmatprep.subr.mxu0 0.0
        %1023 = vmatpush1.xpose.msra.mxu0 0.0
        %1024 = vmatprep.subr.mxu0 0.0
        %1025 = vmatpush1.xpose.msra.mxu0 0.0
        %1026 = vmatprep.subr.mxu0 0.0
        %1027 = vmatpush1.xpose.msra.mxu0 0.0
        %1028 = vmatprep.subr.mxu0 0.0
        %1029 = vmatpush1.xpose.msra.mxu0 0.0
        %1030 = vmatprep.subr.mxu0 0.0
        %1031 = vmatpush1.xpose.msra.mxu0 0.0
        %1032 = vmatprep.subr.mxu0 0.0
        %1033 = vmatpush1.xpose.msra.mxu0 0.0
        %1034 = vmatprep.subr.mxu0 0.0
        %1035 = vmatpush1.xpose.msra.mxu0 0.0
        %1036 = vmatprep.subr.mxu0 0.0
        %1037 = vmatpush1.xpose.msra.mxu0 0.0
        %1038 = vmatprep.subr.mxu0 0.0
        %1039 = vmatpush1.xpose.msra.mxu0 0.0
        %1040 = vmatprep.subr.mxu0 0.0
        %1041 = vmatpush1.xpose.msra.mxu0 0.0
        %1042 = vmatprep.subr.mxu0 0.0
        %1043 = vmatpush1.xpose.msra.mxu0 0.0
        %1044 = vmatprep.subr.mxu0 0.0
        %1045 = vmatpush1.xpose.msra.mxu0 0.0
        %1046 = vmatprep.subr.mxu0 0.0
        %1047 = vmatpush1.xpose.msra.mxu0 0.0
        %1048 = vmatprep.subr.mxu0 0.0
        %1049 = vmatpush1.xpose.msra.mxu0 0.0
        %1050 = vmatprep.subr.mxu0 0.0
        %1051 = vmatpush1.xpose.msra.mxu0 0.0
        %1052 = vmatprep.subr.mxu0 0.0
        %1053 = vmatpush1.xpose.msra.mxu0 0.0
        %1054 = vmatprep.subr.mxu0 0.0
        %1055 = vmatpush1.xpose.msra.mxu0 0.0
        %1056 = vmatprep.subr.mxu0 0.0
        %1057 = vmatpush1.xpose.msra.mxu0 0.0
        %1058 = vmatprep.subr.mxu0 0.0
        %1059 = vmatpush1.xpose.msra.mxu0 0.0
        %1060 = vmatprep.subr.mxu0 0.0
        %1061 = vmatpush1.xpose.msra.mxu0 0.0
        %1062 = vmatprep.subr.mxu0 0.0
        %1063 = vmatpush1.xpose.msra.mxu0 0.0
        %1064 = vmatprep.subr.mxu0 0.0
        %1065 = vmatpush1.xpose.msra.mxu0 0.0
        %1066 = vmatprep.subr.mxu0 0.0
        %1067 = vmatpush1.xpose.msra.mxu0 0.0
        %1068 = vmatprep.subr.mxu0 0.0
        %1069 = vmatpush1.xpose.msra.mxu0 0.0
        %1070 = vmatprep.subr.mxu0 0.0
        %1071 = vmatpush1.xpose.msra.mxu0 0.0
        %1072 = vmatprep.subr.mxu0 0.0
        %1073 = vmatpush1.xpose.msra.mxu0 0.0
        %1074 = vmatprep.mubr.f32.mxu0 0.0
        %1075 = vmatmul.mubr.f32.gmra.mrb[0].mxu0 %v1006
        %v1076 = vpop.f32.mrb[0].mxu0
        %v1077 = vadd.f32 0.0, %v1076
        %v1078 = vpop.f32.mrb[0].mxu0
        %1079 = vdwg.mxu0
        %v1080 = vmul.f32 %v843, 0.17677669
        %v1081 = vmul.f32 %v921, 0.17677669
        %v1082 = vmul.f32 %v999, 0.17677669
        %v1083 = vmul.f32 %v1077, 0.17677669
        %v1088 = vlaneseq
        %v1089 = vshrl.u32 %v1088, 7
        %v1090 = vsub.s32 0, %v1089
        %v1091 = vrot.slane %v756, %v1090
        %v1092 = vlaneseq
        %v1093 = vshrl.u32 %v1092, 7
        %v1094 = vsub.s32 0, %v1093
        %v1095 = vrot.slane %v757, %v1094
        %v1096 = vlaneseq
        %v1097 = vshrl.u32 %v1096, 7
        %v1098 = vsub.s32 0, %v1097
        %v1099 = vrot.slane %v758, %v1098
        %v1100 = vlaneseq
        %v1101 = vshrl.u32 %v1100, 7
        %v1102 = vsub.s32 0, %v1101
        %v1103 = vrot.slane %v759, %v1102
        %v1108 = vadd.f32 %v1080, %v1091
        %v1109 = vadd.f32 %v1081, %v1095
        %v1110 = vadd.f32 %v1082, %v1099
        %v1111 = vadd.f32 %v1083, %v1103
        %vm1112 = vcmask 64512
        %v1113 = vsel %vm1112, %v1108, -inf
        %1114 = vmax.xlane.f32.xlu0 %v1113
        %v1115 = vpop.xlane.xlu0 %1114
        %v1116 = vsel %vm1112, %v1109, -inf
        %1117 = vmax.xlane.f32.xlu0 %v1116
        %v1118 = vpop.xlane.xlu0 %1117
        %v1119 = vsel %vm1112, %v1110, -inf
        %1120 = vmax.xlane.f32.xlu0 %v1119
        %v1121 = vpop.xlane.xlu0 %1120
        %v1122 = vsel %vm1112, %v1111, -inf
        %1123 = vmax.xlane.f32.xlu0 %v1122
        %v1124 = vpop.xlane.xlu0 %1123
        %v1125 = vsub.f32 %v1108, %v1115
        %v1126 = vsub.f32 %v1109, %v1118
        %v1127 = vsub.f32 %v1110, %v1121
        %v1128 = vsub.f32 %v1111, %v1124
        %v1129 = vmul.f32 %v1125, 1.442695
        %v1130 = vpow.pop %v1129
        %v1131 = vmul.f32 %v1126, 1.442695
        %v1132 = vpow.pop %v1131
        %v1133 = vmul.f32 %v1127, 1.442695
        %v1134 = vpow.pop %v1133
        %v1135 = vmul.f32 %v1128, 1.442695
        %v1136 = vpow.pop %v1135
        %v1137 = vsel %vm1112, %v1130, 0.0
        %1138 = vadd.xlane.f32.xlu0 %v1137
        %v1139 = vpop.xlane.xlu0 %1138
        %v1140 = vsel %vm1112, %v1132, 0.0
        %1141 = vadd.xlane.f32.xlu0 %v1140
        %v1142 = vpop.xlane.xlu0 %1141
        %v1143 = vsel %vm1112, %v1134, 0.0
        %1144 = vadd.xlane.f32.xlu0 %v1143
        %v1145 = vpop.xlane.xlu0 %1144
        %v1146 = vsel %vm1112, %v1136, 0.0
        %1147 = vadd.xlane.f32.xlu0 %v1146
        %v1148 = vpop.xlane.xlu0 %1147
        %1149 = vrot.lane.b32.xlu0 %v738, 64
        %v1150 = vpop.permute.xlu0 %1149
        %v1153 = vsel %vm1112, %v1130, 0
        %1155 = vmatprep.subr.mxu0 0.0
        %1156 = vmatpush1.msra.mxu0 %v1150
        %1157 = vmatprep.subr.mxu0 0.0
        %1158 = vmatpush1.msra.mxu0 0.0
        %1159 = vmatprep.subr.mxu0 0.0
        %1160 = vmatpush1.msra.mxu0 0.0
        %1161 = vmatprep.subr.mxu0 0.0
        %1162 = vmatpush1.msra.mxu0 0.0
        %1163 = vmatprep.subr.mxu0 0.0
        %1164 = vmatpush1.msra.mxu0 0.0
        %1165 = vmatprep.subr.mxu0 0.0
        %1166 = vmatpush1.msra.mxu0 0.0
        %1167 = vmatprep.subr.mxu0 0.0
        %1168 = vmatpush1.msra.mxu0 0.0
        %1169 = vmatprep.subr.mxu0 0.0
        %1170 = vmatpush1.msra.mxu0 0.0
        %1171 = vmatprep.subr.mxu0 0.0
        %1172 = vmatpush1.msra.mxu0 0.0
        %1173 = vmatprep.subr.mxu0 0.0
        %1174 = vmatpush1.msra.mxu0 0.0
        %1175 = vmatprep.subr.mxu0 0.0
        %1176 = vmatpush1.msra.mxu0 0.0
        %1177 = vmatprep.subr.mxu0 0.0
        %1178 = vmatpush1.msra.mxu0 0.0
        %1179 = vmatprep.subr.mxu0 0.0
        %1180 = vmatpush1.msra.mxu0 0.0
        %1181 = vmatprep.subr.mxu0 0.0
        %1182 = vmatpush1.msra.mxu0 0.0
        %1183 = vmatprep.subr.mxu0 0.0
        %1184 = vmatpush1.msra.mxu0 0.0
        %1185 = vmatprep.subr.mxu0 0.0
        %1186 = vmatpush1.msra.mxu0 0.0
        %1187 = vmatprep.subr.mxu0 0.0
        %1188 = vmatpush1.msra.mxu0 0.0
        %1189 = vmatprep.subr.mxu0 0.0
        %1190 = vmatpush1.msra.mxu0 0.0
        %1191 = vmatprep.subr.mxu0 0.0
        %1192 = vmatpush1.msra.mxu0 0.0
        %1193 = vmatprep.subr.mxu0 0.0
        %1194 = vmatpush1.msra.mxu0 0.0
        %1195 = vmatprep.subr.mxu0 0.0
        %1196 = vmatpush1.msra.mxu0 0.0
        %1197 = vmatprep.subr.mxu0 0.0
        %1198 = vmatpush1.msra.mxu0 0.0
        %1199 = vmatprep.subr.mxu0 0.0
        %1200 = vmatpush1.msra.mxu0 0.0
        %1201 = vmatprep.subr.mxu0 0.0
        %1202 = vmatpush1.msra.mxu0 0.0
        %1203 = vmatprep.subr.mxu0 0.0
        %1204 = vmatpush1.msra.mxu0 0.0
        %1205 = vmatprep.subr.mxu0 0.0
        %1206 = vmatpush1.msra.mxu0 0.0
        %1207 = vmatprep.subr.mxu0 0.0
        %1208 = vmatpush1.msra.mxu0 0.0
        %1209 = vmatprep.subr.mxu0 0.0
        %1210 = vmatpush1.msra.mxu0 0.0
        %1211 = vmatprep.subr.mxu0 0.0
        %1212 = vmatpush1.msra.mxu0 0.0
        %1213 = vmatprep.subr.mxu0 0.0
        %1214 = vmatpush1.msra.mxu0 0.0
        %1215 = vmatprep.subr.mxu0 0.0
        %1216 = vmatpush1.msra.mxu0 0.0
        %1217 = vmatprep.subr.mxu0 0.0
        %1218 = vmatpush1.msra.mxu0 0.0
        %1219 = vmatprep.mubr.f32.mxu0 0.0
        %1220 = vmatmul.mubr.f32.gmra.mrb[0].mxu0 %v1153
        %v1221 = vpop.f32.mrb[0].mxu0
        %v1222 = vadd.f32 0.0, %v1221
        %v1223 = vpop.f32.mrb[0].mxu0
        %1224 = vdwg.mxu0
        %1225 = vrot.lane.b32.xlu0 %v743, 64
        %v1226 = vpop.permute.xlu0 %1225
        %v1229 = vsel %vm1112, %v1132, 0
        %1231 = vmatprep.subr.mxu0 0.0
        %1232 = vmatpush1.msra.mxu0 %v1226
        %1233 = vmatprep.subr.mxu0 0.0
        %1234 = vmatpush1.msra.mxu0 0.0
        %1235 = vmatprep.subr.mxu0 0.0
        %1236 = vmatpush1.msra.mxu0 0.0
        %1237 = vmatprep.subr.mxu0 0.0
        %1238 = vmatpush1.msra.mxu0 0.0
        %1239 = vmatprep.subr.mxu0 0.0
        %1240 = vmatpush1.msra.mxu0 0.0
        %1241 = vmatprep.subr.mxu0 0.0
        %1242 = vmatpush1.msra.mxu0 0.0
        %1243 = vmatprep.subr.mxu0 0.0
        %1244 = vmatpush1.msra.mxu0 0.0
        %1245 = vmatprep.subr.mxu0 0.0
        %1246 = vmatpush1.msra.mxu0 0.0
        %1247 = vmatprep.subr.mxu0 0.0
        %1248 = vmatpush1.msra.mxu0 0.0
        %1249 = vmatprep.subr.mxu0 0.0
        %1250 = vmatpush1.msra.mxu0 0.0
        %1251 = vmatprep.subr.mxu0 0.0
        %1252 = vmatpush1.msra.mxu0 0.0
        %1253 = vmatprep.subr.mxu0 0.0
        %1254 = vmatpush1.msra.mxu0 0.0
        %1255 = vmatprep.subr.mxu0 0.0
        %1256 = vmatpush1.msra.mxu0 0.0
        %1257 = vmatprep.subr.mxu0 0.0
        %1258 = vmatpush1.msra.mxu0 0.0
        %1259 = vmatprep.subr.mxu0 0.0
        %1260 = vmatpush1.msra.mxu0 0.0
        %1261 = vmatprep.subr.mxu0 0.0
        %1262 = vmatpush1.msra.mxu0 0.0
        %1263 = vmatprep.subr.mxu0 0.0
        %1264 = vmatpush1.msra.mxu0 0.0
        %1265 = vmatprep.subr.mxu0 0.0
        %1266 = vmatpush1.msra.mxu0 0.0
        %1267 = vmatprep.subr.mxu0 0.0
        %1268 = vmatpush1.msra.mxu0 0.0
        %1269 = vmatprep.subr.mxu0 0.0
        %1270 = vmatpush1.msra.mxu0 0.0
        %1271 = vmatprep.subr.mxu0 0.0
        %1272 = vmatpush1.msra.mxu0 0.0
        %1273 = vmatprep.subr.mxu0 0.0
        %1274 = vmatpush1.msra.mxu0 0.0
        %1275 = vmatprep.subr.mxu0 0.0
        %1276 = vmatpush1.msra.mxu0 0.0
        %1277 = vmatprep.subr.mxu0 0.0
        %1278 = vmatpush1.msra.mxu0 0.0
        %1279 = vmatprep.subr.mxu0 0.0
        %1280 = vmatpush1.msra.mxu0 0.0
        %1281 = vmatprep.subr.mxu0 0.0
        %1282 = vmatpush1.msra.mxu0 0.0
        %1283 = vmatprep.subr.mxu0 0.0
        %1284 = vmatpush1.msra.mxu0 0.0
        %1285 = vmatprep.subr.mxu0 0.0
        %1286 = vmatpush1.msra.mxu0 0.0
        %1287 = vmatprep.subr.mxu0 0.0
        %1288 = vmatpush1.msra.mxu0 0.0
        %1289 = vmatprep.subr.mxu0 0.0
        %1290 = vmatpush1.msra.mxu0 0.0
        %1291 = vmatprep.subr.mxu0 0.0
        %1292 = vmatpush1.msra.mxu0 0.0
        %1293 = vmatprep.subr.mxu0 0.0
        %1294 = vmatpush1.msra.mxu0 0.0
        %1295 = vmatprep.mubr.f32.mxu0 0.0
        %1296 = vmatmul.mubr.f32.gmra.mrb[0].mxu0 %v1229
        %v1297 = vpop.f32.mrb[0].mxu0
        %v1298 = vadd.f32 0.0, %v1297
        %v1299 = vpop.f32.mrb[0].mxu0
        %1300 = vdwg.mxu0
        %1301 = vrot.lane.b32.xlu0 %v748, 64
        %v1302 = vpop.permute.xlu0 %1301
        %v1305 = vsel %vm1112, %v1134, 0
        %1307 = vmatprep.subr.mxu0 0.0
        %1308 = vmatpush1.msra.mxu0 %v1302
        %1309 = vmatprep.subr.mxu0 0.0
        %1310 = vmatpush1.msra.mxu0 0.0
        %1311 = vmatprep.subr.mxu0 0.0
        %1312 = vmatpush1.msra.mxu0 0.0
        %1313 = vmatprep.subr.mxu0 0.0
        %1314 = vmatpush1.msra.mxu0 0.0
        %1315 = vmatprep.subr.mxu0 0.0
        %1316 = vmatpush1.msra.mxu0 0.0
        %1317 = vmatprep.subr.mxu0 0.0
        %1318 = vmatpush1.msra.mxu0 0.0
        %1319 = vmatprep.subr.mxu0 0.0
        %1320 = vmatpush1.msra.mxu0 0.0
        %1321 = vmatprep.subr.mxu0 0.0
        %1322 = vmatpush1.msra.mxu0 0.0
        %1323 = vmatprep.subr.mxu0 0.0
        %1324 = vmatpush1.msra.mxu0 0.0
        %1325 = vmatprep.subr.mxu0 0.0
        %1326 = vmatpush1.msra.mxu0 0.0
        %1327 = vmatprep.subr.mxu0 0.0
        %1328 = vmatpush1.msra.mxu0 0.0
        %1329 = vmatprep.subr.mxu0 0.0
        %1330 = vmatpush1.msra.mxu0 0.0
        %1331 = vmatprep.subr.mxu0 0.0
        %1332 = vmatpush1.msra.mxu0 0.0
        %1333 = vmatprep.subr.mxu0 0.0
        %1334 = vmatpush1.msra.mxu0 0.0
        %1335 = vmatprep.subr.mxu0 0.0
        %1336 = vmatpush1.msra.mxu0 0.0
        %1337 = vmatprep.subr.mxu0 0.0
        %1338 = vmatpush1.msra.mxu0 0.0
        %1339 = vmatprep.subr.mxu0 0.0
        %1340 = vmatpush1.msra.mxu0 0.0
        %1341 = vmatprep.subr.mxu0 0.0
        %1342 = vmatpush1.msra.mxu0 0.0
        %1343 = vmatprep.subr.mxu0 0.0
        %1344 = vmatpush1.msra.mxu0 0.0
        %1345 = vmatprep.subr.mxu0 0.0
        %1346 = vmatpush1.msra.mxu0 0.0
        %1347 = vmatprep.subr.mxu0 0.0
        %1348 = vmatpush1.msra.mxu0 0.0
        %1349 = vmatprep.subr.mxu0 0.0
        %1350 = vmatpush1.msra.mxu0 0.0
        %1351 = vmatprep.subr.mxu0 0.0
        %1352 = vmatpush1.msra.mxu0 0.0
        %1353 = vmatprep.subr.mxu0 0.0
        %1354 = vmatpush1.msra.mxu0 0.0
        %1355 = vmatprep.subr.mxu0 0.0
        %1356 = vmatpush1.msra.mxu0 0.0
        %1357 = vmatprep.subr.mxu0 0.0
        %1358 = vmatpush1.msra.mxu0 0.0
        %1359 = vmatprep.subr.mxu0 0.0
        %1360 = vmatpush1.msra.mxu0 0.0
        %1361 = vmatprep.subr.mxu0 0.0
        %1362 = vmatpush1.msra.mxu0 0.0
        %1363 = vmatprep.subr.mxu0 0.0
        %1364 = vmatpush1.msra.mxu0 0.0
        %1365 = vmatprep.subr.mxu0 0.0
        %1366 = vmatpush1.msra.mxu0 0.0
        %1367 = vmatprep.subr.mxu0 0.0
        %1368 = vmatpush1.msra.mxu0 0.0
        %1369 = vmatprep.subr.mxu0 0.0
        %1370 = vmatpush1.msra.mxu0 0.0
        %1371 = vmatprep.mubr.f32.mxu0 0.0
        %1372 = vmatmul.mubr.f32.gmra.mrb[0].mxu0 %v1305
        %v1373 = vpop.f32.mrb[0].mxu0
        %v1374 = vadd.f32 0.0, %v1373
        %v1375 = vpop.f32.mrb[0].mxu0
        %1376 = vdwg.mxu0
        %1377 = vrot.lane.b32.xlu0 %v753, 64
        %v1378 = vpop.permute.xlu0 %1377
        %v1381 = vsel %vm1112, %v1136, 0
        %1383 = vmatprep.subr.mxu0 0.0
        %1384 = vmatpush1.msra.mxu0 %v1378
        %1385 = vmatprep.subr.mxu0 0.0
        %1386 = vmatpush1.msra.mxu0 0.0
        %1387 = vmatprep.subr.mxu0 0.0
        %1388 = vmatpush1.msra.mxu0 0.0
        %1389 = vmatprep.subr.mxu0 0.0
        %1390 = vmatpush1.msra.mxu0 0.0
        %1391 = vmatprep.subr.mxu0 0.0
        %1392 = vmatpush1.msra.mxu0 0.0
        %1393 = vmatprep.subr.mxu0 0.0
        %1394 = vmatpush1.msra.mxu0 0.0
        %1395 = vmatprep.subr.mxu0 0.0
        %1396 = vmatpush1.msra.mxu0 0.0
        %1397 = vmatprep.subr.mxu0 0.0
        %1398 = vmatpush1.msra.mxu0 0.0
        %1399 = vmatprep.subr.mxu0 0.0
        %1400 = vmatpush1.msra.mxu0 0.0
        %1401 = vmatprep.subr.mxu0 0.0
        %1402 = vmatpush1.msra.mxu0 0.0
        %1403 = vmatprep.subr.mxu0 0.0
        %1404 = vmatpush1.msra.mxu0 0.0
        %1405 = vmatprep.subr.mxu0 0.0
        %1406 = vmatpush1.msra.mxu0 0.0
        %1407 = vmatprep.subr.mxu0 0.0
        %1408 = vmatpush1.msra.mxu0 0.0
        %1409 = vmatprep.subr.mxu0 0.0
        %1410 = vmatpush1.msra.mxu0 0.0
        %1411 = vmatprep.subr.mxu0 0.0
        %1412 = vmatpush1.msra.mxu0 0.0
        %1413 = vmatprep.subr.mxu0 0.0
        %1414 = vmatpush1.msra.mxu0 0.0
        %1415 = vmatprep.subr.mxu0 0.0
        %1416 = vmatpush1.msra.mxu0 0.0
        %1417 = vmatprep.subr.mxu0 0.0
        %1418 = vmatpush1.msra.mxu0 0.0
        %1419 = vmatprep.subr.mxu0 0.0
        %1420 = vmatpush1.msra.mxu0 0.0
        %1421 = vmatprep.subr.mxu0 0.0
        %1422 = vmatpush1.msra.mxu0 0.0
        %1423 = vmatprep.subr.mxu0 0.0
        %1424 = vmatpush1.msra.mxu0 0.0
        %1425 = vmatprep.subr.mxu0 0.0
        %1426 = vmatpush1.msra.mxu0 0.0
        %1427 = vmatprep.subr.mxu0 0.0
        %1428 = vmatpush1.msra.mxu0 0.0
        %1429 = vmatprep.subr.mxu0 0.0
        %1430 = vmatpush1.msra.mxu0 0.0
        %1431 = vmatprep.subr.mxu0 0.0
        %1432 = vmatpush1.msra.mxu0 0.0
        %1433 = vmatprep.subr.mxu0 0.0
        %1434 = vmatpush1.msra.mxu0 0.0
        %1435 = vmatprep.subr.mxu0 0.0
        %1436 = vmatpush1.msra.mxu0 0.0
        %1437 = vmatprep.subr.mxu0 0.0
        %1438 = vmatpush1.msra.mxu0 0.0
        %1439 = vmatprep.subr.mxu0 0.0
        %1440 = vmatpush1.msra.mxu0 0.0
        %1441 = vmatprep.subr.mxu0 0.0
        %1442 = vmatpush1.msra.mxu0 0.0
        %1443 = vmatprep.subr.mxu0 0.0
        %1444 = vmatpush1.msra.mxu0 0.0
        %1445 = vmatprep.subr.mxu0 0.0
        %1446 = vmatpush1.msra.mxu0 0.0
        %1447 = vmatprep.mubr.f32.mxu0 0.0
        %1448 = vmatmul.mubr.f32.gmra.mrb[0].mxu0 %v1381
        %v1449 = vpop.f32.mrb[0].mxu0
        %v1450 = vadd.f32 0.0, %v1449
        %v1451 = vpop.f32.mrb[0].mxu0
        %1452 = vdwg.mxu0
        %v1453 = vrcp.pop %v1139
        %v1454 = vrcp.pop %v1142
        %v1455 = vrcp.pop %v1145
        %v1456 = vrcp.pop %v1148
        %v1457 = vmul.f32 %v760, %v1453
        %v1458 = vmul.f32 %v761, %v1454
        %v1459 = vmul.f32 %v762, %v1455
        %v1460 = vmul.f32 %v763, %v1456
        %1462 = vset.pattern.permute.xlu0 0
        %1463 = vperm.xlu0 %1462, %v1457
        %v1464 = vpop.permute.xlu0 %1463
        %1467 = vset.pattern.permute.xlu0 0
        %1468 = vperm.xlu0 %1467, %v1458
        %v1469 = vpop.permute.xlu0 %1468
        %1472 = vset.pattern.permute.xlu0 0
        %1473 = vperm.xlu0 %1472, %v1459
        %v1474 = vpop.permute.xlu0 %1473
        %1477 = vset.pattern.permute.xlu0 0
        %1478 = vperm.xlu0 %1477, %v1460
        %v1479 = vpop.permute.xlu0 %1478
        %v1481 = vmul.f32 %v1222, %v1464
        %v1482 = vmul.f32 %v1298, %v1469
        %v1483 = vmul.f32 %v1374, %v1474
        %v1484 = vmul.f32 %v1450, %v1479
        %v1485 = vsel %vm557, %v1481, 0.0
        %v1486 = vrot.slane %v1485, 4
        %v1487 = vadd.f32 %v1485, %v1486
        %v1488 = vrot.slane %v1487, 2
        %v1489 = vadd.f32 %v1487, %v1488
        %v1490 = vrot.slane %v1489, 1
        %v1491 = vadd.f32 %v1489, %v1490
        %v1492 = vsel %vm557, %v1482, 0.0
        %v1493 = vrot.slane %v1492, 4
        %v1494 = vadd.f32 %v1492, %v1493
        %v1495 = vrot.slane %v1494, 2
        %v1496 = vadd.f32 %v1494, %v1495
        %v1497 = vrot.slane %v1496, 1
        %v1498 = vadd.f32 %v1496, %v1497
        %v1499 = vsel %vm557, %v1483, 0.0
        %v1500 = vrot.slane %v1499, 4
        %v1501 = vadd.f32 %v1499, %v1500
        %v1502 = vrot.slane %v1501, 2
        %v1503 = vadd.f32 %v1501, %v1502
        %v1504 = vrot.slane %v1503, 1
        %v1505 = vadd.f32 %v1503, %v1504
        %v1506 = vsel %vm557, %v1484, 0.0
        %v1507 = vrot.slane %v1506, 4
        %v1508 = vadd.f32 %v1506, %v1507
        %v1509 = vrot.slane %v1508, 2
        %v1510 = vadd.f32 %v1508, %v1509
        %v1511 = vrot.slane %v1510, 1
        %v1512 = vadd.f32 %v1510, %v1511
        %1514 = vset.pattern.permute.xlu0 0
        %1515 = vperm.xlu0 %1514, %v764
        %v1516 = vpop.permute.xlu0 %1515
        %v1518 = vlaneseq
        %v1519 = vshrl.u32 %v1518, 7
        %v1520 = vsub.s32 0, %v1519
        %v1521 = vrot.slane %v1516, %v1520
        %1523 = vset.pattern.permute.xlu0 0
        %1524 = vperm.xlu0 %1523, %v765
        %v1525 = vpop.permute.xlu0 %1524
        %v1527 = vlaneseq
        %v1528 = vshrl.u32 %v1527, 7
        %v1529 = vsub.s32 0, %v1528
        %v1530 = vrot.slane %v1525, %v1529
        %1532 = vset.pattern.permute.xlu0 0
        %1533 = vperm.xlu0 %1532, %v766
        %v1534 = vpop.permute.xlu0 %1533
        %v1536 = vlaneseq
        %v1537 = vshrl.u32 %v1536, 7
        %v1538 = vsub.s32 0, %v1537
        %v1539 = vrot.slane %v1534, %v1538
        %1541 = vset.pattern.permute.xlu0 0
        %1542 = vperm.xlu0 %1541, %v767
        %v1543 = vpop.permute.xlu0 %1542
        %v1545 = vlaneseq
        %v1546 = vshrl.u32 %v1545, 7
        %v1547 = vsub.s32 0, %v1546
        %v1548 = vrot.slane %v1543, %v1547
        %v1549 = vmul.f32 %v1491, %v1521
        %v1550 = vmul.f32 %v1498, %v1530
        %v1551 = vmul.f32 %v1505, %v1539
        %v1552 = vmul.f32 %v1512, %v1548
        %v1553 = vld [vmem:[%s431] sm:$0x1]
        %v1554 = vld [vmem:[%s431 + $0x1] sm:$0x1]
        %v1555 = vld [vmem:[%s431 + $0x2] sm:$0x1]
        %v1556 = vld [vmem:[%s431 + $0x3] sm:$0x1]
        %v1557 = vld [vmem:[%s533] sm:$0xff]
        %v1558 = vld [vmem:[%s533 + $0x8] sm:$0xff]
        %v1559 = vld [vmem:[%s533 + $0x10] sm:$0xff]
        %v1560 = vld [vmem:[%s533 + $0x18] sm:$0xff]
        %v1561 = vld [vmem:[%s543] sm:$0x1]
        %v1562 = vld [vmem:[%s543 + $0x1] sm:$0x1]
        %v1563 = vld [vmem:[%s543 + $0x2] sm:$0x1]
        %v1564 = vld [vmem:[%s543 + $0x3] sm:$0x1]
        %1565 = vrot.lane.b32.xlu0 %v637, 96
        %v1566 = vpop.permute.xlu0 %1565
        %v1567 = vsel %vm557, %v738, 0
        %v1569 = vsel %vm557, %v1566, 0
        %1571 = vmatprep.subr.mxu0 0.0
        %1572 = vmatpush1.xpose.msra.mxu0 %v1569
        %1573 = vmatprep.subr.mxu0 0.0
        %1574 = vmatpush1.xpose.msra.mxu0 0.0
        %1575 = vmatprep.subr.mxu0 0.0
        %1576 = vmatpush1.xpose.msra.mxu0 0.0
        %1577 = vmatprep.subr.mxu0 0.0
        %1578 = vmatpush1.xpose.msra.mxu0 0.0
        %1579 = vmatprep.subr.mxu0 0.0
        %1580 = vmatpush1.xpose.msra.mxu0 0.0
        %1581 = vmatprep.subr.mxu0 0.0
        %1582 = vmatpush1.xpose.msra.mxu0 0.0
        %1583 = vmatprep.subr.mxu0 0.0
        %1584 = vmatpush1.xpose.msra.mxu0 0.0
        %1585 = vmatprep.subr.mxu0 0.0
        %1586 = vmatpush1.xpose.msra.mxu0 0.0
        %1587 = vmatprep.subr.mxu0 0.0
        %1588 = vmatpush1.xpose.msra.mxu0 0.0
        %1589 = vmatprep.subr.mxu0 0.0
        %1590 = vmatpush1.xpose.msra.mxu0 0.0
        %1591 = vmatprep.subr.mxu0 0.0
        %1592 = vmatpush1.xpose.msra.mxu0 0.0
        %1593 = vmatprep.subr.mxu0 0.0
        %1594 = vmatpush1.xpose.msra.mxu0 0.0
        %1595 = vmatprep.subr.mxu0 0.0
        %1596 = vmatpush1.xpose.msra.mxu0 0.0
        %1597 = vmatprep.subr.mxu0 0.0
        %1598 = vmatpush1.xpose.msra.mxu0 0.0
        %1599 = vmatprep.subr.mxu0 0.0
        %1600 = vmatpush1.xpose.msra.mxu0 0.0
        %1601 = vmatprep.subr.mxu0 0.0
        %1602 = vmatpush1.xpose.msra.mxu0 0.0
        %1603 = vmatprep.subr.mxu0 0.0
        %1604 = vmatpush1.xpose.msra.mxu0 0.0
        %1605 = vmatprep.subr.mxu0 0.0
        %1606 = vmatpush1.xpose.msra.mxu0 0.0
        %1607 = vmatprep.subr.mxu0 0.0
        %1608 = vmatpush1.xpose.msra.mxu0 0.0
        %1609 = vmatprep.subr.mxu0 0.0
        %1610 = vmatpush1.xpose.msra.mxu0 0.0
        %1611 = vmatprep.subr.mxu0 0.0
        %1612 = vmatpush1.xpose.msra.mxu0 0.0
        %1613 = vmatprep.subr.mxu0 0.0
        %1614 = vmatpush1.xpose.msra.mxu0 0.0
        %1615 = vmatprep.subr.mxu0 0.0
        %1616 = vmatpush1.xpose.msra.mxu0 0.0
        %1617 = vmatprep.subr.mxu0 0.0
        %1618 = vmatpush1.xpose.msra.mxu0 0.0
        %1619 = vmatprep.subr.mxu0 0.0
        %1620 = vmatpush1.xpose.msra.mxu0 0.0
        %1621 = vmatprep.subr.mxu0 0.0
        %1622 = vmatpush1.xpose.msra.mxu0 0.0
        %1623 = vmatprep.subr.mxu0 0.0
        %1624 = vmatpush1.xpose.msra.mxu0 0.0
        %1625 = vmatprep.subr.mxu0 0.0
        %1626 = vmatpush1.xpose.msra.mxu0 0.0
        %1627 = vmatprep.subr.mxu0 0.0
        %1628 = vmatpush1.xpose.msra.mxu0 0.0
        %1629 = vmatprep.subr.mxu0 0.0
        %1630 = vmatpush1.xpose.msra.mxu0 0.0
        %1631 = vmatprep.subr.mxu0 0.0
        %1632 = vmatpush1.xpose.msra.mxu0 0.0
        %1633 = vmatprep.subr.mxu0 0.0
        %1634 = vmatpush1.xpose.msra.mxu0 0.0
        %1635 = vmatprep.mubr.f32.mxu0 0.0
        %1636 = vmatmul.mubr.f32.gmra.mrb[0].mxu0 %v1567
        %v1637 = vpop.f32.mrb[0].mxu0
        %v1638 = vadd.f32 0.0, %v1637
        %v1639 = vpop.f32.mrb[0].mxu0
        %1640 = vdwg.mxu0
        %1641 = vrot.lane.b32.xlu0 %v642, 96
        %v1642 = vpop.permute.xlu0 %1641
        %v1643 = vsel %vm557, %v743, 0
        %v1645 = vsel %vm557, %v1642, 0
        %1647 = vmatprep.subr.mxu0 0.0
        %1648 = vmatpush1.xpose.msra.mxu0 %v1645
        %1649 = vmatprep.subr.mxu0 0.0
        %1650 = vmatpush1.xpose.msra.mxu0 0.0
        %1651 = vmatprep.subr.mxu0 0.0
        %1652 = vmatpush1.xpose.msra.mxu0 0.0
        %1653 = vmatprep.subr.mxu0 0.0
        %1654 = vmatpush1.xpose.msra.mxu0 0.0
        %1655 = vmatprep.subr.mxu0 0.0
        %1656 = vmatpush1.xpose.msra.mxu0 0.0
        %1657 = vmatprep.subr.mxu0 0.0
        %1658 = vmatpush1.xpose.msra.mxu0 0.0
        %1659 = vmatprep.subr.mxu0 0.0
        %1660 = vmatpush1.xpose.msra.mxu0 0.0
        %1661 = vmatprep.subr.mxu0 0.0
        %1662 = vmatpush1.xpose.msra.mxu0 0.0
        %1663 = vmatprep.subr.mxu0 0.0
        %1664 = vmatpush1.xpose.msra.mxu0 0.0
        %1665 = vmatprep.subr.mxu0 0.0
        %1666 = vmatpush1.xpose.msra.mxu0 0.0
        %1667 = vmatprep.subr.mxu0 0.0
        %1668 = vmatpush1.xpose.msra.mxu0 0.0
        %1669 = vmatprep.subr.mxu0 0.0
        %1670 = vmatpush1.xpose.msra.mxu0 0.0
        %1671 = vmatprep.subr.mxu0 0.0
        %1672 = vmatpush1.xpose.msra.mxu0 0.0
        %1673 = vmatprep.subr.mxu0 0.0
        %1674 = vmatpush1.xpose.msra.mxu0 0.0
        %1675 = vmatprep.subr.mxu0 0.0
        %1676 = vmatpush1.xpose.msra.mxu0 0.0
        %1677 = vmatprep.subr.mxu0 0.0
        %1678 = vmatpush1.xpose.msra.mxu0 0.0
        %1679 = vmatprep.subr.mxu0 0.0
        %1680 = vmatpush1.xpose.msra.mxu0 0.0
        %1681 = vmatprep.subr.mxu0 0.0
        %1682 = vmatpush1.xpose.msra.mxu0 0.0
        %1683 = vmatprep.subr.mxu0 0.0
        %1684 = vmatpush1.xpose.msra.mxu0 0.0
        %1685 = vmatprep.subr.mxu0 0.0
        %1686 = vmatpush1.xpose.msra.mxu0 0.0
        %1687 = vmatprep.subr.mxu0 0.0
        %1688 = vmatpush1.xpose.msra.mxu0 0.0
        %1689 = vmatprep.subr.mxu0 0.0
        %1690 = vmatpush1.xpose.msra.mxu0 0.0
        %1691 = vmatprep.subr.mxu0 0.0
        %1692 = vmatpush1.xpose.msra.mxu0 0.0
        %1693 = vmatprep.subr.mxu0 0.0
        %1694 = vmatpush1.xpose.msra.mxu0 0.0
        %1695 = vmatprep.subr.mxu0 0.0
        %1696 = vmatpush1.xpose.msra.mxu0 0.0
        %1697 = vmatprep.subr.mxu0 0.0
        %1698 = vmatpush1.xpose.msra.mxu0 0.0
        %1699 = vmatprep.subr.mxu0 0.0
        %1700 = vmatpush1.xpose.msra.mxu0 0.0
        %1701 = vmatprep.subr.mxu0 0.0
        %1702 = vmatpush1.xpose.msra.mxu0 0.0
        %1703 = vmatprep.subr.mxu0 0.0
        %1704 = vmatpush1.xpose.msra.mxu0 0.0
        %1705 = vmatprep.subr.mxu0 0.0
        %1706 = vmatpush1.xpose.msra.mxu0 0.0
        %1707 = vmatprep.subr.mxu0 0.0
        %1708 = vmatpush1.xpose.msra.mxu0 0.0
        %1709 = vmatprep.subr.mxu0 0.0
        %1710 = vmatpush1.xpose.msra.mxu0 0.0
        %1711 = vmatprep.mubr.f32.mxu0 0.0
        %1712 = vmatmul.mubr.f32.gmra.mrb[0].mxu0 %v1643
        %v1713 = vpop.f32.mrb[0].mxu0
        %v1714 = vadd.f32 0.0, %v1713
        %v1715 = vpop.f32.mrb[0].mxu0
        %1716 = vdwg.mxu0
        %1717 = vrot.lane.b32.xlu0 %v647, 96
        %v1718 = vpop.permute.xlu0 %1717
        %v1719 = vsel %vm557, %v748, 0
        %v1721 = vsel %vm557, %v1718, 0
        %1723 = vmatprep.subr.mxu0 0.0
        %1724 = vmatpush1.xpose.msra.mxu0 %v1721
        %1725 = vmatprep.subr.mxu0 0.0
        %1726 = vmatpush1.xpose.msra.mxu0 0.0
        %1727 = vmatprep.subr.mxu0 0.0
        %1728 = vmatpush1.xpose.msra.mxu0 0.0
        %1729 = vmatprep.subr.mxu0 0.0
        %1730 = vmatpush1.xpose.msra.mxu0 0.0
        %1731 = vmatprep.subr.mxu0 0.0
        %1732 = vmatpush1.xpose.msra.mxu0 0.0
        %1733 = vmatprep.subr.mxu0 0.0
        %1734 = vmatpush1.xpose.msra.mxu0 0.0
        %1735 = vmatprep.subr.mxu0 0.0
        %1736 = vmatpush1.xpose.msra.mxu0 0.0
        %1737 = vmatprep.subr.mxu0 0.0
        %1738 = vmatpush1.xpose.msra.mxu0 0.0
        %1739 = vmatprep.subr.mxu0 0.0
        %1740 = vmatpush1.xpose.msra.mxu0 0.0
        %1741 = vmatprep.subr.mxu0 0.0
        %1742 = vmatpush1.xpose.msra.mxu0 0.0
        %1743 = vmatprep.subr.mxu0 0.0
        %1744 = vmatpush1.xpose.msra.mxu0 0.0
        %1745 = vmatprep.subr.mxu0 0.0
        %1746 = vmatpush1.xpose.msra.mxu0 0.0
        %1747 = vmatprep.subr.mxu0 0.0
        %1748 = vmatpush1.xpose.msra.mxu0 0.0
        %1749 = vmatprep.subr.mxu0 0.0
        %1750 = vmatpush1.xpose.msra.mxu0 0.0
        %1751 = vmatprep.subr.mxu0 0.0
        %1752 = vmatpush1.xpose.msra.mxu0 0.0
        %1753 = vmatprep.subr.mxu0 0.0
        %1754 = vmatpush1.xpose.msra.mxu0 0.0
        %1755 = vmatprep.subr.mxu0 0.0
        %1756 = vmatpush1.xpose.msra.mxu0 0.0
        %1757 = vmatprep.subr.mxu0 0.0
        %1758 = vmatpush1.xpose.msra.mxu0 0.0
        %1759 = vmatprep.subr.mxu0 0.0
        %1760 = vmatpush1.xpose.msra.mxu0 0.0
        %1761 = vmatprep.subr.mxu0 0.0
        %1762 = vmatpush1.xpose.msra.mxu0 0.0
        %1763 = vmatprep.subr.mxu0 0.0
        %1764 = vmatpush1.xpose.msra.mxu0 0.0
        %1765 = vmatprep.subr.mxu0 0.0
        %1766 = vmatpush1.xpose.msra.mxu0 0.0
        %1767 = vmatprep.subr.mxu0 0.0
        %1768 = vmatpush1.xpose.msra.mxu0 0.0
        %1769 = vmatprep.subr.mxu0 0.0
        %1770 = vmatpush1.xpose.msra.mxu0 0.0
        %1771 = vmatprep.subr.mxu0 0.0
        %1772 = vmatpush1.xpose.msra.mxu0 0.0
        %1773 = vmatprep.subr.mxu0 0.0
        %1774 = vmatpush1.xpose.msra.mxu0 0.0
        %1775 = vmatprep.subr.mxu0 0.0
        %1776 = vmatpush1.xpose.msra.mxu0 0.0
        %1777 = vmatprep.subr.mxu0 0.0
        %1778 = vmatpush1.xpose.msra.mxu0 0.0
        %1779 = vmatprep.subr.mxu0 0.0
        %1780 = vmatpush1.xpose.msra.mxu0 0.0
        %1781 = vmatprep.subr.mxu0 0.0
        %1782 = vmatpush1.xpose.msra.mxu0 0.0
        %1783 = vmatprep.subr.mxu0 0.0
        %1784 = vmatpush1.xpose.msra.mxu0 0.0
        %1785 = vmatprep.subr.mxu0 0.0
        %1786 = vmatpush1.xpose.msra.mxu0 0.0
        %1787 = vmatprep.mubr.f32.mxu0 0.0
        %1788 = vmatmul.mubr.f32.gmra.mrb[0].mxu0 %v1719
        %v1789 = vpop.f32.mrb[0].mxu0
        %v1790 = vadd.f32 0.0, %v1789
        %v1791 = vpop.f32.mrb[0].mxu0
        %1792 = vdwg.mxu0
        %1793 = vrot.lane.b32.xlu0 %v652, 96
        %v1794 = vpop.permute.xlu0 %1793
        %v1795 = vsel %vm557, %v753, 0
        %v1797 = vsel %vm557, %v1794, 0
        %1799 = vmatprep.subr.mxu0 0.0
        %1800 = vmatpush1.xpose.msra.mxu0 %v1797
        %1801 = vmatprep.subr.mxu0 0.0
        %1802 = vmatpush1.xpose.msra.mxu0 0.0
        %1803 = vmatprep.subr.mxu0 0.0
        %1804 = vmatpush1.xpose.msra.mxu0 0.0
        %1805 = vmatprep.subr.mxu0 0.0
        %1806 = vmatpush1.xpose.msra.mxu0 0.0
        %1807 = vmatprep.subr.mxu0 0.0
        %1808 = vmatpush1.xpose.msra.mxu0 0.0
        %1809 = vmatprep.subr.mxu0 0.0
        %1810 = vmatpush1.xpose.msra.mxu0 0.0
        %1811 = vmatprep.subr.mxu0 0.0
        %1812 = vmatpush1.xpose.msra.mxu0 0.0
        %1813 = vmatprep.subr.mxu0 0.0
        %1814 = vmatpush1.xpose.msra.mxu0 0.0
        %1815 = vmatprep.subr.mxu0 0.0
        %1816 = vmatpush1.xpose.msra.mxu0 0.0
        %1817 = vmatprep.subr.mxu0 0.0
        %1818 = vmatpush1.xpose.msra.mxu0 0.0
        %1819 = vmatprep.subr.mxu0 0.0
        %1820 = vmatpush1.xpose.msra.mxu0 0.0
        %1821 = vmatprep.subr.mxu0 0.0
        %1822 = vmatpush1.xpose.msra.mxu0 0.0
        %1823 = vmatprep.subr.mxu0 0.0
        %1824 = vmatpush1.xpose.msra.mxu0 0.0
        %1825 = vmatprep.subr.mxu0 0.0
        %1826 = vmatpush1.xpose.msra.mxu0 0.0
        %1827 = vmatprep.subr.mxu0 0.0
        %1828 = vmatpush1.xpose.msra.mxu0 0.0
        %1829 = vmatprep.subr.mxu0 0.0
        %1830 = vmatpush1.xpose.msra.mxu0 0.0
        %1831 = vmatprep.subr.mxu0 0.0
        %1832 = vmatpush1.xpose.msra.mxu0 0.0
        %1833 = vmatprep.subr.mxu0 0.0
        %1834 = vmatpush1.xpose.msra.mxu0 0.0
        %1835 = vmatprep.subr.mxu0 0.0
        %1836 = vmatpush1.xpose.msra.mxu0 0.0
        %1837 = vmatprep.subr.mxu0 0.0
        %1838 = vmatpush1.xpose.msra.mxu0 0.0
        %1839 = vmatprep.subr.mxu0 0.0
        %1840 = vmatpush1.xpose.msra.mxu0 0.0
        %1841 = vmatprep.subr.mxu0 0.0
        %1842 = vmatpush1.xpose.msra.mxu0 0.0
        %1843 = vmatprep.subr.mxu0 0.0
        %1844 = vmatpush1.xpose.msra.mxu0 0.0
        %1845 = vmatprep.subr.mxu0 0.0
        %1846 = vmatpush1.xpose.msra.mxu0 0.0
        %1847 = vmatprep.subr.mxu0 0.0
        %1848 = vmatpush1.xpose.msra.mxu0 0.0
        %1849 = vmatprep.subr.mxu0 0.0
        %1850 = vmatpush1.xpose.msra.mxu0 0.0
        %1851 = vmatprep.subr.mxu0 0.0
        %1852 = vmatpush1.xpose.msra.mxu0 0.0
        %1853 = vmatprep.subr.mxu0 0.0
        %1854 = vmatpush1.xpose.msra.mxu0 0.0
        %1855 = vmatprep.subr.mxu0 0.0
        %1856 = vmatpush1.xpose.msra.mxu0 0.0
        %1857 = vmatprep.subr.mxu0 0.0
        %1858 = vmatpush1.xpose.msra.mxu0 0.0
        %1859 = vmatprep.subr.mxu0 0.0
        %1860 = vmatpush1.xpose.msra.mxu0 0.0
        %1861 = vmatprep.subr.mxu0 0.0
        %1862 = vmatpush1.xpose.msra.mxu0 0.0
        %1863 = vmatprep.mubr.f32.mxu0 0.0
        %1864 = vmatmul.mubr.f32.gmra.mrb[0].mxu0 %v1795
        %v1865 = vpop.f32.mrb[0].mxu0
        %v1866 = vadd.f32 0.0, %v1865
        %v1867 = vpop.f32.mrb[0].mxu0
        %1868 = vdwg.mxu0
        %v1869 = vmul.f32 %v1638, 0.17677669
        %v1870 = vmul.f32 %v1714, 0.17677669
        %v1871 = vmul.f32 %v1790, 0.17677669
        %v1872 = vmul.f32 %v1866, 0.17677669
        %v1877 = vlaneseq
        %v1878 = vshrl.u32 %v1877, 7
        %v1879 = vsub.s32 0, %v1878
        %v1880 = vrot.slane %v1553, %v1879
        %v1881 = vlaneseq
        %v1882 = vshrl.u32 %v1881, 7
        %v1883 = vsub.s32 0, %v1882
        %v1884 = vrot.slane %v1554, %v1883
        %v1885 = vlaneseq
        %v1886 = vshrl.u32 %v1885, 7
        %v1887 = vsub.s32 0, %v1886
        %v1888 = vrot.slane %v1555, %v1887
        %v1889 = vlaneseq
        %v1890 = vshrl.u32 %v1889, 7
        %v1891 = vsub.s32 0, %v1890
        %v1892 = vrot.slane %v1556, %v1891
        %v1897 = vadd.f32 %v1869, %v1880
        %v1898 = vadd.f32 %v1870, %v1884
        %v1899 = vadd.f32 %v1871, %v1888
        %v1900 = vadd.f32 %v1872, %v1892
        %v1901 = vsel %vm1112, %v1897, -inf
        %1902 = vmax.xlane.f32.xlu0 %v1901
        %v1903 = vpop.xlane.xlu0 %1902
        %v1904 = vsel %vm1112, %v1898, -inf
        %1905 = vmax.xlane.f32.xlu0 %v1904
        %v1906 = vpop.xlane.xlu0 %1905
        %v1907 = vsel %vm1112, %v1899, -inf
        %1908 = vmax.xlane.f32.xlu0 %v1907
        %v1909 = vpop.xlane.xlu0 %1908
        %v1910 = vsel %vm1112, %v1900, -inf
        %1911 = vmax.xlane.f32.xlu0 %v1910
        %v1912 = vpop.xlane.xlu0 %1911
        %v1913 = vsub.f32 %v1897, %v1903
        %v1914 = vsub.f32 %v1898, %v1906
        %v1915 = vsub.f32 %v1899, %v1909
        %v1916 = vsub.f32 %v1900, %v1912
        %v1917 = vmul.f32 %v1913, 1.442695
        %v1918 = vpow.pop %v1917
        %v1919 = vmul.f32 %v1914, 1.442695
        %v1920 = vpow.pop %v1919
        %v1921 = vmul.f32 %v1915, 1.442695
        %v1922 = vpow.pop %v1921
        %v1923 = vmul.f32 %v1916, 1.442695
        %v1924 = vpow.pop %v1923
        %v1925 = vsel %vm1112, %v1918, 0.0
        %1926 = vadd.xlane.f32.xlu0 %v1925
        %v1927 = vpop.xlane.xlu0 %1926
        %v1928 = vsel %vm1112, %v1920, 0.0
        %1929 = vadd.xlane.f32.xlu0 %v1928
        %v1930 = vpop.xlane.xlu0 %1929
        %v1931 = vsel %vm1112, %v1922, 0.0
        %1932 = vadd.xlane.f32.xlu0 %v1931
        %v1933 = vpop.xlane.xlu0 %1932
        %v1934 = vsel %vm1112, %v1924, 0.0
        %1935 = vadd.xlane.f32.xlu0 %v1934
        %v1936 = vpop.xlane.xlu0 %1935
        %1937 = vrot.lane.b32.xlu0 %v637, 64
        %v1938 = vpop.permute.xlu0 %1937
        %v1941 = vsel %vm1112, %v1918, 0
        %1943 = vmatprep.subr.mxu0 0.0
        %1944 = vmatpush1.msra.mxu0 %v1938
        %1945 = vmatprep.subr.mxu0 0.0
        %1946 = vmatpush1.msra.mxu0 0.0
        %1947 = vmatprep.subr.mxu0 0.0
        %1948 = vmatpush1.msra.mxu0 0.0
        %1949 = vmatprep.subr.mxu0 0.0
        %1950 = vmatpush1.msra.mxu0 0.0
        %1951 = vmatprep.subr.mxu0 0.0
        %1952 = vmatpush1.msra.mxu0 0.0
        %1953 = vmatprep.subr.mxu0 0.0
        %1954 = vmatpush1.msra.mxu0 0.0
        %1955 = vmatprep.subr.mxu0 0.0
        %1956 = vmatpush1.msra.mxu0 0.0
        %1957 = vmatprep.subr.mxu0 0.0
        %1958 = vmatpush1.msra.mxu0 0.0
        %1959 = vmatprep.subr.mxu0 0.0
        %1960 = vmatpush1.msra.mxu0 0.0
        %1961 = vmatprep.subr.mxu0 0.0
        %1962 = vmatpush1.msra.mxu0 0.0
        %1963 = vmatprep.subr.mxu0 0.0
        %1964 = vmatpush1.msra.mxu0 0.0
        %1965 = vmatprep.subr.mxu0 0.0
        %1966 = vmatpush1.msra.mxu0 0.0
        %1967 = vmatprep.subr.mxu0 0.0
        %1968 = vmatpush1.msra.mxu0 0.0
        %1969 = vmatprep.subr.mxu0 0.0
        %1970 = vmatpush1.msra.mxu0 0.0
        %1971 = vmatprep.subr.mxu0 0.0
        %1972 = vmatpush1.msra.mxu0 0.0
        %1973 = vmatprep.subr.mxu0 0.0
        %1974 = vmatpush1.msra.mxu0 0.0
        %1975 = vmatprep.subr.mxu0 0.0
        %1976 = vmatpush1.msra.mxu0 0.0
        %1977 = vmatprep.subr.mxu0 0.0
        %1978 = vmatpush1.msra.mxu0 0.0
        %1979 = vmatprep.subr.mxu0 0.0
        %1980 = vmatpush1.msra.mxu0 0.0
        %1981 = vmatprep.subr.mxu0 0.0
        %1982 = vmatpush1.msra.mxu0 0.0
        %1983 = vmatprep.subr.mxu0 0.0
        %1984 = vmatpush1.msra.mxu0 0.0
        %1985 = vmatprep.subr.mxu0 0.0
        %1986 = vmatpush1.msra.mxu0 0.0
        %1987 = vmatprep.subr.mxu0 0.0
        %1988 = vmatpush1.msra.mxu0 0.0
        %1989 = vmatprep.subr.mxu0 0.0
        %1990 = vmatpush1.msra.mxu0 0.0
        %1991 = vmatprep.subr.mxu0 0.0
        %1992 = vmatpush1.msra.mxu0 0.0
        %1993 = vmatprep.subr.mxu0 0.0
        %1994 = vmatpush1.msra.mxu0 0.0
        %1995 = vmatprep.subr.mxu0 0.0
        %1996 = vmatpush1.msra.mxu0 0.0
        %1997 = vmatprep.subr.mxu0 0.0
        %1998 = vmatpush1.msra.mxu0 0.0
        %1999 = vmatprep.subr.mxu0 0.0
        %2000 = vmatpush1.msra.mxu0 0.0
        %2001 = vmatprep.subr.mxu0 0.0
        %2002 = vmatpush1.msra.mxu0 0.0
        %2003 = vmatprep.subr.mxu0 0.0
        %2004 = vmatpush1.msra.mxu0 0.0
        %2005 = vmatprep.subr.mxu0 0.0
        %2006 = vmatpush1.msra.mxu0 0.0
        %2007 = vmatprep.mubr.f32.mxu0 0.0
        %2008 = vmatmul.mubr.f32.gmra.mrb[0].mxu0 %v1941
        %v2009 = vpop.f32.mrb[0].mxu0
        %v2010 = vadd.f32 0.0, %v2009
        %v2011 = vpop.f32.mrb[0].mxu0
        %2012 = vdwg.mxu0
        %2013 = vrot.lane.b32.xlu0 %v642, 64
        %v2014 = vpop.permute.xlu0 %2013
        %v2017 = vsel %vm1112, %v1920, 0
        %2019 = vmatprep.subr.mxu0 0.0
        %2020 = vmatpush1.msra.mxu0 %v2014
        %2021 = vmatprep.subr.mxu0 0.0
        %2022 = vmatpush1.msra.mxu0 0.0
        %2023 = vmatprep.subr.mxu0 0.0
        %2024 = vmatpush1.msra.mxu0 0.0
        %2025 = vmatprep.subr.mxu0 0.0
        %2026 = vmatpush1.msra.mxu0 0.0
        %2027 = vmatprep.subr.mxu0 0.0
        %2028 = vmatpush1.msra.mxu0 0.0
        %2029 = vmatprep.subr.mxu0 0.0
        %2030 = vmatpush1.msra.mxu0 0.0
        %2031 = vmatprep.subr.mxu0 0.0
        %2032 = vmatpush1.msra.mxu0 0.0
        %2033 = vmatprep.subr.mxu0 0.0
        %2034 = vmatpush1.msra.mxu0 0.0
        %2035 = vmatprep.subr.mxu0 0.0
        %2036 = vmatpush1.msra.mxu0 0.0
        %2037 = vmatprep.subr.mxu0 0.0
        %2038 = vmatpush1.msra.mxu0 0.0
        %2039 = vmatprep.subr.mxu0 0.0
        %2040 = vmatpush1.msra.mxu0 0.0
        %2041 = vmatprep.subr.mxu0 0.0
        %2042 = vmatpush1.msra.mxu0 0.0
        %2043 = vmatprep.subr.mxu0 0.0
        %2044 = vmatpush1.msra.mxu0 0.0
        %2045 = vmatprep.subr.mxu0 0.0
        %2046 = vmatpush1.msra.mxu0 0.0
        %2047 = vmatprep.subr.mxu0 0.0
        %2048 = vmatpush1.msra.mxu0 0.0
        %2049 = vmatprep.subr.mxu0 0.0
        %2050 = vmatpush1.msra.mxu0 0.0
        %2051 = vmatprep.subr.mxu0 0.0
        %2052 = vmatpush1.msra.mxu0 0.0
        %2053 = vmatprep.subr.mxu0 0.0
        %2054 = vmatpush1.msra.mxu0 0.0
        %2055 = vmatprep.subr.mxu0 0.0
        %2056 = vmatpush1.msra.mxu0 0.0
        %2057 = vmatprep.subr.mxu0 0.0
        %2058 = vmatpush1.msra.mxu0 0.0
        %2059 = vmatprep.subr.mxu0 0.0
        %2060 = vmatpush1.msra.mxu0 0.0
        %2061 = vmatprep.subr.mxu0 0.0
        %2062 = vmatpush1.msra.mxu0 0.0
        %2063 = vmatprep.subr.mxu0 0.0
        %2064 = vmatpush1.msra.mxu0 0.0
        %2065 = vmatprep.subr.mxu0 0.0
        %2066 = vmatpush1.msra.mxu0 0.0
        %2067 = vmatprep.subr.mxu0 0.0
        %2068 = vmatpush1.msra.mxu0 0.0
        %2069 = vmatprep.subr.mxu0 0.0
        %2070 = vmatpush1.msra.mxu0 0.0
        %2071 = vmatprep.subr.mxu0 0.0
        %2072 = vmatpush1.msra.mxu0 0.0
        %2073 = vmatprep.subr.mxu0 0.0
        %2074 = vmatpush1.msra.mxu0 0.0
        %2075 = vmatprep.subr.mxu0 0.0
        %2076 = vmatpush1.msra.mxu0 0.0
        %2077 = vmatprep.subr.mxu0 0.0
        %2078 = vmatpush1.msra.mxu0 0.0
        %2079 = vmatprep.subr.mxu0 0.0
        %2080 = vmatpush1.msra.mxu0 0.0
        %2081 = vmatprep.subr.mxu0 0.0
        %2082 = vmatpush1.msra.mxu0 0.0
        %2083 = vmatprep.mubr.f32.mxu0 0.0
        %2084 = vmatmul.mubr.f32.gmra.mrb[0].mxu0 %v2017
        %v2085 = vpop.f32.mrb[0].mxu0
        %v2086 = vadd.f32 0.0, %v2085
        %v2087 = vpop.f32.mrb[0].mxu0
        %2088 = vdwg.mxu0
        %2089 = vrot.lane.b32.xlu0 %v647, 64
        %v2090 = vpop.permute.xlu0 %2089
        %v2093 = vsel %vm1112, %v1922, 0
        %2095 = vmatprep.subr.mxu0 0.0
        %2096 = vmatpush1.msra.mxu0 %v2090
        %2097 = vmatprep.subr.mxu0 0.0
        %2098 = vmatpush1.msra.mxu0 0.0
        %2099 = vmatprep.subr.mxu0 0.0
        %2100 = vmatpush1.msra.mxu0 0.0
        %2101 = vmatprep.subr.mxu0 0.0
        %2102 = vmatpush1.msra.mxu0 0.0
        %2103 = vmatprep.subr.mxu0 0.0
        %2104 = vmatpush1.msra.mxu0 0.0
        %2105 = vmatprep.subr.mxu0 0.0
        %2106 = vmatpush1.msra.mxu0 0.0
        %2107 = vmatprep.subr.mxu0 0.0
        %2108 = vmatpush1.msra.mxu0 0.0
        %2109 = vmatprep.subr.mxu0 0.0
        %2110 = vmatpush1.msra.mxu0 0.0
        %2111 = vmatprep.subr.mxu0 0.0
        %2112 = vmatpush1.msra.mxu0 0.0
        %2113 = vmatprep.subr.mxu0 0.0
        %2114 = vmatpush1.msra.mxu0 0.0
        %2115 = vmatprep.subr.mxu0 0.0
        %2116 = vmatpush1.msra.mxu0 0.0
        %2117 = vmatprep.subr.mxu0 0.0
        %2118 = vmatpush1.msra.mxu0 0.0
        %2119 = vmatprep.subr.mxu0 0.0
        %2120 = vmatpush1.msra.mxu0 0.0
        %2121 = vmatprep.subr.mxu0 0.0
        %2122 = vmatpush1.msra.mxu0 0.0
        %2123 = vmatprep.subr.mxu0 0.0
        %2124 = vmatpush1.msra.mxu0 0.0
        %2125 = vmatprep.subr.mxu0 0.0
        %2126 = vmatpush1.msra.mxu0 0.0
        %2127 = vmatprep.subr.mxu0 0.0
        %2128 = vmatpush1.msra.mxu0 0.0
        %2129 = vmatprep.subr.mxu0 0.0
        %2130 = vmatpush1.msra.mxu0 0.0
        %2131 = vmatprep.subr.mxu0 0.0
        %2132 = vmatpush1.msra.mxu0 0.0
        %2133 = vmatprep.subr.mxu0 0.0
        %2134 = vmatpush1.msra.mxu0 0.0
        %2135 = vmatprep.subr.mxu0 0.0
        %2136 = vmatpush1.msra.mxu0 0.0
        %2137 = vmatprep.subr.mxu0 0.0
        %2138 = vmatpush1.msra.mxu0 0.0
        %2139 = vmatprep.subr.mxu0 0.0
        %2140 = vmatpush1.msra.mxu0 0.0
        %2141 = vmatprep.subr.mxu0 0.0
        %2142 = vmatpush1.msra.mxu0 0.0
        %2143 = vmatprep.subr.mxu0 0.0
        %2144 = vmatpush1.msra.mxu0 0.0
        %2145 = vmatprep.subr.mxu0 0.0
        %2146 = vmatpush1.msra.mxu0 0.0
        %2147 = vmatprep.subr.mxu0 0.0
        %2148 = vmatpush1.msra.mxu0 0.0
        %2149 = vmatprep.subr.mxu0 0.0
        %2150 = vmatpush1.msra.mxu0 0.0
        %2151 = vmatprep.subr.mxu0 0.0
        %2152 = vmatpush1.msra.mxu0 0.0
        %2153 = vmatprep.subr.mxu0 0.0
        %2154 = vmatpush1.msra.mxu0 0.0
        %2155 = vmatprep.subr.mxu0 0.0
        %2156 = vmatpush1.msra.mxu0 0.0
        %2157 = vmatprep.subr.mxu0 0.0
        %2158 = vmatpush1.msra.mxu0 0.0
        %2159 = vmatprep.mubr.f32.mxu0 0.0
        %2160 = vmatmul.mubr.f32.gmra.mrb[0].mxu0 %v2093
        %v2161 = vpop.f32.mrb[0].mxu0
        %v2162 = vadd.f32 0.0, %v2161
        %v2163 = vpop.f32.mrb[0].mxu0
        %2164 = vdwg.mxu0
        %2165 = vrot.lane.b32.xlu0 %v652, 64
        %v2166 = vpop.permute.xlu0 %2165
        %v2169 = vsel %vm1112, %v1924, 0
        %2171 = vmatprep.subr.mxu0 0.0
        %2172 = vmatpush1.msra.mxu0 %v2166
        %2173 = vmatprep.subr.mxu0 0.0
        %2174 = vmatpush1.msra.mxu0 0.0
        %2175 = vmatprep.subr.mxu0 0.0
        %2176 = vmatpush1.msra.mxu0 0.0
        %2177 = vmatprep.subr.mxu0 0.0
        %2178 = vmatpush1.msra.mxu0 0.0
        %2179 = vmatprep.subr.mxu0 0.0
        %2180 = vmatpush1.msra.mxu0 0.0
        %2181 = vmatprep.subr.mxu0 0.0
        %2182 = vmatpush1.msra.mxu0 0.0
        %2183 = vmatprep.subr.mxu0 0.0
        %2184 = vmatpush1.msra.mxu0 0.0
        %2185 = vmatprep.subr.mxu0 0.0
        %2186 = vmatpush1.msra.mxu0 0.0
        %2187 = vmatprep.subr.mxu0 0.0
        %2188 = vmatpush1.msra.mxu0 0.0
        %2189 = vmatprep.subr.mxu0 0.0
        %2190 = vmatpush1.msra.mxu0 0.0
        %2191 = vmatprep.subr.mxu0 0.0
        %2192 = vmatpush1.msra.mxu0 0.0
        %2193 = vmatprep.subr.mxu0 0.0
        %2194 = vmatpush1.msra.mxu0 0.0
        %2195 = vmatprep.subr.mxu0 0.0
        %2196 = vmatpush1.msra.mxu0 0.0
        %2197 = vmatprep.subr.mxu0 0.0
        %2198 = vmatpush1.msra.mxu0 0.0
        %2199 = vmatprep.subr.mxu0 0.0
        %2200 = vmatpush1.msra.mxu0 0.0
        %2201 = vmatprep.subr.mxu0 0.0
        %2202 = vmatpush1.msra.mxu0 0.0
        %2203 = vmatprep.subr.mxu0 0.0
        %2204 = vmatpush1.msra.mxu0 0.0
        %2205 = vmatprep.subr.mxu0 0.0
        %2206 = vmatpush1.msra.mxu0 0.0
        %2207 = vmatprep.subr.mxu0 0.0
        %2208 = vmatpush1.msra.mxu0 0.0
        %2209 = vmatprep.subr.mxu0 0.0
        %2210 = vmatpush1.msra.mxu0 0.0
        %2211 = vmatprep.subr.mxu0 0.0
        %2212 = vmatpush1.msra.mxu0 0.0
        %2213 = vmatprep.subr.mxu0 0.0
        %2214 = vmatpush1.msra.mxu0 0.0
        %2215 = vmatprep.subr.mxu0 0.0
        %2216 = vmatpush1.msra.mxu0 0.0
        %2217 = vmatprep.subr.mxu0 0.0
        %2218 = vmatpush1.msra.mxu0 0.0
        %2219 = vmatprep.subr.mxu0 0.0
        %2220 = vmatpush1.msra.mxu0 0.0
        %2221 = vmatprep.subr.mxu0 0.0
        %2222 = vmatpush1.msra.mxu0 0.0
        %2223 = vmatprep.subr.mxu0 0.0
        %2224 = vmatpush1.msra.mxu0 0.0
        %2225 = vmatprep.subr.mxu0 0.0
        %2226 = vmatpush1.msra.mxu0 0.0
        %2227 = vmatprep.subr.mxu0 0.0
        %2228 = vmatpush1.msra.mxu0 0.0
        %2229 = vmatprep.subr.mxu0 0.0
        %2230 = vmatpush1.msra.mxu0 0.0
        %2231 = vmatprep.subr.mxu0 0.0
        %2232 = vmatpush1.msra.mxu0 0.0
        %2233 = vmatprep.subr.mxu0 0.0
        %2234 = vmatpush1.msra.mxu0 0.0
        %2235 = vmatprep.mubr.f32.mxu0 0.0
        %2236 = vmatmul.mubr.f32.gmra.mrb[0].mxu0 %v2169
        %v2237 = vpop.f32.mrb[0].mxu0
        %v2238 = vadd.f32 0.0, %v2237
        %v2239 = vpop.f32.mrb[0].mxu0
        %2240 = vdwg.mxu0
        %v2241 = vrcp.pop %v1927
        %v2242 = vrcp.pop %v1930
        %v2243 = vrcp.pop %v1933
        %v2244 = vrcp.pop %v1936
        %v2245 = vmul.f32 %v1557, %v2241
        %v2246 = vmul.f32 %v1558, %v2242
        %v2247 = vmul.f32 %v1559, %v2243
        %v2248 = vmul.f32 %v1560, %v2244
        %2250 = vset.pattern.permute.xlu0 0
        %2251 = vperm.xlu0 %2250, %v2245
        %v2252 = vpop.permute.xlu0 %2251
        %2255 = vset.pattern.permute.xlu0 0
        %2256 = vperm.xlu0 %2255, %v2246
        %v2257 = vpop.permute.xlu0 %2256
        %2260 = vset.pattern.permute.xlu0 0
        %2261 = vperm.xlu0 %2260, %v2247
        %v2262 = vpop.permute.xlu0 %2261
        %2265 = vset.pattern.permute.xlu0 0
        %2266 = vperm.xlu0 %2265, %v2248
        %v2267 = vpop.permute.xlu0 %2266
        %v2269 = vmul.f32 %v2010, %v2252
        %v2270 = vmul.f32 %v2086, %v2257
        %v2271 = vmul.f32 %v2162, %v2262
        %v2272 = vmul.f32 %v2238, %v2267
        %v2273 = vsel %vm557, %v2269, 0.0
        %v2274 = vrot.slane %v2273, 4
        %v2275 = vadd.f32 %v2273, %v2274
        %v2276 = vrot.slane %v2275, 2
        %v2277 = vadd.f32 %v2275, %v2276
        %v2278 = vrot.slane %v2277, 1
        %v2279 = vadd.f32 %v2277, %v2278
        %v2280 = vsel %vm557, %v2270, 0.0
        %v2281 = vrot.slane %v2280, 4
        %v2282 = vadd.f32 %v2280, %v2281
        %v2283 = vrot.slane %v2282, 2
        %v2284 = vadd.f32 %v2282, %v2283
        %v2285 = vrot.slane %v2284, 1
        %v2286 = vadd.f32 %v2284, %v2285
        %v2287 = vsel %vm557, %v2271, 0.0
        %v2288 = vrot.slane %v2287, 4
        %v2289 = vadd.f32 %v2287, %v2288
        %v2290 = vrot.slane %v2289, 2
        %v2291 = vadd.f32 %v2289, %v2290
        %v2292 = vrot.slane %v2291, 1
        %v2293 = vadd.f32 %v2291, %v2292
        %v2294 = vsel %vm557, %v2272, 0.0
        %v2295 = vrot.slane %v2294, 4
        %v2296 = vadd.f32 %v2294, %v2295
        %v2297 = vrot.slane %v2296, 2
        %v2298 = vadd.f32 %v2296, %v2297
        %v2299 = vrot.slane %v2298, 1
        %v2300 = vadd.f32 %v2298, %v2299
        %2302 = vset.pattern.permute.xlu0 0
        %2303 = vperm.xlu0 %2302, %v1561
        %v2304 = vpop.permute.xlu0 %2303
        %v2306 = vlaneseq
        %v2307 = vshrl.u32 %v2306, 7
        %v2308 = vsub.s32 0, %v2307
        %v2309 = vrot.slane %v2304, %v2308
        %2311 = vset.pattern.permute.xlu0 0
        %2312 = vperm.xlu0 %2311, %v1562
        %v2313 = vpop.permute.xlu0 %2312
        %v2315 = vlaneseq
        %v2316 = vshrl.u32 %v2315, 7
        %v2317 = vsub.s32 0, %v2316
        %v2318 = vrot.slane %v2313, %v2317
        %2320 = vset.pattern.permute.xlu0 0
        %2321 = vperm.xlu0 %2320, %v1563
        %v2322 = vpop.permute.xlu0 %2321
        %v2324 = vlaneseq
        %v2325 = vshrl.u32 %v2324, 7
        %v2326 = vsub.s32 0, %v2325
        %v2327 = vrot.slane %v2322, %v2326
        %2329 = vset.pattern.permute.xlu0 0
        %2330 = vperm.xlu0 %2329, %v1564
        %v2331 = vpop.permute.xlu0 %2330
        %v2333 = vlaneseq
        %v2334 = vshrl.u32 %v2333, 7
        %v2335 = vsub.s32 0, %v2334
        %v2336 = vrot.slane %v2331, %v2335
        %v2337 = vmul.f32 %v2279, %v2309
        %v2338 = vmul.f32 %v2286, %v2318
        %v2339 = vmul.f32 %v2293, %v2327
        %v2340 = vmul.f32 %v2300, %v2336
        %v2345 = vrot.slane %v1550, 7
        %vm2346 = vcmask 1041409
        %v2347 = vsel %vm2346, %v2345, %v1549
        %v2348 = vrot.slane %v1551, 6
        %vm2349 = vcmask 1042434
        %v2350 = vsel %vm2349, %v2348, %v2347
        %v2351 = vrot.slane %v1552, 5
        %vm2352 = vcmask 1043459
        %v2353 = vsel %vm2352, %v2351, %v2350
        %v2359 = vrot.slane %v2337, 4
        %v2360 = vrot.slane %v2338, 3
        %vm2361 = vcmask 1045509
        %v2362 = vsel %vm2361, %v2360, %v2359
        %v2363 = vrot.slane %v2339, 2
        %vm2364 = vcmask 1046534
        %v2365 = vsel %vm2364, %v2363, %v2362
        %v2366 = vrot.slane %v2340, 1
        %vm2367 = vcmask 1047559
        %v2368 = vsel %vm2367, %v2366, %v2365
        %vm2370 = vcmask 1043456
        %v2371 = vsel %vm2370, %v2353, %v2368
        %v2373 = vsel %vm557, %v2371, 0
        %2375 = vmatprep.subr.mxu0 0.0
        %2376 = vmatpush1.msra.mxu0 %v549
        %2377 = vmatprep.subr.mxu0 0.0
        %2378 = vmatpush1.msra.mxu0 %v550
        %2379 = vmatprep.subr.mxu0 0.0
        %2380 = vmatpush1.msra.mxu0 %v551
        %2381 = vmatprep.subr.mxu0 0.0
        %2382 = vmatpush1.msra.mxu0 %v552
        %2383 = vmatprep.subr.mxu0 0.0
        %2384 = vmatpush1.msra.mxu0 0.0
        %2385 = vmatprep.subr.mxu0 0.0
        %2386 = vmatpush1.msra.mxu0 0.0
        %2387 = vmatprep.subr.mxu0 0.0
        %2388 = vmatpush1.msra.mxu0 0.0
        %2389 = vmatprep.subr.mxu0 0.0
        %2390 = vmatpush1.msra.mxu0 0.0
        %2391 = vmatprep.subr.mxu0 0.0
        %2392 = vmatpush1.msra.mxu0 0.0
        %2393 = vmatprep.subr.mxu0 0.0
        %2394 = vmatpush1.msra.mxu0 0.0
        %2395 = vmatprep.subr.mxu0 0.0
        %2396 = vmatpush1.msra.mxu0 0.0
        %2397 = vmatprep.subr.mxu0 0.0
        %2398 = vmatpush1.msra.mxu0 0.0
        %2399 = vmatprep.subr.mxu0 0.0
        %2400 = vmatpush1.msra.mxu0 0.0
        %2401 = vmatprep.subr.mxu0 0.0
        %2402 = vmatpush1.msra.mxu0 0.0
        %2403 = vmatprep.subr.mxu0 0.0
        %2404 = vmatpush1.msra.mxu0 0.0
        %2405 = vmatprep.subr.mxu0 0.0
        %2406 = vmatpush1.msra.mxu0 0.0
        %2407 = vmatprep.subr.mxu0 0.0
        %2408 = vmatpush1.msra.mxu0 0.0
        %2409 = vmatprep.subr.mxu0 0.0
        %2410 = vmatpush1.msra.mxu0 0.0
        %2411 = vmatprep.subr.mxu0 0.0
        %2412 = vmatpush1.msra.mxu0 0.0
        %2413 = vmatprep.subr.mxu0 0.0
        %2414 = vmatpush1.msra.mxu0 0.0
        %2415 = vmatprep.subr.mxu0 0.0
        %2416 = vmatpush1.msra.mxu0 0.0
        %2417 = vmatprep.subr.mxu0 0.0
        %2418 = vmatpush1.msra.mxu0 0.0
        %2419 = vmatprep.subr.mxu0 0.0
        %2420 = vmatpush1.msra.mxu0 0.0
        %2421 = vmatprep.subr.mxu0 0.0
        %2422 = vmatpush1.msra.mxu0 0.0
        %2423 = vmatprep.subr.mxu0 0.0
        %2424 = vmatpush1.msra.mxu0 0.0
        %2425 = vmatprep.subr.mxu0 0.0
        %2426 = vmatpush1.msra.mxu0 0.0
        %2427 = vmatprep.subr.mxu0 0.0
        %2428 = vmatpush1.msra.mxu0 0.0
        %2429 = vmatprep.subr.mxu0 0.0
        %2430 = vmatpush1.msra.mxu0 0.0
        %2431 = vmatprep.subr.mxu0 0.0
        %2432 = vmatpush1.msra.mxu0 0.0
        %2433 = vmatprep.subr.mxu0 0.0
        %2434 = vmatpush1.msra.mxu0 0.0
        %2435 = vmatprep.subr.mxu0 0.0
        %2436 = vmatpush1.msra.mxu0 0.0
        %2437 = vmatprep.subr.mxu0 0.0
        %2438 = vmatpush1.msra.mxu0 0.0
        %2439 = vmatprep.mubr.f32.mxu0 0.0
        %2440 = vmatmul.mubr.f32.gmra.mrb[0].mxu0 %v2373
        %v2441 = vpop.f32.mrb[0].mxu0
        %v2442 = vadd.f32 0.0, %v2441
        %v2443 = vpop.f32.mrb[0].mxu0
        %2444 = vdwg.mxu0
        %v2446 = vrot.slane %v2442, 4
        %v2448 = vmul.f32 %v2442, %v2446
        %vm2449 = vcmask 257024
        %v2450 = vsel %vm2449, %v2448, 0.0
        %2451 = vadd.xlane.f32.xlu0 %v2450
        %v2452 = vpop.xlane.xlu0 %2451
        %v2453 = vmul.f32 %v2442, %v2442
        %v2454 = vsel %vm2449, %v2453, 0.0
        %2455 = vadd.xlane.f32.xlu0 %v2454
        %v2456 = vpop.xlane.xlu0 %2455
        %v2457 = vrsqrt.pop %v2456
        %v2458 = vmul.f32 %v2456, %v2457
        %vm2459 = vcmp.eq.f32.partialorder %v2456, inf
        %v2460 = vsel %vm2459, %v2456, %v2458
        %vm2461 = vcmp.eq.f32.partialorder %v2456, 0.0
        %v2462 = vand.u32 %v2456, 2147483648
        %v2463 = vsel %vm2461, %v2462, %v2460
        %vm2464 = vcmask 261124
        %v2465 = vsel %vm2464, %v2453, 0.0
        %2466 = vadd.xlane.f32.xlu0 %v2465
        %v2467 = vpop.xlane.xlu0 %2466
        %v2468 = vrsqrt.pop %v2467
        %v2469 = vmul.f32 %v2467, %v2468
        %vm2470 = vcmp.eq.f32.partialorder %v2467, inf
        %v2471 = vsel %vm2470, %v2467, %v2469
        %vm2472 = vcmp.eq.f32.partialorder %v2467, 0.0
        %v2473 = vand.u32 %v2467, 2147483648
        %v2474 = vsel %vm2472, %v2473, %v2471
        %v2475 = vmax.f32 %v2463, 1e-08
        %v2476 = vmax.f32 %v2474, 1e-08
        %v2478 = vrot.slane %v2476, 4
        %v2480 = vmul.f32 %v2475, %v2478
        %v2481 = vrcp.pop %v2480
        %v2482 = vmul.f32 %v2452, %v2481
        %2484 = vset.pattern.permute.xlu0 0
        %2485 = vperm.xlu0 %2484, %v2482
        %v2486 = vpop.permute.xlu0 %2485
        %v2487 = vlaneseq
        %v2488 = vand.u32 %v2487, 127
        %v2489 = vlaneseq
        %v2490 = vshrl.u32 %v2489, 7
        %v2491 = vsub.s32 %v2488, %v2490
        %v2492 = vrot.slane %v2486, %v2491
        %vm2494 = vcmask 24576
        %2495 = vst.msk [vmem:[%s508] sm:$0x1] %vm2494, %v2492
        %s2496 = sand.u32 %s288, 1
        %s2497 = scalar_lea.sflag [#allocation4], %s2496
        %s2498 = sand.u32 %s288, 1
        %s2499 = scalar_lea.vmem [#allocation7], %s2498
        // Predicated region
        $region69: #{tpu_custom_call.1} parent=59 // pred_check
          %p2500 = pneg %p298
        $region70: #{tpu_custom_call.1} parent=59 // pred_check_branch
          %2502 = sbr.rel (%p2500) target = $region72
        $region71: #{tpu_custom_call.1} parent=59 // pred_region
          %s2504 = ssub.s32 16, 16
          %2505 = vsyncadd %s2497, %s2504
          %s2506 = smul.addr %s30, 16
          %s2507 = scalar_lea.hbm %s10, %s2506
          %s2509 = sshll.u32 %s2499, 4
          %s2510 = int_to_ptr.vmem [resolvable:$true] %s2509
          %2512 = dma.vmem_to_hbm [thread:$0]  %s2510, 16, %s2507, %s2497
        $region72: #{tpu_custom_call.1} parent=59 // pred_fallthru
          _
      $region60: #{tpu_custom_call.1} parent=5 // pred_fallthru
        _
      %p2513 = scmp.le.s32.totalorder 2, %s25
      // Predicated region
      $region73: #{tpu_custom_call.1} parent=5 // pred_check
        %p2514 = pneg %p2513
      $region74: #{tpu_custom_call.1} parent=5 // pred_check_branch
        %2516 = sbr.rel (%p2514) target = $region76
      $region75: #{tpu_custom_call.1} parent=5 // pred_region
        %s2517 = ssub.s32 %s25, 2
        // Predicated region
        $region77: #{tpu_custom_call.1} parent=75 // pred_check
          %p2518 = pneg %p304
        $region78: #{tpu_custom_call.1} parent=75 // pred_check_branch
          %2520 = sbr.rel (%p2518) target = $region80
        $region79: #{tpu_custom_call.1} parent=75 // pred_region
          %s2521 = sand.u32 %s289, 1
          %s2522 = scalar_lea.sflag [#allocation4], %s2521
          %s2523 = sand.u32 %s289, 1
          %s2524 = scalar_lea.vmem [#allocation7], %s2523
          %2525 = dma.done %s2522, 16
        $region80: #{tpu_custom_call.1} parent=75 // pred_fallthru
          _
      $region76: #{tpu_custom_call.1} parent=5 // pred_fallthru
        _
    $region6: #{tpu_custom_call.1} parent=1 // loop_footer
      %s29 = sadd.s32 1, %s25
    $region7: #{tpu_custom_call.1} parent=1 // loop_footer_branch
      %24 = sbr.rel target = $region3
    $region8: #{tpu_custom_call.1} parent=1 // loop_exit
      _
    %2526 = vsyncpa [#allocation3], 1
    %s2527 = scalar_lea.sflag [#allocation3], 1
    %2528 = vsyncpa %s2527, 1
    %2529 = vsyncpa [#allocation6], 1
    %s2530 = scalar_lea.sflag [#allocation6], 1
    %2531 = vsyncpa %s2530, 1
    %2532 = vsyncpa [#allocation4], 1
    %s2533 = scalar_lea.sflag [#allocation4], 1
    %2534 = vsyncpa %s2533, 1

</llo_original>
